<compile_context>
chip_gen: v7x
topology: tpu7x:2x2x1
jax: 0.10.0
libtpu: 0.0.40
codegen_flags: <defaults>
</compile_context>

<pallas_src>
import functools

import jax
import jax.numpy as jnp
from jax import lax
from jax.experimental import pallas as pl
from jax.experimental.pallas import tpu as pltpu


LN_EPS = 1e-5


# -----------------------------------------------------------------------------
# Fused forward kernel: one grid step = one batch element, both streams.
# -----------------------------------------------------------------------------
def _thdroformer_kernel(
    ref_pts_ref, src_pts_ref, ref_feat_ref, src_feat_ref,
    emb_w_ref, emb_b_ref, in_w_ref, in_b_ref, out_w_ref, out_b_ref,
    wq_ref, bq_ref, wk_ref, bk_ref, wv_ref, bv_ref,
    wo_ref, bo_ref, g1_ref, be1_ref,
    wex_ref, bex_ref, wsq_ref, bsq_ref, g2_ref, be2_ref,
    ref_out_ref, src_out_ref,
    *, num_heads, num_layers, compute_dtype, q_tile):

    H = num_heads
    D = in_w_ref.shape[1]
    dh = D // H
    cdt = compute_dtype
    f32 = jnp.float32
    bf16_exp = jnp.dtype(cdt) == jnp.dtype(jnp.bfloat16)

    def run_stream(pts_ref, feat_ref, out_ref):
        N = pts_ref.shape[0]

        # --- learned rotary angles: Linear(3 -> D) as 3 broadcast FMAs, f32 ---
        pts = pts_ref[...].astype(f32)                               # (N, 3)
        e = (pts[:, 0:1] * emb_w_ref[0:1, :]
             + pts[:, 1:2] * emb_w_ref[1:2, :]
             + pts[:, 2:3] * emb_w_ref[2:3, :]
             + emb_b_ref[...])                                       # (N, D) f32
        cos_e = jnp.cos(e)
        sin_e = jnp.sin(e)

        def to_heads(t):                       # (N, D) -> (H, N, dh)
            return jnp.stack([t[:, h * dh:(h + 1) * dh] for h in range(H)],
                             axis=0)

        def from_heads(t):                     # (H, N, dh) -> (N, D)
            return jnp.concatenate([t[h] for h in range(H)], axis=-1)

        # cos/sin per head, hoisted out of the layer loop (f32).
        cos_h = to_heads(cos_e)                                      # (H, N, dh)
        sin_h = to_heads(sin_e)

        if dh % 128 == 0:
            # Lane-aligned head dim: rotate-half via XLU roll (free slot),
            # +/-1 sign pre-folded into sin.
            lane = lax.broadcasted_iota(jnp.int32, (1, 1, dh), 2)
            sin_rot = sin_h * jnp.where(lane < dh // 2, -1.0, 1.0)

            def apply_rope(t):                 # t: (H, N, dh) f32
                return t * cos_h + pltpu.roll(t, dh // 2, axis=2) * sin_rot
        else:
            # Fused half-split form: no negated-copy temporaries.
            h2 = dh // 2
            c1, c2 = cos_h[..., :h2], cos_h[..., h2:]
            s1, s2 = sin_h[..., :h2], sin_h[..., h2:]

            def apply_rope(t):                 # t: (H, N, dh) f32
                t1, t2 = t[..., :h2], t[..., h2:]
                return jnp.concatenate([t1 * c1 - t2 * s1,
                                        t2 * c2 + t1 * s2], axis=-1)

        # --- in_proj (lane-dense full-width matmul) ---
        x = jnp.dot(feat_ref[...].astype(cdt), in_w_ref[...],
                    preferred_element_type=f32) + in_b_ref[...]      # (N, D) f32

        def attend(q_t, k_h, v_h):
            # q_t: (H, Tq, dh) cdt; k_h/v_h: (H, N, dh) cdt resident
            s = jnp.einsum('hqd,hkd->hqk', q_t, k_h,
                           preferred_element_type=f32)               # (H,Tq,N) f32
            s = s - jnp.max(s, axis=-1, keepdims=True)
            p = jnp.exp(s.astype(jnp.bfloat16)) if bf16_exp else jnp.exp(s)
            den = jnp.sum(p.astype(f32), axis=-1, keepdims=True)     # (H,Tq,1)
            ctx = jnp.einsum('hqk,hkd->hqd', p.astype(cdt), v_h,
                             preferred_element_type=f32)             # (H,Tq,dh)
            # Normalize the (small) context instead of the (H,Tq,N) probs.
            return ctx * pl.reciprocal(den, approx=True)

        def layer_body(l, x):
            xc = x.astype(cdt)                                       # (N, D)

            # Full-width lane-dense projections (softmax scale folded into Wq).
            q = jnp.dot(xc, wq_ref[l], preferred_element_type=f32) + bq_ref[l]
            k = jnp.dot(xc, wk_ref[l], preferred_element_type=f32) + bk_ref[l]
            v = jnp.dot(xc, wv_ref[l], preferred_element_type=f32) + bv_ref[l]

            # Head view only for the attention matmuls; RoPE in f32.
            q_h = apply_rope(to_heads(q)).astype(cdt)                # (H, N, dh)
            k_h = apply_rope(to_heads(k)).astype(cdt)
            v_h = to_heads(v).astype(cdt)

            # Flash-style query tiling keeps the score transient (H,Tq,N).
            if N <= q_tile:
                ctx = attend(q_h, k_h, v_h)
            else:
                ctx = jnp.concatenate(
                    [attend(q_h[:, t0:min(t0 + q_tile, N), :], k_h, v_h)
                     for t0 in range(0, N, q_tile)], axis=1)         # (H, N, dh)

            # Fold heads back to (N, D) and do ONE full-K output projection.
            h1 = jnp.dot(from_heads(ctx).astype(cdt), wo_ref[l],
                         preferred_element_type=f32) + bo_ref[l]     # (N, D)

            # Residual + LayerNorm (f32).
            y = x + h1
            mu = jnp.mean(y, axis=-1, keepdims=True)
            var = jnp.mean(jnp.square(y - mu), axis=-1, keepdims=True)
            y = (y - mu) * lax.rsqrt(var + LN_EPS) * g1_ref[l] + be1_ref[l]

            # FFN (D -> 2D -> D, ReLU) + residual + LayerNorm.
            ff = jnp.dot(y.astype(cdt), wex_ref[l],
                         preferred_element_type=f32) + bex_ref[l]
            ff = jnp.maximum(ff, 0.0)
            ff = jnp.dot(ff.astype(cdt), wsq_ref[l],
                         preferred_element_type=f32) + bsq_ref[l]
            z = y + ff
            mu2 = jnp.mean(z, axis=-1, keepdims=True)
            var2 = jnp.mean(jnp.square(z - mu2), axis=-1, keepdims=True)
            z = (z - mu2) * lax.rsqrt(var2 + LN_EPS) * g2_ref[l] + be2_ref[l]
            return z

        x = lax.fori_loop(0, num_layers, layer_body, x)

        # out_proj (output columns zero-padded to a lane-dense width).
        out = jnp.dot(x.astype(cdt), out_w_ref[...],
                      preferred_element_type=f32) + out_b_ref[...]
        out_ref[...] = out.astype(out_ref.dtype)

    run_stream(ref_pts_ref, ref_feat_ref, ref_out_ref)
    run_stream(src_pts_ref, src_feat_ref, src_out_ref)


# -----------------------------------------------------------------------------
# Parameter init (deterministic, PyTorch nn.Linear-style uniform fan-in init).
# Weights stored as (in, out); biases / LN params as (1, out).
# -----------------------------------------------------------------------------
def _init_linear(key, din, dout):
    k1, k2 = jax.random.split(key)
    bound = 1.0 / jnp.sqrt(jnp.float32(din))
    w = jax.random.uniform(k1, (din, dout), jnp.float32, -bound, bound)
    b = jax.random.uniform(k2, (1, dout), jnp.float32, -bound, bound)
    return w, b


def init_params(key, input_dim, output_dim, hidden_dim, num_layers):
    keys = jax.random.split(key, 3 + num_layers)
    params = {}
    params["emb_w"], params["emb_b"] = _init_linear(keys[0], 3, hidden_dim)
    params["in_w"], params["in_b"] = _init_linear(keys[1], input_dim, hidden_dim)
    params["out_w"], params["out_b"] = _init_linear(keys[2], hidden_dim, output_dim)
    layers = []
    for l in range(num_layers):
        lk = jax.random.split(keys[3 + l], 6)
        wq, bq = _init_linear(lk[0], hidden_dim, hidden_dim)
        wk, bk = _init_linear(lk[1], hidden_dim, hidden_dim)
        wv, bv = _init_linear(lk[2], hidden_dim, hidden_dim)
        wo, bo = _init_linear(lk[3], hidden_dim, hidden_dim)
        g1 = jnp.ones((1, hidden_dim), jnp.float32)
        be1 = jnp.zeros((1, hidden_dim), jnp.float32)
        wex, bex = _init_linear(lk[4], hidden_dim, 2 * hidden_dim)
        wsq, bsq = _init_linear(lk[5], 2 * hidden_dim, hidden_dim)
        g2 = jnp.ones((1, hidden_dim), jnp.float32)
        be2 = jnp.zeros((1, hidden_dim), jnp.float32)
        layers.append([wq, bq, wk, bk, wv, bv, wo, bo, g1, be1,
                       wex, bex, wsq, bsq, g2, be2])
    params["layers"] = layers
    return params


# -----------------------------------------------------------------------------
# Wrapper helpers.
# -----------------------------------------------------------------------------
def _prepare_weights(params, num_heads, compute_dtype):
    """Stack per-layer weights on a leading L axis; fold softmax scale into Wq;
    keep the angle-embedding path f32; pad out_proj columns to 128 lanes."""
    D = params["in_w"].shape[1]
    dh = D // num_heads
    scale = 1.0 / float(dh) ** 0.5
    layers = params["layers"]
    cdt = compute_dtype
    f32 = jnp.float32

    emb_w = params["emb_w"].astype(f32)                      # (3, D) — keep f32
    emb_b = params["emb_b"].astype(f32)                      # (1, D)
    in_w = params["in_w"].astype(cdt)
    in_b = params["in_b"].astype(f32)

    out_w = params["out_w"].astype(f32)
    out_b = params["out_b"].astype(f32)
    cout = out_w.shape[1]
    cout_pad = max(128, ((cout + 127) // 128) * 128)
    if cout_pad != cout:
        out_w = jnp.pad(out_w, ((0, 0), (0, cout_pad - cout)))
        out_b = jnp.pad(out_b, ((0, 0), (0, cout_pad - cout)))
    out_w = out_w.astype(cdt)

    def stack(i):
        return jnp.stack([lp[i] for lp in layers], axis=0)

    wq = (stack(0) * scale).astype(cdt)      # softmax scale folded in (free)
    bq = (stack(1) * scale).astype(f32)
    wk = stack(2).astype(cdt)
    bk = stack(3).astype(f32)
    wv = stack(4).astype(cdt)
    bv = stack(5).astype(f32)
    wo = stack(6).astype(cdt)                # full (L, D, D) — no head split
    bo = stack(7).astype(f32)
    g1, be1 = stack(8).astype(f32), stack(9).astype(f32)
    wex = stack(10).astype(cdt)
    bex = stack(11).astype(f32)
    wsq = stack(12).astype(cdt)
    bsq = stack(13).astype(f32)
    g2, be2 = stack(14).astype(f32), stack(15).astype(f32)

    weights = [emb_w, emb_b, in_w, in_b, out_w, out_b,
               wq, bq, wk, bk, wv, bv, wo, bo, g1, be1,
               wex, bex, wsq, bsq, g2, be2]
    return weights, cout_pad


def _batch_spec(rows, cols):
    return pl.BlockSpec((pl.Squeezed(), rows, cols), lambda b: (b, 0, 0))


def _vmem_limit_bytes():
    # Generation-aware scoped VMEM limit (leave headroom for Mosaic scratch).
    try:
        cap = pltpu.get_tpu_info().vmem_capacity_bytes
    except Exception:
        cap = 64 * 1024 * 1024
    return int(min(cap - 8 * 1024 * 1024, 100 * 1024 * 1024))


def thdroformer_self(ref_points, src_points, ref_feats, src_feats, params,
                     num_heads, compute_dtype=jnp.bfloat16, q_tile=512):
    """Mirrors ThDRoFormer_self.forward (masks=None, dropout=None, ReLU)."""
    B, N, _ = ref_points.shape
    _, M, _ = src_points.shape
    Cin = ref_feats.shape[-1]
    D = params["in_w"].shape[1]
    Cout = params["out_w"].shape[1]
    L = len(params["layers"])
    assert D % num_heads == 0 and (D // num_heads) % 2 == 0

    weights, cout_pad = _prepare_weights(params, num_heads, compute_dtype)

    # Weights/biases: whole array resident in VMEM (single copy, no per-step
    # double buffering of grid-invariant constants).
    wspec = pl.BlockSpec(memory_space=pltpu.MemorySpace.VMEM)
    in_specs = [
        _batch_spec(N, 3), _batch_spec(M, 3),
        _batch_spec(N, Cin), _batch_spec(M, Cin),
    ] + [wspec] * len(weights)

    out_specs = (
        pl.BlockSpec((pl.Squeezed(), N, cout_pad), lambda b: (b, 0, 0)),
        pl.BlockSpec((pl.Squeezed(), M, cout_pad), lambda b: (b, 0, 0)),
    )
    out_shape = (jax.ShapeDtypeStruct((B, N, cout_pad), jnp.float32),
                 jax.ShapeDtypeStruct((B, M, cout_pad), jnp.float32))

    kernel = functools.partial(
        _thdroformer_kernel,
        num_heads=num_heads, num_layers=L,
        compute_dtype=compute_dtype, q_tile=int(q_tile))

    ref_out, src_out = pl.pallas_call(
        kernel,
        grid=(B,),
        in_specs=in_specs,
        out_specs=out_specs,
        out_shape=out_shape,
        compiler_params=pltpu.CompilerParams(
            dimension_semantics=("parallel",),     # batch across TCs (v7x)
            vmem_limit_bytes=_vmem_limit_bytes(),
        ),
    )(ref_points, src_points, ref_feats, src_feats, *weights)

    if cout_pad != Cout:
        ref_out = ref_out[..., :Cout]
        src_out = src_out[..., :Cout]
    return ref_out, src_out


if __name__ == "__main__":
    key = jax.random.PRNGKey(0)
    B, N, M = 2, 16, 12
    input_dim, hidden_dim, output_dim = 8, 32, 8
    num_heads, num_layers = 4, 2

    ks = jax.random.split(key, 5)
    ref_points = jax.random.normal(ks[0], (B, N, 3), jnp.float32)
    src_points = jax.random.normal(ks[1], (B, M, 3), jnp.float32)
    ref_feats = jax.random.normal(ks[2], (B, N, input_dim), jnp.float32)
    src_feats = jax.random.normal(ks[3], (B, M, input_dim), jnp.float32)
    params = init_params(ks[4], input_dim, output_dim, hidden_dim, num_layers)

    fwd = jax.jit(functools.partial(thdroformer_self, num_heads=num_heads))
    ref_out, src_out = fwd(ref_points, src_points, ref_feats, src_feats, params)
    jax.block_until_ready((ref_out, src_out))

    assert ref_out.shape == (B, N, output_dim)
    assert src_out.shape == (B, M, output_dim)
    assert jnp.all(jnp.isfinite(ref_out)) and jnp.all(jnp.isfinite(src_out))
    print("KERNEL_OK")
</pallas_src>

<mosaic_0001>
module attributes {stable_mosaic.version = 11 : i64} {
  func.func @_thdroformer_kernel(%arg0: i32, %arg1: memref<1x16x3xf32, #tpu.memory_space<vmem>>, %arg2: memref<1x12x3xf32, #tpu.memory_space<vmem>>, %arg3: memref<1x16x8xf32, #tpu.memory_space<vmem>>, %arg4: memref<1x12x8xf32, #tpu.memory_space<vmem>>, %arg5: memref<3x32xf32, #tpu.memory_space<vmem>>, %arg6: memref<1x32xf32, #tpu.memory_space<vmem>>, %arg7: memref<8x32xbf16, #tpu.memory_space<vmem>>, %arg8: memref<1x32xf32, #tpu.memory_space<vmem>>, %arg9: memref<32x128xbf16, #tpu.memory_space<vmem>>, %arg10: memref<1x128xf32, #tpu.memory_space<vmem>>, %arg11: memref<2x32x32xbf16, #tpu.memory_space<vmem>>, %arg12: memref<2x1x32xf32, #tpu.memory_space<vmem>>, %arg13: memref<2x32x32xbf16, #tpu.memory_space<vmem>>, %arg14: memref<2x1x32xf32, #tpu.memory_space<vmem>>, %arg15: memref<2x32x32xbf16, #tpu.memory_space<vmem>>, %arg16: memref<2x1x32xf32, #tpu.memory_space<vmem>>, %arg17: memref<2x32x32xbf16, #tpu.memory_space<vmem>>, %arg18: memref<2x1x32xf32, #tpu.memory_space<vmem>>, %arg19: memref<2x1x32xf32, #tpu.memory_space<vmem>>, %arg20: memref<2x1x32xf32, #tpu.memory_space<vmem>>, %arg21: memref<2x32x64xbf16, #tpu.memory_space<vmem>>, %arg22: memref<2x1x64xf32, #tpu.memory_space<vmem>>, %arg23: memref<2x64x32xbf16, #tpu.memory_space<vmem>>, %arg24: memref<2x1x32xf32, #tpu.memory_space<vmem>>, %arg25: memref<2x1x32xf32, #tpu.memory_space<vmem>>, %arg26: memref<2x1x32xf32, #tpu.memory_space<vmem>>, %arg27: memref<1x16x128xf32, #tpu.memory_space<vmem>>, %arg28: memref<1x12x128xf32, #tpu.memory_space<vmem>>) attributes {dimension_semantics = [#tpu.dimension_semantics<parallel>], iteration_bounds = array<i64: 2>, scalar_prefetch = 0 : i64, scratch_operands = 0 : i64, tpu.core_type = #tpu.core_type<tc>, window_params = [{transform_indices = @transform_0, window_bounds = array<i64: 1, 16, 3>}, {transform_indices = @transform_1, window_bounds = array<i64: 1, 12, 3>}, {transform_indices = @transform_2, window_bounds = array<i64: 1, 16, 8>}, {transform_indices = @transform_3, window_bounds = array<i64: 1, 12, 8>}, {pipeline_mode = #tpu.pipeline_mode<synchronous>, transform_indices = @transform_4, window_bounds = array<i64: 3, 32>}, {pipeline_mode = #tpu.pipeline_mode<synchronous>, transform_indices = @transform_5, window_bounds = array<i64: 1, 32>}, {pipeline_mode = #tpu.pipeline_mode<synchronous>, transform_indices = @transform_6, window_bounds = array<i64: 8, 32>}, {pipeline_mode = #tpu.pipeline_mode<synchronous>, transform_indices = @transform_7, window_bounds = array<i64: 1, 32>}, {pipeline_mode = #tpu.pipeline_mode<synchronous>, transform_indices = @transform_8, window_bounds = array<i64: 32, 128>}, {pipeline_mode = #tpu.pipeline_mode<synchronous>, transform_indices = @transform_9, window_bounds = array<i64: 1, 128>}, {pipeline_mode = #tpu.pipeline_mode<synchronous>, transform_indices = @transform_10, window_bounds = array<i64: 2, 32, 32>}, {pipeline_mode = #tpu.pipeline_mode<synchronous>, transform_indices = @transform_11, window_bounds = array<i64: 2, 1, 32>}, {pipeline_mode = #tpu.pipeline_mode<synchronous>, transform_indices = @transform_12, window_bounds = array<i64: 2, 32, 32>}, {pipeline_mode = #tpu.pipeline_mode<synchronous>, transform_indices = @transform_13, window_bounds = array<i64: 2, 1, 32>}, {pipeline_mode = #tpu.pipeline_mode<synchronous>, transform_indices = @transform_14, window_bounds = array<i64: 2, 32, 32>}, {pipeline_mode = #tpu.pipeline_mode<synchronous>, transform_indices = @transform_15, window_bounds = array<i64: 2, 1, 32>}, {pipeline_mode = #tpu.pipeline_mode<synchronous>, transform_indices = @transform_16, window_bounds = array<i64: 2, 32, 32>}, {pipeline_mode = #tpu.pipeline_mode<synchronous>, transform_indices = @transform_17, window_bounds = array<i64: 2, 1, 32>}, {pipeline_mode = #tpu.pipeline_mode<synchronous>, transform_indices = @transform_18, window_bounds = array<i64: 2, 1, 32>}, {pipeline_mode = #tpu.pipeline_mode<synchronous>, transform_indices = @transform_19, window_bounds = array<i64: 2, 1, 32>}, {pipeline_mode = #tpu.pipeline_mode<synchronous>, transform_indices = @transform_20, window_bounds = array<i64: 2, 32, 64>}, {pipeline_mode = #tpu.pipeline_mode<synchronous>, transform_indices = @transform_21, window_bounds = array<i64: 2, 1, 64>}, {pipeline_mode = #tpu.pipeline_mode<synchronous>, transform_indices = @transform_22, window_bounds = array<i64: 2, 64, 32>}, {pipeline_mode = #tpu.pipeline_mode<synchronous>, transform_indices = @transform_23, window_bounds = array<i64: 2, 1, 32>}, {pipeline_mode = #tpu.pipeline_mode<synchronous>, transform_indices = @transform_24, window_bounds = array<i64: 2, 1, 32>}, {pipeline_mode = #tpu.pipeline_mode<synchronous>, transform_indices = @transform_25, window_bounds = array<i64: 2, 1, 32>}, {transform_indices = @transform_26, window_bounds = array<i64: 1, 16, 128>}, {transform_indices = @transform_27, window_bounds = array<i64: 1, 12, 128>}]} {
    %c0 = arith.constant 0 : index
    %c0_0 = arith.constant 0 : index
    %c0_1 = arith.constant 0 : index
    %0 = vector.load %arg1[%c0, %c0_0, %c0_1] : memref<1x16x3xf32, #tpu.memory_space<vmem>>, vector<1x16x3xf32>
    %1 = vector.shape_cast %0 : vector<1x16x3xf32> to vector<16x3xf32>
    %2 = vector.extract_strided_slice %1 {offsets = [0, 0], sizes = [16, 1], strides = [1, 1]} : vector<16x3xf32> to vector<16x1xf32>
    %c0_2 = arith.constant 0 : index
    %c0_3 = arith.constant 0 : index
    %3 = vector.load %arg5[%c0_2, %c0_3] : memref<3x32xf32, #tpu.memory_space<vmem>>, vector<1x32xf32>
    %4 = vector.broadcast %2 : vector<16x1xf32> to vector<16x32xf32>
    %5 = vector.broadcast %3 : vector<1x32xf32> to vector<16x32xf32>
    %6 = arith.mulf %4, %5 : vector<16x32xf32>
    %7 = vector.extract_strided_slice %1 {offsets = [0, 1], sizes = [16, 1], strides = [1, 1]} : vector<16x3xf32> to vector<16x1xf32>
    %c1 = arith.constant 1 : index
    %c0_4 = arith.constant 0 : index
    %8 = vector.load %arg5[%c1, %c0_4] : memref<3x32xf32, #tpu.memory_space<vmem>>, vector<1x32xf32>
    %9 = vector.broadcast %7 : vector<16x1xf32> to vector<16x32xf32>
    %10 = vector.broadcast %8 : vector<1x32xf32> to vector<16x32xf32>
    %11 = arith.mulf %9, %10 : vector<16x32xf32>
    %12 = arith.addf %6, %11 : vector<16x32xf32>
    %13 = vector.extract_strided_slice %1 {offsets = [0, 2], sizes = [16, 1], strides = [1, 1]} : vector<16x3xf32> to vector<16x1xf32>
    %c2 = arith.constant 2 : index
    %c0_5 = arith.constant 0 : index
    %14 = vector.load %arg5[%c2, %c0_5] : memref<3x32xf32, #tpu.memory_space<vmem>>, vector<1x32xf32>
    %15 = vector.broadcast %13 : vector<16x1xf32> to vector<16x32xf32>
    %16 = vector.broadcast %14 : vector<1x32xf32> to vector<16x32xf32>
    %17 = arith.mulf %15, %16 : vector<16x32xf32>
    %18 = arith.addf %12, %17 : vector<16x32xf32>
    %c0_6 = arith.constant 0 : index
    %c0_7 = arith.constant 0 : index
    %19 = vector.load %arg6[%c0_6, %c0_7] : memref<1x32xf32, #tpu.memory_space<vmem>>, vector<1x32xf32>
    %20 = vector.broadcast %19 : vector<1x32xf32> to vector<16x32xf32>
    %21 = arith.addf %18, %20 : vector<16x32xf32>
    %22 = math.cos %21 : vector<16x32xf32>
    %23 = math.sin %21 : vector<16x32xf32>
    %24 = vector.extract_strided_slice %22 {offsets = [0, 0], sizes = [16, 8], strides = [1, 1]} : vector<16x32xf32> to vector<16x8xf32>
    %25 = vector.extract_strided_slice %22 {offsets = [0, 8], sizes = [16, 8], strides = [1, 1]} : vector<16x32xf32> to vector<16x8xf32>
    %26 = vector.extract_strided_slice %22 {offsets = [0, 16], sizes = [16, 8], strides = [1, 1]} : vector<16x32xf32> to vector<16x8xf32>
    %27 = vector.extract_strided_slice %22 {offsets = [0, 24], sizes = [16, 8], strides = [1, 1]} : vector<16x32xf32> to vector<16x8xf32>
    %28 = vector.shape_cast %24 : vector<16x8xf32> to vector<1x16x8xf32>
    %29 = vector.shape_cast %25 : vector<16x8xf32> to vector<1x16x8xf32>
    %30 = vector.shape_cast %26 : vector<16x8xf32> to vector<1x16x8xf32>
    %31 = vector.shape_cast %27 : vector<16x8xf32> to vector<1x16x8xf32>
    %32 = tpu.concatenate %28, %29, %30, %31 in 0 : vector<1x16x8xf32>, vector<1x16x8xf32>, vector<1x16x8xf32>, vector<1x16x8xf32> -> vector<4x16x8xf32>
    %33 = vector.extract_strided_slice %23 {offsets = [0, 0], sizes = [16, 8], strides = [1, 1]} : vector<16x32xf32> to vector<16x8xf32>
    %34 = vector.extract_strided_slice %23 {offsets = [0, 8], sizes = [16, 8], strides = [1, 1]} : vector<16x32xf32> to vector<16x8xf32>
    %35 = vector.extract_strided_slice %23 {offsets = [0, 16], sizes = [16, 8], strides = [1, 1]} : vector<16x32xf32> to vector<16x8xf32>
    %36 = vector.extract_strided_slice %23 {offsets = [0, 24], sizes = [16, 8], strides = [1, 1]} : vector<16x32xf32> to vector<16x8xf32>
    %37 = vector.shape_cast %33 : vector<16x8xf32> to vector<1x16x8xf32>
    %38 = vector.shape_cast %34 : vector<16x8xf32> to vector<1x16x8xf32>
    %39 = vector.shape_cast %35 : vector<16x8xf32> to vector<1x16x8xf32>
    %40 = vector.shape_cast %36 : vector<16x8xf32> to vector<1x16x8xf32>
    %41 = tpu.concatenate %37, %38, %39, %40 in 0 : vector<1x16x8xf32>, vector<1x16x8xf32>, vector<1x16x8xf32>, vector<1x16x8xf32> -> vector<4x16x8xf32>
    %42 = vector.extract_strided_slice %32 {offsets = [0, 0, 0], sizes = [4, 16, 4], strides = [1, 1, 1]} : vector<4x16x8xf32> to vector<4x16x4xf32>
    %43 = vector.extract_strided_slice %32 {offsets = [0, 0, 4], sizes = [4, 16, 4], strides = [1, 1, 1]} : vector<4x16x8xf32> to vector<4x16x4xf32>
    %44 = vector.extract_strided_slice %41 {offsets = [0, 0, 0], sizes = [4, 16, 4], strides = [1, 1, 1]} : vector<4x16x8xf32> to vector<4x16x4xf32>
    %45 = vector.extract_strided_slice %41 {offsets = [0, 0, 4], sizes = [4, 16, 4], strides = [1, 1, 1]} : vector<4x16x8xf32> to vector<4x16x4xf32>
    %c0_8 = arith.constant 0 : index
    %c0_9 = arith.constant 0 : index
    %c0_10 = arith.constant 0 : index
    %46 = vector.load %arg3[%c0_8, %c0_9, %c0_10] : memref<1x16x8xf32, #tpu.memory_space<vmem>>, vector<1x16x8xf32>
    %47 = vector.shape_cast %46 : vector<1x16x8xf32> to vector<16x8xf32>
    %48 = arith.truncf %47 : vector<16x8xf32> to vector<16x8xbf16>
    %c0_11 = arith.constant 0 : index
    %c0_12 = arith.constant 0 : index
    %49 = vector.load %arg7[%c0_11, %c0_12] : memref<8x32xbf16, #tpu.memory_space<vmem>>, vector<8x32xbf16>
    %cst = arith.constant dense<0.000000e+00> : vector<16x32xf32>
    %50 = tpu.matmul %48, %49, %cst {dimension_numbers = #tpu.dot_dimension_numbers<[1], [0], [0], [1], [0, 0, 1, 1], [], []>} : vector<16x8xbf16>, vector<8x32xbf16>, vector<16x32xf32> -> vector<16x32xf32>
    %c0_13 = arith.constant 0 : index
    %c0_14 = arith.constant 0 : index
    %51 = vector.load %arg8[%c0_13, %c0_14] : memref<1x32xf32, #tpu.memory_space<vmem>>, vector<1x32xf32>
    %52 = vector.broadcast %51 : vector<1x32xf32> to vector<16x32xf32>
    %53 = arith.addf %50, %52 : vector<16x32xf32>
    %c0_i32 = arith.constant 0 : i32
    %c2_i32 = arith.constant 2 : i32
    %54 = arith.addi %c0_i32, %c2_i32 : i32
    %c1_i32 = arith.constant 1 : i32
    %55 = scf.for %arg29 = %c0_i32 to %54 step %c1_i32 iter_args(%arg30 = %53) -> (vector<16x32xf32>)  : i32 {
      %130 = arith.truncf %arg30 : vector<16x32xf32> to vector<16x32xbf16>
      %131 = arith.index_cast %arg29 : i32 to index
      %c0_55 = arith.constant 0 : index
      %c0_56 = arith.constant 0 : index
      %132 = vector.load %arg11[%131, %c0_55, %c0_56] : memref<2x32x32xbf16, #tpu.memory_space<vmem>>, vector<1x32x32xbf16>
      %133 = vector.shape_cast %132 : vector<1x32x32xbf16> to vector<32x32xbf16>
      %cst_57 = arith.constant dense<0.000000e+00> : vector<16x32xf32>
      %134 = tpu.matmul %130, %133, %cst_57 {dimension_numbers = #tpu.dot_dimension_numbers<[1], [0], [0], [1], [0, 0, 1, 1], [], []>} : vector<16x32xbf16>, vector<32x32xbf16>, vector<16x32xf32> -> vector<16x32xf32>
      %135 = arith.index_cast %arg29 : i32 to index
      %c0_58 = arith.constant 0 : index
      %c0_59 = arith.constant 0 : index
      %136 = vector.load %arg12[%135, %c0_58, %c0_59] : memref<2x1x32xf32, #tpu.memory_space<vmem>>, vector<1x1x32xf32>
      %137 = vector.shape_cast %136 : vector<1x1x32xf32> to vector<1x32xf32>
      %138 = vector.broadcast %137 : vector<1x32xf32> to vector<16x32xf32>
      %139 = arith.addf %134, %138 : vector<16x32xf32>
      %140 = arith.index_cast %arg29 : i32 to index
      %c0_60 = arith.constant 0 : index
      %c0_61 = arith.constant 0 : index
      %141 = vector.load %arg13[%140, %c0_60, %c0_61] : memref<2x32x32xbf16, #tpu.memory_space<vmem>>, vector<1x32x32xbf16>
      %142 = vector.shape_cast %141 : vector<1x32x32xbf16> to vector<32x32xbf16>
      %cst_62 = arith.constant dense<0.000000e+00> : vector<16x32xf32>
      %143 = tpu.matmul %130, %142, %cst_62 {dimension_numbers = #tpu.dot_dimension_numbers<[1], [0], [0], [1], [0, 0, 1, 1], [], []>} : vector<16x32xbf16>, vector<32x32xbf16>, vector<16x32xf32> -> vector<16x32xf32>
      %144 = arith.index_cast %arg29 : i32 to index
      %c0_63 = arith.constant 0 : index
      %c0_64 = arith.constant 0 : index
      %145 = vector.load %arg14[%144, %c0_63, %c0_64] : memref<2x1x32xf32, #tpu.memory_space<vmem>>, vector<1x1x32xf32>
      %146 = vector.shape_cast %145 : vector<1x1x32xf32> to vector<1x32xf32>
      %147 = vector.broadcast %146 : vector<1x32xf32> to vector<16x32xf32>
      %148 = arith.addf %143, %147 : vector<16x32xf32>
      %149 = arith.index_cast %arg29 : i32 to index
      %c0_65 = arith.constant 0 : index
      %c0_66 = arith.constant 0 : index
      %150 = vector.load %arg15[%149, %c0_65, %c0_66] : memref<2x32x32xbf16, #tpu.memory_space<vmem>>, vector<1x32x32xbf16>
      %151 = vector.shape_cast %150 : vector<1x32x32xbf16> to vector<32x32xbf16>
      %cst_67 = arith.constant dense<0.000000e+00> : vector<16x32xf32>
      %152 = tpu.matmul %130, %151, %cst_67 {dimension_numbers = #tpu.dot_dimension_numbers<[1], [0], [0], [1], [0, 0, 1, 1], [], []>} : vector<16x32xbf16>, vector<32x32xbf16>, vector<16x32xf32> -> vector<16x32xf32>
      %153 = arith.index_cast %arg29 : i32 to index
      %c0_68 = arith.constant 0 : index
      %c0_69 = arith.constant 0 : index
      %154 = vector.load %arg16[%153, %c0_68, %c0_69] : memref<2x1x32xf32, #tpu.memory_space<vmem>>, vector<1x1x32xf32>
      %155 = vector.shape_cast %154 : vector<1x1x32xf32> to vector<1x32xf32>
      %156 = vector.broadcast %155 : vector<1x32xf32> to vector<16x32xf32>
      %157 = arith.addf %152, %156 : vector<16x32xf32>
      %158 = vector.extract_strided_slice %139 {offsets = [0, 0], sizes = [16, 8], strides = [1, 1]} : vector<16x32xf32> to vector<16x8xf32>
      %159 = vector.extract_strided_slice %139 {offsets = [0, 8], sizes = [16, 8], strides = [1, 1]} : vector<16x32xf32> to vector<16x8xf32>
      %160 = vector.extract_strided_slice %139 {offsets = [0, 16], sizes = [16, 8], strides = [1, 1]} : vector<16x32xf32> to vector<16x8xf32>
      %161 = vector.extract_strided_slice %139 {offsets = [0, 24], sizes = [16, 8], strides = [1, 1]} : vector<16x32xf32> to vector<16x8xf32>
      %162 = vector.shape_cast %158 : vector<16x8xf32> to vector<1x16x8xf32>
      %163 = vector.shape_cast %159 : vector<16x8xf32> to vector<1x16x8xf32>
      %164 = vector.shape_cast %160 : vector<16x8xf32> to vector<1x16x8xf32>
      %165 = vector.shape_cast %161 : vector<16x8xf32> to vector<1x16x8xf32>
      %166 = tpu.concatenate %162, %163, %164, %165 in 0 : vector<1x16x8xf32>, vector<1x16x8xf32>, vector<1x16x8xf32>, vector<1x16x8xf32> -> vector<4x16x8xf32>
      %167 = vector.extract_strided_slice %166 {offsets = [0, 0, 0], sizes = [4, 16, 4], strides = [1, 1, 1]} : vector<4x16x8xf32> to vector<4x16x4xf32>
      %168 = vector.extract_strided_slice %166 {offsets = [0, 0, 4], sizes = [4, 16, 4], strides = [1, 1, 1]} : vector<4x16x8xf32> to vector<4x16x4xf32>
      %169 = arith.mulf %167, %42 : vector<4x16x4xf32>
      %170 = arith.mulf %168, %44 : vector<4x16x4xf32>
      %171 = arith.subf %169, %170 : vector<4x16x4xf32>
      %172 = arith.mulf %168, %43 : vector<4x16x4xf32>
      %173 = arith.mulf %167, %45 : vector<4x16x4xf32>
      %174 = arith.addf %172, %173 : vector<4x16x4xf32>
      %175 = tpu.concatenate %171, %174 in 2 : vector<4x16x4xf32>, vector<4x16x4xf32> -> vector<4x16x8xf32>
      %176 = arith.truncf %175 : vector<4x16x8xf32> to vector<4x16x8xbf16>
      %177 = vector.extract_strided_slice %148 {offsets = [0, 0], sizes = [16, 8], strides = [1, 1]} : vector<16x32xf32> to vector<16x8xf32>
      %178 = vector.extract_strided_slice %148 {offsets = [0, 8], sizes = [16, 8], strides = [1, 1]} : vector<16x32xf32> to vector<16x8xf32>
      %179 = vector.extract_strided_slice %148 {offsets = [0, 16], sizes = [16, 8], strides = [1, 1]} : vector<16x32xf32> to vector<16x8xf32>
      %180 = vector.extract_strided_slice %148 {offsets = [0, 24], sizes = [16, 8], strides = [1, 1]} : vector<16x32xf32> to vector<16x8xf32>
      %181 = vector.shape_cast %177 : vector<16x8xf32> to vector<1x16x8xf32>
      %182 = vector.shape_cast %178 : vector<16x8xf32> to vector<1x16x8xf32>
      %183 = vector.shape_cast %179 : vector<16x8xf32> to vector<1x16x8xf32>
      %184 = vector.shape_cast %180 : vector<16x8xf32> to vector<1x16x8xf32>
      %185 = tpu.concatenate %181, %182, %183, %184 in 0 : vector<1x16x8xf32>, vector<1x16x8xf32>, vector<1x16x8xf32>, vector<1x16x8xf32> -> vector<4x16x8xf32>
      %186 = vector.extract_strided_slice %185 {offsets = [0, 0, 0], sizes = [4, 16, 4], strides = [1, 1, 1]} : vector<4x16x8xf32> to vector<4x16x4xf32>
      %187 = vector.extract_strided_slice %185 {offsets = [0, 0, 4], sizes = [4, 16, 4], strides = [1, 1, 1]} : vector<4x16x8xf32> to vector<4x16x4xf32>
      %188 = arith.mulf %186, %42 : vector<4x16x4xf32>
      %189 = arith.mulf %187, %44 : vector<4x16x4xf32>
      %190 = arith.subf %188, %189 : vector<4x16x4xf32>
      %191 = arith.mulf %187, %43 : vector<4x16x4xf32>
      %192 = arith.mulf %186, %45 : vector<4x16x4xf32>
      %193 = arith.addf %191, %192 : vector<4x16x4xf32>
      %194 = tpu.concatenate %190, %193 in 2 : vector<4x16x4xf32>, vector<4x16x4xf32> -> vector<4x16x8xf32>
      %195 = arith.truncf %194 : vector<4x16x8xf32> to vector<4x16x8xbf16>
      %196 = vector.extract_strided_slice %157 {offsets = [0, 0], sizes = [16, 8], strides = [1, 1]} : vector<16x32xf32> to vector<16x8xf32>
      %197 = vector.extract_strided_slice %157 {offsets = [0, 8], sizes = [16, 8], strides = [1, 1]} : vector<16x32xf32> to vector<16x8xf32>
      %198 = vector.extract_strided_slice %157 {offsets = [0, 16], sizes = [16, 8], strides = [1, 1]} : vector<16x32xf32> to vector<16x8xf32>
      %199 = vector.extract_strided_slice %157 {offsets = [0, 24], sizes = [16, 8], strides = [1, 1]} : vector<16x32xf32> to vector<16x8xf32>
      %200 = vector.shape_cast %196 : vector<16x8xf32> to vector<1x16x8xf32>
      %201 = vector.shape_cast %197 : vector<16x8xf32> to vector<1x16x8xf32>
      %202 = vector.shape_cast %198 : vector<16x8xf32> to vector<1x16x8xf32>
      %203 = vector.shape_cast %199 : vector<16x8xf32> to vector<1x16x8xf32>
      %204 = tpu.concatenate %200, %201, %202, %203 in 0 : vector<1x16x8xf32>, vector<1x16x8xf32>, vector<1x16x8xf32>, vector<1x16x8xf32> -> vector<4x16x8xf32>
      %205 = arith.truncf %204 : vector<4x16x8xf32> to vector<4x16x8xbf16>
      "tpu.trace_start"() <{level = 10 : i32, message = "hqd,hkd->hqk"}> : () -> ()
      %cst_70 = arith.constant dense<0.000000e+00> : vector<4x16x16xf32>
      %206 = tpu.matmul %176, %195, %cst_70 {dimension_numbers = #tpu.dot_dimension_numbers<[2], [2], [1], [1], [0, 0, 0, 1, 1, 1], [0], [0]>} : vector<4x16x8xbf16>, vector<4x16x8xbf16>, vector<4x16x16xf32> -> vector<4x16x16xf32>
      "tpu.trace_stop"() : () -> ()
      %cst_71 = arith.constant dense<0xFF800000> : vector<4x16xf32>
      %207 = vector.multi_reduction <maximumf>, %206, %cst_71 [2] : vector<4x16x16xf32> to vector<4x16xf32>
      %208 = vector.shape_cast %207 : vector<4x16xf32> to vector<4x16x1xf32>
      %209 = vector.broadcast %208 : vector<4x16x1xf32> to vector<4x16x16xf32>
      %210 = arith.subf %206, %209 : vector<4x16x16xf32>
      %211 = arith.truncf %210 : vector<4x16x16xf32> to vector<4x16x16xbf16>
      %212 = math.exp %211 : vector<4x16x16xbf16>
      %213 = arith.extf %212 : vector<4x16x16xbf16> to vector<4x16x16xf32>
      %cst_72 = arith.constant dense<0.000000e+00> : vector<4x16xf32>
      %214 = vector.multi_reduction <add>, %213, %cst_72 [2] : vector<4x16x16xf32> to vector<4x16xf32>
      %215 = vector.shape_cast %214 : vector<4x16xf32> to vector<4x16x1xf32>
      "tpu.trace_start"() <{level = 10 : i32, message = "hqk,hkd->hqd"}> : () -> ()
      %cst_73 = arith.constant dense<0.000000e+00> : vector<4x16x8xf32>
      %216 = tpu.matmul %212, %205, %cst_73 {dimension_numbers = #tpu.dot_dimension_numbers<[2], [1], [1], [2], [0, 0, 0, 1, 1, 2], [0], [0]>} : vector<4x16x16xbf16>, vector<4x16x8xbf16>, vector<4x16x8xf32> -> vector<4x16x8xf32>
      "tpu.trace_stop"() : () -> ()
      %217 = tpu.reciprocal %215 {approx = true} : vector<4x16x1xf32> -> vector<4x16x1xf32>
      %218 = vector.broadcast %217 : vector<4x16x1xf32> to vector<4x16x8xf32>
      %219 = arith.mulf %216, %218 : vector<4x16x8xf32>
      %220 = vector.extract_strided_slice %219 {offsets = [0, 0, 0], sizes = [1, 16, 8], strides = [1, 1, 1]} : vector<4x16x8xf32> to vector<1x16x8xf32>
      %221 = vector.shape_cast %220 : vector<1x16x8xf32> to vector<16x8xf32>
      %222 = vector.extract_strided_slice %219 {offsets = [1, 0, 0], sizes = [1, 16, 8], strides = [1, 1, 1]} : vector<4x16x8xf32> to vector<1x16x8xf32>
      %223 = vector.shape_cast %222 : vector<1x16x8xf32> to vector<16x8xf32>
      %224 = vector.extract_strided_slice %219 {offsets = [2, 0, 0], sizes = [1, 16, 8], strides = [1, 1, 1]} : vector<4x16x8xf32> to vector<1x16x8xf32>
      %225 = vector.shape_cast %224 : vector<1x16x8xf32> to vector<16x8xf32>
      %226 = vector.extract_strided_slice %219 {offsets = [3, 0, 0], sizes = [1, 16, 8], strides = [1, 1, 1]} : vector<4x16x8xf32> to vector<1x16x8xf32>
      %227 = vector.shape_cast %226 : vector<1x16x8xf32> to vector<16x8xf32>
      %228 = tpu.concatenate %221, %223, %225, %227 in 1 : vector<16x8xf32>, vector<16x8xf32>, vector<16x8xf32>, vector<16x8xf32> -> vector<16x32xf32>
      %229 = arith.truncf %228 : vector<16x32xf32> to vector<16x32xbf16>
      %230 = arith.index_cast %arg29 : i32 to index
      %c0_74 = arith.constant 0 : index
      %c0_75 = arith.constant 0 : index
      %231 = vector.load %arg17[%230, %c0_74, %c0_75] : memref<2x32x32xbf16, #tpu.memory_space<vmem>>, vector<1x32x32xbf16>
      %232 = vector.shape_cast %231 : vector<1x32x32xbf16> to vector<32x32xbf16>
      %cst_76 = arith.constant dense<0.000000e+00> : vector<16x32xf32>
      %233 = tpu.matmul %229, %232, %cst_76 {dimension_numbers = #tpu.dot_dimension_numbers<[1], [0], [0], [1], [0, 0, 1, 1], [], []>} : vector<16x32xbf16>, vector<32x32xbf16>, vector<16x32xf32> -> vector<16x32xf32>
      %234 = arith.index_cast %arg29 : i32 to index
      %c0_77 = arith.constant 0 : index
      %c0_78 = arith.constant 0 : index
      %235 = vector.load %arg18[%234, %c0_77, %c0_78] : memref<2x1x32xf32, #tpu.memory_space<vmem>>, vector<1x1x32xf32>
      %236 = vector.shape_cast %235 : vector<1x1x32xf32> to vector<1x32xf32>
      %237 = vector.broadcast %236 : vector<1x32xf32> to vector<16x32xf32>
      %238 = arith.addf %233, %237 : vector<16x32xf32>
      %239 = arith.addf %arg30, %238 : vector<16x32xf32>
      %cst_79 = arith.constant dense<0.000000e+00> : vector<16xf32>
      %240 = vector.multi_reduction <add>, %239, %cst_79 [1] : vector<16x32xf32> to vector<16xf32>
      %241 = vector.shape_cast %240 : vector<16xf32> to vector<16x1xf32>
      %cst_80 = arith.constant 3.200000e+01 : f32
      %242 = vector.broadcast %cst_80 : f32 to vector<16x1xf32>
      %243 = arith.divf %241, %242 : vector<16x1xf32>
      %244 = vector.broadcast %243 : vector<16x1xf32> to vector<16x32xf32>
      %245 = arith.subf %239, %244 : vector<16x32xf32>
      %246 = arith.mulf %245, %245 : vector<16x32xf32>
      %cst_81 = arith.constant dense<0.000000e+00> : vector<16xf32>
      %247 = vector.multi_reduction <add>, %246, %cst_81 [1] : vector<16x32xf32> to vector<16xf32>
      %248 = vector.shape_cast %247 : vector<16xf32> to vector<16x1xf32>
      %cst_82 = arith.constant 3.200000e+01 : f32
      %249 = vector.broadcast %cst_82 : f32 to vector<16x1xf32>
      %250 = arith.divf %248, %249 : vector<16x1xf32>
      %251 = vector.broadcast %243 : vector<16x1xf32> to vector<16x32xf32>
      %252 = arith.subf %239, %251 : vector<16x32xf32>
      %cst_83 = arith.constant 9.99999974E-6 : f32
      %253 = vector.broadcast %cst_83 : f32 to vector<16x1xf32>
      %254 = arith.addf %250, %253 : vector<16x1xf32>
      %255 = math.rsqrt %254 : vector<16x1xf32>
      %256 = vector.broadcast %255 : vector<16x1xf32> to vector<16x32xf32>
      %257 = arith.mulf %252, %256 : vector<16x32xf32>
      %258 = arith.index_cast %arg29 : i32 to index
      %c0_84 = arith.constant 0 : index
      %c0_85 = arith.constant 0 : index
      %259 = vector.load %arg19[%258, %c0_84, %c0_85] : memref<2x1x32xf32, #tpu.memory_space<vmem>>, vector<1x1x32xf32>
      %260 = vector.shape_cast %259 : vector<1x1x32xf32> to vector<1x32xf32>
      %261 = vector.broadcast %260 : vector<1x32xf32> to vector<16x32xf32>
      %262 = arith.mulf %257, %261 : vector<16x32xf32>
      %263 = arith.index_cast %arg29 : i32 to index
      %c0_86 = arith.constant 0 : index
      %c0_87 = arith.constant 0 : index
      %264 = vector.load %arg20[%263, %c0_86, %c0_87] : memref<2x1x32xf32, #tpu.memory_space<vmem>>, vector<1x1x32xf32>
      %265 = vector.shape_cast %264 : vector<1x1x32xf32> to vector<1x32xf32>
      %266 = vector.broadcast %265 : vector<1x32xf32> to vector<16x32xf32>
      %267 = arith.addf %262, %266 : vector<16x32xf32>
      %268 = arith.truncf %267 : vector<16x32xf32> to vector<16x32xbf16>
      %269 = arith.index_cast %arg29 : i32 to index
      %c0_88 = arith.constant 0 : index
      %c0_89 = arith.constant 0 : index
      %270 = vector.load %arg21[%269, %c0_88, %c0_89] : memref<2x32x64xbf16, #tpu.memory_space<vmem>>, vector<1x32x64xbf16>
      %271 = vector.shape_cast %270 : vector<1x32x64xbf16> to vector<32x64xbf16>
      %cst_90 = arith.constant dense<0.000000e+00> : vector<16x64xf32>
      %272 = tpu.matmul %268, %271, %cst_90 {dimension_numbers = #tpu.dot_dimension_numbers<[1], [0], [0], [1], [0, 0, 1, 1], [], []>} : vector<16x32xbf16>, vector<32x64xbf16>, vector<16x64xf32> -> vector<16x64xf32>
      %273 = arith.index_cast %arg29 : i32 to index
      %c0_91 = arith.constant 0 : index
      %c0_92 = arith.constant 0 : index
      %274 = vector.load %arg22[%273, %c0_91, %c0_92] : memref<2x1x64xf32, #tpu.memory_space<vmem>>, vector<1x1x64xf32>
      %275 = vector.shape_cast %274 : vector<1x1x64xf32> to vector<1x64xf32>
      %276 = vector.broadcast %275 : vector<1x64xf32> to vector<16x64xf32>
      %277 = arith.addf %272, %276 : vector<16x64xf32>
      %cst_93 = arith.constant 0.000000e+00 : f32
      %278 = vector.broadcast %cst_93 : f32 to vector<16x64xf32>
      %279 = arith.maximumf %277, %278 : vector<16x64xf32>
      %280 = arith.truncf %279 : vector<16x64xf32> to vector<16x64xbf16>
      %281 = arith.index_cast %arg29 : i32 to index
      %c0_94 = arith.constant 0 : index
      %c0_95 = arith.constant 0 : index
      %282 = vector.load %arg23[%281, %c0_94, %c0_95] : memref<2x64x32xbf16, #tpu.memory_space<vmem>>, vector<1x64x32xbf16>
      %283 = vector.shape_cast %282 : vector<1x64x32xbf16> to vector<64x32xbf16>
      %cst_96 = arith.constant dense<0.000000e+00> : vector<16x32xf32>
      %284 = tpu.matmul %280, %283, %cst_96 {dimension_numbers = #tpu.dot_dimension_numbers<[1], [0], [0], [1], [0, 0, 1, 1], [], []>} : vector<16x64xbf16>, vector<64x32xbf16>, vector<16x32xf32> -> vector<16x32xf32>
      %285 = arith.index_cast %arg29 : i32 to index
      %c0_97 = arith.constant 0 : index
      %c0_98 = arith.constant 0 : index
      %286 = vector.load %arg24[%285, %c0_97, %c0_98] : memref<2x1x32xf32, #tpu.memory_space<vmem>>, vector<1x1x32xf32>
      %287 = vector.shape_cast %286 : vector<1x1x32xf32> to vector<1x32xf32>
      %288 = vector.broadcast %287 : vector<1x32xf32> to vector<16x32xf32>
      %289 = arith.addf %284, %288 : vector<16x32xf32>
      %290 = arith.addf %267, %289 : vector<16x32xf32>
      %cst_99 = arith.constant dense<0.000000e+00> : vector<16xf32>
      %291 = vector.multi_reduction <add>, %290, %cst_99 [1] : vector<16x32xf32> to vector<16xf32>
      %292 = vector.shape_cast %291 : vector<16xf32> to vector<16x1xf32>
      %cst_100 = arith.constant 3.200000e+01 : f32
      %293 = vector.broadcast %cst_100 : f32 to vector<16x1xf32>
      %294 = arith.divf %292, %293 : vector<16x1xf32>
      %295 = vector.broadcast %294 : vector<16x1xf32> to vector<16x32xf32>
      %296 = arith.subf %290, %295 : vector<16x32xf32>
      %297 = arith.mulf %296, %296 : vector<16x32xf32>
      %cst_101 = arith.constant dense<0.000000e+00> : vector<16xf32>
      %298 = vector.multi_reduction <add>, %297, %cst_101 [1] : vector<16x32xf32> to vector<16xf32>
      %299 = vector.shape_cast %298 : vector<16xf32> to vector<16x1xf32>
      %cst_102 = arith.constant 3.200000e+01 : f32
      %300 = vector.broadcast %cst_102 : f32 to vector<16x1xf32>
      %301 = arith.divf %299, %300 : vector<16x1xf32>
      %302 = vector.broadcast %294 : vector<16x1xf32> to vector<16x32xf32>
      %303 = arith.subf %290, %302 : vector<16x32xf32>
      %cst_103 = arith.constant 9.99999974E-6 : f32
      %304 = vector.broadcast %cst_103 : f32 to vector<16x1xf32>
      %305 = arith.addf %301, %304 : vector<16x1xf32>
      %306 = math.rsqrt %305 : vector<16x1xf32>
      %307 = vector.broadcast %306 : vector<16x1xf32> to vector<16x32xf32>
      %308 = arith.mulf %303, %307 : vector<16x32xf32>
      %309 = arith.index_cast %arg29 : i32 to index
      %c0_104 = arith.constant 0 : index
      %c0_105 = arith.constant 0 : index
      %310 = vector.load %arg25[%309, %c0_104, %c0_105] : memref<2x1x32xf32, #tpu.memory_space<vmem>>, vector<1x1x32xf32>
      %311 = vector.shape_cast %310 : vector<1x1x32xf32> to vector<1x32xf32>
      %312 = vector.broadcast %311 : vector<1x32xf32> to vector<16x32xf32>
      %313 = arith.mulf %308, %312 : vector<16x32xf32>
      %314 = arith.index_cast %arg29 : i32 to index
      %c0_106 = arith.constant 0 : index
      %c0_107 = arith.constant 0 : index
      %315 = vector.load %arg26[%314, %c0_106, %c0_107] : memref<2x1x32xf32, #tpu.memory_space<vmem>>, vector<1x1x32xf32>
      %316 = vector.shape_cast %315 : vector<1x1x32xf32> to vector<1x32xf32>
      %317 = vector.broadcast %316 : vector<1x32xf32> to vector<16x32xf32>
      %318 = arith.addf %313, %317 : vector<16x32xf32>
      scf.yield %318 : vector<16x32xf32>
    }
    %c2_i32_15 = arith.constant 2 : i32
    %56 = arith.truncf %55 : vector<16x32xf32> to vector<16x32xbf16>
    %c0_16 = arith.constant 0 : index
    %c0_17 = arith.constant 0 : index
    %57 = vector.load %arg9[%c0_16, %c0_17] : memref<32x128xbf16, #tpu.memory_space<vmem>>, vector<32x128xbf16>
    %cst_18 = arith.constant dense<0.000000e+00> : vector<16x128xf32>
    %58 = tpu.matmul %56, %57, %cst_18 {dimension_numbers = #tpu.dot_dimension_numbers<[1], [0], [0], [1], [0, 0, 1, 1], [], []>} : vector<16x32xbf16>, vector<32x128xbf16>, vector<16x128xf32> -> vector<16x128xf32>
    %c0_19 = arith.constant 0 : index
    %c0_20 = arith.constant 0 : index
    %59 = vector.load %arg10[%c0_19, %c0_20] : memref<1x128xf32, #tpu.memory_space<vmem>>, vector<1x128xf32>
    %60 = vector.broadcast %59 : vector<1x128xf32> to vector<16x128xf32>
    %61 = arith.addf %58, %60 : vector<16x128xf32>
    %c0_21 = arith.constant 0 : index
    %c0_22 = arith.constant 0 : index
    %c0_23 = arith.constant 0 : index
    %62 = vector.load %arg27[%c0_21, %c0_22, %c0_23] : memref<1x16x128xf32, #tpu.memory_space<vmem>>, vector<1x16x128xf32>
    %63 = vector.shape_cast %62 : vector<1x16x128xf32> to vector<16x128xf32>
    %64 = vector.shape_cast %61 : vector<16x128xf32> to vector<1x16x128xf32>
    tpu.vector_store %arg27[%c0_21, %c0_22, %c0_23], %64 {strides = array<i32>} : memref<1x16x128xf32, #tpu.memory_space<vmem>>, vector<1x16x128xf32>,
    %c0_24 = arith.constant 0 : index
    %c0_25 = arith.constant 0 : index
    %c0_26 = arith.constant 0 : index
    %65 = vector.load %arg2[%c0_24, %c0_25, %c0_26] : memref<1x12x3xf32, #tpu.memory_space<vmem>>, vector<1x12x3xf32>
    %66 = vector.shape_cast %65 : vector<1x12x3xf32> to vector<12x3xf32>
    %67 = vector.extract_strided_slice %66 {offsets = [0, 0], sizes = [12, 1], strides = [1, 1]} : vector<12x3xf32> to vector<12x1xf32>
    %c0_27 = arith.constant 0 : index
    %c0_28 = arith.constant 0 : index
    %68 = vector.load %arg5[%c0_27, %c0_28] : memref<3x32xf32, #tpu.memory_space<vmem>>, vector<1x32xf32>
    %69 = vector.broadcast %67 : vector<12x1xf32> to vector<12x32xf32>
    %70 = vector.broadcast %68 : vector<1x32xf32> to vector<12x32xf32>
    %71 = arith.mulf %69, %70 : vector<12x32xf32>
    %72 = vector.extract_strided_slice %66 {offsets = [0, 1], sizes = [12, 1], strides = [1, 1]} : vector<12x3xf32> to vector<12x1xf32>
    %c1_29 = arith.constant 1 : index
    %c0_30 = arith.constant 0 : index
    %73 = vector.load %arg5[%c1_29, %c0_30] : memref<3x32xf32, #tpu.memory_space<vmem>>, vector<1x32xf32>
    %74 = vector.broadcast %72 : vector<12x1xf32> to vector<12x32xf32>
    %75 = vector.broadcast %73 : vector<1x32xf32> to vector<12x32xf32>
    %76 = arith.mulf %74, %75 : vector<12x32xf32>
    %77 = arith.addf %71, %76 : vector<12x32xf32>
    %78 = vector.extract_strided_slice %66 {offsets = [0, 2], sizes = [12, 1], strides = [1, 1]} : vector<12x3xf32> to vector<12x1xf32>
    %c2_31 = arith.constant 2 : index
    %c0_32 = arith.constant 0 : index
    %79 = vector.load %arg5[%c2_31, %c0_32] : memref<3x32xf32, #tpu.memory_space<vmem>>, vector<1x32xf32>
    %80 = vector.broadcast %78 : vector<12x1xf32> to vector<12x32xf32>
    %81 = vector.broadcast %79 : vector<1x32xf32> to vector<12x32xf32>
    %82 = arith.mulf %80, %81 : vector<12x32xf32>
    %83 = arith.addf %77, %82 : vector<12x32xf32>
    %c0_33 = arith.constant 0 : index
    %c0_34 = arith.constant 0 : index
    %84 = vector.load %arg6[%c0_33, %c0_34] : memref<1x32xf32, #tpu.memory_space<vmem>>, vector<1x32xf32>
    %85 = vector.broadcast %84 : vector<1x32xf32> to vector<12x32xf32>
    %86 = arith.addf %83, %85 : vector<12x32xf32>
    %87 = math.cos %86 : vector<12x32xf32>
    %88 = math.sin %86 : vector<12x32xf32>
    %89 = vector.extract_strided_slice %87 {offsets = [0, 0], sizes = [12, 8], strides = [1, 1]} : vector<12x32xf32> to vector<12x8xf32>
    %90 = vector.extract_strided_slice %87 {offsets = [0, 8], sizes = [12, 8], strides = [1, 1]} : vector<12x32xf32> to vector<12x8xf32>
    %91 = vector.extract_strided_slice %87 {offsets = [0, 16], sizes = [12, 8], strides = [1, 1]} : vector<12x32xf32> to vector<12x8xf32>
    %92 = vector.extract_strided_slice %87 {offsets = [0, 24], sizes = [12, 8], strides = [1, 1]} : vector<12x32xf32> to vector<12x8xf32>
    %93 = vector.shape_cast %89 : vector<12x8xf32> to vector<1x12x8xf32>
    %94 = vector.shape_cast %90 : vector<12x8xf32> to vector<1x12x8xf32>
    %95 = vector.shape_cast %91 : vector<12x8xf32> to vector<1x12x8xf32>
    %96 = vector.shape_cast %92 : vector<12x8xf32> to vector<1x12x8xf32>
    %97 = tpu.concatenate %93, %94, %95, %96 in 0 : vector<1x12x8xf32>, vector<1x12x8xf32>, vector<1x12x8xf32>, vector<1x12x8xf32> -> vector<4x12x8xf32>
    %98 = vector.extract_strided_slice %88 {offsets = [0, 0], sizes = [12, 8], strides = [1, 1]} : vector<12x32xf32> to vector<12x8xf32>
    %99 = vector.extract_strided_slice %88 {offsets = [0, 8], sizes = [12, 8], strides = [1, 1]} : vector<12x32xf32> to vector<12x8xf32>
    %100 = vector.extract_strided_slice %88 {offsets = [0, 16], sizes = [12, 8], strides = [1, 1]} : vector<12x32xf32> to vector<12x8xf32>
    %101 = vector.extract_strided_slice %88 {offsets = [0, 24], sizes = [12, 8], strides = [1, 1]} : vector<12x32xf32> to vector<12x8xf32>
    %102 = vector.shape_cast %98 : vector<12x8xf32> to vector<1x12x8xf32>
    %103 = vector.shape_cast %99 : vector<12x8xf32> to vector<1x12x8xf32>
    %104 = vector.shape_cast %100 : vector<12x8xf32> to vector<1x12x8xf32>
    %105 = vector.shape_cast %101 : vector<12x8xf32> to vector<1x12x8xf32>
    %106 = tpu.concatenate %102, %103, %104, %105 in 0 : vector<1x12x8xf32>, vector<1x12x8xf32>, vector<1x12x8xf32>, vector<1x12x8xf32> -> vector<4x12x8xf32>
    %107 = vector.extract_strided_slice %97 {offsets = [0, 0, 0], sizes = [4, 12, 4], strides = [1, 1, 1]} : vector<4x12x8xf32> to vector<4x12x4xf32>
    %108 = vector.extract_strided_slice %97 {offsets = [0, 0, 4], sizes = [4, 12, 4], strides = [1, 1, 1]} : vector<4x12x8xf32> to vector<4x12x4xf32>
    %109 = vector.extract_strided_slice %106 {offsets = [0, 0, 0], sizes = [4, 12, 4], strides = [1, 1, 1]} : vector<4x12x8xf32> to vector<4x12x4xf32>
    %110 = vector.extract_strided_slice %106 {offsets = [0, 0, 4], sizes = [4, 12, 4], strides = [1, 1, 1]} : vector<4x12x8xf32> to vector<4x12x4xf32>
    %c0_35 = arith.constant 0 : index
    %c0_36 = arith.constant 0 : index
    %c0_37 = arith.constant 0 : index
    %111 = vector.load %arg4[%c0_35, %c0_36, %c0_37] : memref<1x12x8xf32, #tpu.memory_space<vmem>>, vector<1x12x8xf32>
    %112 = vector.shape_cast %111 : vector<1x12x8xf32> to vector<12x8xf32>
    %113 = arith.truncf %112 : vector<12x8xf32> to vector<12x8xbf16>
    %c0_38 = arith.constant 0 : index
    %c0_39 = arith.constant 0 : index
    %114 = vector.load %arg7[%c0_38, %c0_39] : memref<8x32xbf16, #tpu.memory_space<vmem>>, vector<8x32xbf16>
    %cst_40 = arith.constant dense<0.000000e+00> : vector<12x32xf32>
    %115 = tpu.matmul %113, %114, %cst_40 {dimension_numbers = #tpu.dot_dimension_numbers<[1], [0], [0], [1], [0, 0, 1, 1], [], []>} : vector<12x8xbf16>, vector<8x32xbf16>, vector<12x32xf32> -> vector<12x32xf32>
    %c0_41 = arith.constant 0 : index
    %c0_42 = arith.constant 0 : index
    %116 = vector.load %arg8[%c0_41, %c0_42] : memref<1x32xf32, #tpu.memory_space<vmem>>, vector<1x32xf32>
    %117 = vector.broadcast %116 : vector<1x32xf32> to vector<12x32xf32>
    %118 = arith.addf %115, %117 : vector<12x32xf32>
    %c0_i32_43 = arith.constant 0 : i32
    %c2_i32_44 = arith.constant 2 : i32
    %119 = arith.addi %c0_i32_43, %c2_i32_44 : i32
    %c1_i32_45 = arith.constant 1 : i32
    %120 = scf.for %arg29 = %c0_i32_43 to %119 step %c1_i32_45 iter_args(%arg30 = %118) -> (vector<12x32xf32>)  : i32 {
      %130 = arith.truncf %arg30 : vector<12x32xf32> to vector<12x32xbf16>
      %131 = arith.index_cast %arg29 : i32 to index
      %c0_55 = arith.constant 0 : index
      %c0_56 = arith.constant 0 : index
      %132 = vector.load %arg11[%131, %c0_55, %c0_56] : memref<2x32x32xbf16, #tpu.memory_space<vmem>>, vector<1x32x32xbf16>
      %133 = vector.shape_cast %132 : vector<1x32x32xbf16> to vector<32x32xbf16>
      %cst_57 = arith.constant dense<0.000000e+00> : vector<12x32xf32>
      %134 = tpu.matmul %130, %133, %cst_57 {dimension_numbers = #tpu.dot_dimension_numbers<[1], [0], [0], [1], [0, 0, 1, 1], [], []>} : vector<12x32xbf16>, vector<32x32xbf16>, vector<12x32xf32> -> vector<12x32xf32>
      %135 = arith.index_cast %arg29 : i32 to index
      %c0_58 = arith.constant 0 : index
      %c0_59 = arith.constant 0 : index
      %136 = vector.load %arg12[%135, %c0_58, %c0_59] : memref<2x1x32xf32, #tpu.memory_space<vmem>>, vector<1x1x32xf32>
      %137 = vector.shape_cast %136 : vector<1x1x32xf32> to vector<1x32xf32>
      %138 = vector.broadcast %137 : vector<1x32xf32> to vector<12x32xf32>
      %139 = arith.addf %134, %138 : vector<12x32xf32>
      %140 = arith.index_cast %arg29 : i32 to index
      %c0_60 = arith.constant 0 : index
      %c0_61 = arith.constant 0 : index
      %141 = vector.load %arg13[%140, %c0_60, %c0_61] : memref<2x32x32xbf16, #tpu.memory_space<vmem>>, vector<1x32x32xbf16>
      %142 = vector.shape_cast %141 : vector<1x32x32xbf16> to vector<32x32xbf16>
      %cst_62 = arith.constant dense<0.000000e+00> : vector<12x32xf32>
      %143 = tpu.matmul %130, %142, %cst_62 {dimension_numbers = #tpu.dot_dimension_numbers<[1], [0], [0], [1], [0, 0, 1, 1], [], []>} : vector<12x32xbf16>, vector<32x32xbf16>, vector<12x32xf32> -> vector<12x32xf32>
      %144 = arith.index_cast %arg29 : i32 to index
      %c0_63 = arith.constant 0 : index
      %c0_64 = arith.constant 0 : index
      %145 = vector.load %arg14[%144, %c0_63, %c0_64] : memref<2x1x32xf32, #tpu.memory_space<vmem>>, vector<1x1x32xf32>
      %146 = vector.shape_cast %145 : vector<1x1x32xf32> to vector<1x32xf32>
      %147 = vector.broadcast %146 : vector<1x32xf32> to vector<12x32xf32>
      %148 = arith.addf %143, %147 : vector<12x32xf32>
      %149 = arith.index_cast %arg29 : i32 to index
      %c0_65 = arith.constant 0 : index
      %c0_66 = arith.constant 0 : index
      %150 = vector.load %arg15[%149, %c0_65, %c0_66] : memref<2x32x32xbf16, #tpu.memory_space<vmem>>, vector<1x32x32xbf16>
      %151 = vector.shape_cast %150 : vector<1x32x32xbf16> to vector<32x32xbf16>
      %cst_67 = arith.constant dense<0.000000e+00> : vector<12x32xf32>
      %152 = tpu.matmul %130, %151, %cst_67 {dimension_numbers = #tpu.dot_dimension_numbers<[1], [0], [0], [1], [0, 0, 1, 1], [], []>} : vector<12x32xbf16>, vector<32x32xbf16>, vector<12x32xf32> -> vector<12x32xf32>
      %153 = arith.index_cast %arg29 : i32 to index
      %c0_68 = arith.constant 0 : index
      %c0_69 = arith.constant 0 : index
      %154 = vector.load %arg16[%153, %c0_68, %c0_69] : memref<2x1x32xf32, #tpu.memory_space<vmem>>, vector<1x1x32xf32>
      %155 = vector.shape_cast %154 : vector<1x1x32xf32> to vector<1x32xf32>
      %156 = vector.broadcast %155 : vector<1x32xf32> to vector<12x32xf32>
      %157 = arith.addf %152, %156 : vector<12x32xf32>
      %158 = vector.extract_strided_slice %139 {offsets = [0, 0], sizes = [12, 8], strides = [1, 1]} : vector<12x32xf32> to vector<12x8xf32>
      %159 = vector.extract_strided_slice %139 {offsets = [0, 8], sizes = [12, 8], strides = [1, 1]} : vector<12x32xf32> to vector<12x8xf32>
      %160 = vector.extract_strided_slice %139 {offsets = [0, 16], sizes = [12, 8], strides = [1, 1]} : vector<12x32xf32> to vector<12x8xf32>
      %161 = vector.extract_strided_slice %139 {offsets = [0, 24], sizes = [12, 8], strides = [1, 1]} : vector<12x32xf32> to vector<12x8xf32>
      %162 = vector.shape_cast %158 : vector<12x8xf32> to vector<1x12x8xf32>
      %163 = vector.shape_cast %159 : vector<12x8xf32> to vector<1x12x8xf32>
      %164 = vector.shape_cast %160 : vector<12x8xf32> to vector<1x12x8xf32>
      %165 = vector.shape_cast %161 : vector<12x8xf32> to vector<1x12x8xf32>
      %166 = tpu.concatenate %162, %163, %164, %165 in 0 : vector<1x12x8xf32>, vector<1x12x8xf32>, vector<1x12x8xf32>, vector<1x12x8xf32> -> vector<4x12x8xf32>
      %167 = vector.extract_strided_slice %166 {offsets = [0, 0, 0], sizes = [4, 12, 4], strides = [1, 1, 1]} : vector<4x12x8xf32> to vector<4x12x4xf32>
      %168 = vector.extract_strided_slice %166 {offsets = [0, 0, 4], sizes = [4, 12, 4], strides = [1, 1, 1]} : vector<4x12x8xf32> to vector<4x12x4xf32>
      %169 = arith.mulf %167, %107 : vector<4x12x4xf32>
      %170 = arith.mulf %168, %109 : vector<4x12x4xf32>
      %171 = arith.subf %169, %170 : vector<4x12x4xf32>
      %172 = arith.mulf %168, %108 : vector<4x12x4xf32>
      %173 = arith.mulf %167, %110 : vector<4x12x4xf32>
      %174 = arith.addf %172, %173 : vector<4x12x4xf32>
      %175 = tpu.concatenate %171, %174 in 2 : vector<4x12x4xf32>, vector<4x12x4xf32> -> vector<4x12x8xf32>
      %176 = arith.truncf %175 : vector<4x12x8xf32> to vector<4x12x8xbf16>
      %177 = vector.extract_strided_slice %148 {offsets = [0, 0], sizes = [12, 8], strides = [1, 1]} : vector<12x32xf32> to vector<12x8xf32>
      %178 = vector.extract_strided_slice %148 {offsets = [0, 8], sizes = [12, 8], strides = [1, 1]} : vector<12x32xf32> to vector<12x8xf32>
      %179 = vector.extract_strided_slice %148 {offsets = [0, 16], sizes = [12, 8], strides = [1, 1]} : vector<12x32xf32> to vector<12x8xf32>
      %180 = vector.extract_strided_slice %148 {offsets = [0, 24], sizes = [12, 8], strides = [1, 1]} : vector<12x32xf32> to vector<12x8xf32>
      %181 = vector.shape_cast %177 : vector<12x8xf32> to vector<1x12x8xf32>
      %182 = vector.shape_cast %178 : vector<12x8xf32> to vector<1x12x8xf32>
      %183 = vector.shape_cast %179 : vector<12x8xf32> to vector<1x12x8xf32>
      %184 = vector.shape_cast %180 : vector<12x8xf32> to vector<1x12x8xf32>
      %185 = tpu.concatenate %181, %182, %183, %184 in 0 : vector<1x12x8xf32>, vector<1x12x8xf32>, vector<1x12x8xf32>, vector<1x12x8xf32> -> vector<4x12x8xf32>
      %186 = vector.extract_strided_slice %185 {offsets = [0, 0, 0], sizes = [4, 12, 4], strides = [1, 1, 1]} : vector<4x12x8xf32> to vector<4x12x4xf32>
      %187 = vector.extract_strided_slice %185 {offsets = [0, 0, 4], sizes = [4, 12, 4], strides = [1, 1, 1]} : vector<4x12x8xf32> to vector<4x12x4xf32>
      %188 = arith.mulf %186, %107 : vector<4x12x4xf32>
      %189 = arith.mulf %187, %109 : vector<4x12x4xf32>
      %190 = arith.subf %188, %189 : vector<4x12x4xf32>
      %191 = arith.mulf %187, %108 : vector<4x12x4xf32>
      %192 = arith.mulf %186, %110 : vector<4x12x4xf32>
      %193 = arith.addf %191, %192 : vector<4x12x4xf32>
      %194 = tpu.concatenate %190, %193 in 2 : vector<4x12x4xf32>, vector<4x12x4xf32> -> vector<4x12x8xf32>
      %195 = arith.truncf %194 : vector<4x12x8xf32> to vector<4x12x8xbf16>
      %196 = vector.extract_strided_slice %157 {offsets = [0, 0], sizes = [12, 8], strides = [1, 1]} : vector<12x32xf32> to vector<12x8xf32>
      %197 = vector.extract_strided_slice %157 {offsets = [0, 8], sizes = [12, 8], strides = [1, 1]} : vector<12x32xf32> to vector<12x8xf32>
      %198 = vector.extract_strided_slice %157 {offsets = [0, 16], sizes = [12, 8], strides = [1, 1]} : vector<12x32xf32> to vector<12x8xf32>
      %199 = vector.extract_strided_slice %157 {offsets = [0, 24], sizes = [12, 8], strides = [1, 1]} : vector<12x32xf32> to vector<12x8xf32>
      %200 = vector.shape_cast %196 : vector<12x8xf32> to vector<1x12x8xf32>
      %201 = vector.shape_cast %197 : vector<12x8xf32> to vector<1x12x8xf32>
      %202 = vector.shape_cast %198 : vector<12x8xf32> to vector<1x12x8xf32>
      %203 = vector.shape_cast %199 : vector<12x8xf32> to vector<1x12x8xf32>
      %204 = tpu.concatenate %200, %201, %202, %203 in 0 : vector<1x12x8xf32>, vector<1x12x8xf32>, vector<1x12x8xf32>, vector<1x12x8xf32> -> vector<4x12x8xf32>
      %205 = arith.truncf %204 : vector<4x12x8xf32> to vector<4x12x8xbf16>
      "tpu.trace_start"() <{level = 10 : i32, message = "hqd,hkd->hqk"}> : () -> ()
      %cst_70 = arith.constant dense<0.000000e+00> : vector<4x12x12xf32>
      %206 = tpu.matmul %176, %195, %cst_70 {dimension_numbers = #tpu.dot_dimension_numbers<[2], [2], [1], [1], [0, 0, 0, 1, 1, 1], [0], [0]>} : vector<4x12x8xbf16>, vector<4x12x8xbf16>, vector<4x12x12xf32> -> vector<4x12x12xf32>
      "tpu.trace_stop"() : () -> ()
      %cst_71 = arith.constant dense<0xFF800000> : vector<4x12xf32>
      %207 = vector.multi_reduction <maximumf>, %206, %cst_71 [2] : vector<4x12x12xf32> to vector<4x12xf32>
      %208 = vector.shape_cast %207 : vector<4x12xf32> to vector<4x12x1xf32>
      %209 = vector.broadcast %208 : vector<4x12x1xf32> to vector<4x12x12xf32>
      %210 = arith.subf %206, %209 : vector<4x12x12xf32>
      %211 = arith.truncf %210 : vector<4x12x12xf32> to vector<4x12x12xbf16>
      %212 = math.exp %211 : vector<4x12x12xbf16>
      %213 = arith.extf %212 : vector<4x12x12xbf16> to vector<4x12x12xf32>
      %cst_72 = arith.constant dense<0.000000e+00> : vector<4x12xf32>
      %214 = vector.multi_reduction <add>, %213, %cst_72 [2] : vector<4x12x12xf32> to vector<4x12xf32>
      %215 = vector.shape_cast %214 : vector<4x12xf32> to vector<4x12x1xf32>
      "tpu.trace_start"() <{level = 10 : i32, message = "hqk,hkd->hqd"}> : () -> ()
      %cst_73 = arith.constant dense<0.000000e+00> : vector<4x12x8xf32>
      %216 = tpu.matmul %212, %205, %cst_73 {dimension_numbers = #tpu.dot_dimension_numbers<[2], [1], [1], [2], [0, 0, 0, 1, 1, 2], [0], [0]>} : vector<4x12x12xbf16>, vector<4x12x8xbf16>, vector<4x12x8xf32> -> vector<4x12x8xf32>
      "tpu.trace_stop"() : () -> ()
      %217 = tpu.reciprocal %215 {approx = true} : vector<4x12x1xf32> -> vector<4x12x1xf32>
      %218 = vector.broadcast %217 : vector<4x12x1xf32> to vector<4x12x8xf32>
      %219 = arith.mulf %216, %218 : vector<4x12x8xf32>
      %220 = vector.extract_strided_slice %219 {offsets = [0, 0, 0], sizes = [1, 12, 8], strides = [1, 1, 1]} : vector<4x12x8xf32> to vector<1x12x8xf32>
      %221 = vector.shape_cast %220 : vector<1x12x8xf32> to vector<12x8xf32>
      %222 = vector.extract_strided_slice %219 {offsets = [1, 0, 0], sizes = [1, 12, 8], strides = [1, 1, 1]} : vector<4x12x8xf32> to vector<1x12x8xf32>
      %223 = vector.shape_cast %222 : vector<1x12x8xf32> to vector<12x8xf32>
      %224 = vector.extract_strided_slice %219 {offsets = [2, 0, 0], sizes = [1, 12, 8], strides = [1, 1, 1]} : vector<4x12x8xf32> to vector<1x12x8xf32>
      %225 = vector.shape_cast %224 : vector<1x12x8xf32> to vector<12x8xf32>
      %226 = vector.extract_strided_slice %219 {offsets = [3, 0, 0], sizes = [1, 12, 8], strides = [1, 1, 1]} : vector<4x12x8xf32> to vector<1x12x8xf32>
      %227 = vector.shape_cast %226 : vector<1x12x8xf32> to vector<12x8xf32>
      %228 = tpu.concatenate %221, %223, %225, %227 in 1 : vector<12x8xf32>, vector<12x8xf32>, vector<12x8xf32>, vector<12x8xf32> -> vector<12x32xf32>
      %229 = arith.truncf %228 : vector<12x32xf32> to vector<12x32xbf16>
      %230 = arith.index_cast %arg29 : i32 to index
      %c0_74 = arith.constant 0 : index
      %c0_75 = arith.constant 0 : index
      %231 = vector.load %arg17[%230, %c0_74, %c0_75] : memref<2x32x32xbf16, #tpu.memory_space<vmem>>, vector<1x32x32xbf16>
      %232 = vector.shape_cast %231 : vector<1x32x32xbf16> to vector<32x32xbf16>
      %cst_76 = arith.constant dense<0.000000e+00> : vector<12x32xf32>
      %233 = tpu.matmul %229, %232, %cst_76 {dimension_numbers = #tpu.dot_dimension_numbers<[1], [0], [0], [1], [0, 0, 1, 1], [], []>} : vector<12x32xbf16>, vector<32x32xbf16>, vector<12x32xf32> -> vector<12x32xf32>
      %234 = arith.index_cast %arg29 : i32 to index
      %c0_77 = arith.constant 0 : index
      %c0_78 = arith.constant 0 : index
      %235 = vector.load %arg18[%234, %c0_77, %c0_78] : memref<2x1x32xf32, #tpu.memory_space<vmem>>, vector<1x1x32xf32>
      %236 = vector.shape_cast %235 : vector<1x1x32xf32> to vector<1x32xf32>
      %237 = vector.broadcast %236 : vector<1x32xf32> to vector<12x32xf32>
      %238 = arith.addf %233, %237 : vector<12x32xf32>
      %239 = arith.addf %arg30, %238 : vector<12x32xf32>
      %cst_79 = arith.constant dense<0.000000e+00> : vector<12xf32>
      %240 = vector.multi_reduction <add>, %239, %cst_79 [1] : vector<12x32xf32> to vector<12xf32>
      %241 = vector.shape_cast %240 : vector<12xf32> to vector<12x1xf32>
      %cst_80 = arith.constant 3.200000e+01 : f32
      %242 = vector.broadcast %cst_80 : f32 to vector<12x1xf32>
      %243 = arith.divf %241, %242 : vector<12x1xf32>
      %244 = vector.broadcast %243 : vector<12x1xf32> to vector<12x32xf32>
      %245 = arith.subf %239, %244 : vector<12x32xf32>
      %246 = arith.mulf %245, %245 : vector<12x32xf32>
      %cst_81 = arith.constant dense<0.000000e+00> : vector<12xf32>
      %247 = vector.multi_reduction <add>, %246, %cst_81 [1] : vector<12x32xf32> to vector<12xf32>
      %248 = vector.shape_cast %247 : vector<12xf32> to vector<12x1xf32>
      %cst_82 = arith.constant 3.200000e+01 : f32
      %249 = vector.broadcast %cst_82 : f32 to vector<12x1xf32>
      %250 = arith.divf %248, %249 : vector<12x1xf32>
      %251 = vector.broadcast %243 : vector<12x1xf32> to vector<12x32xf32>
      %252 = arith.subf %239, %251 : vector<12x32xf32>
      %cst_83 = arith.constant 9.99999974E-6 : f32
      %253 = vector.broadcast %cst_83 : f32 to vector<12x1xf32>
      %254 = arith.addf %250, %253 : vector<12x1xf32>
      %255 = math.rsqrt %254 : vector<12x1xf32>
      %256 = vector.broadcast %255 : vector<12x1xf32> to vector<12x32xf32>
      %257 = arith.mulf %252, %256 : vector<12x32xf32>
      %258 = arith.index_cast %arg29 : i32 to index
      %c0_84 = arith.constant 0 : index
      %c0_85 = arith.constant 0 : index
      %259 = vector.load %arg19[%258, %c0_84, %c0_85] : memref<2x1x32xf32, #tpu.memory_space<vmem>>, vector<1x1x32xf32>
      %260 = vector.shape_cast %259 : vector<1x1x32xf32> to vector<1x32xf32>
      %261 = vector.broadcast %260 : vector<1x32xf32> to vector<12x32xf32>
      %262 = arith.mulf %257, %261 : vector<12x32xf32>
      %263 = arith.index_cast %arg29 : i32 to index
      %c0_86 = arith.constant 0 : index
      %c0_87 = arith.constant 0 : index
      %264 = vector.load %arg20[%263, %c0_86, %c0_87] : memref<2x1x32xf32, #tpu.memory_space<vmem>>, vector<1x1x32xf32>
      %265 = vector.shape_cast %264 : vector<1x1x32xf32> to vector<1x32xf32>
      %266 = vector.broadcast %265 : vector<1x32xf32> to vector<12x32xf32>
      %267 = arith.addf %262, %266 : vector<12x32xf32>
      %268 = arith.truncf %267 : vector<12x32xf32> to vector<12x32xbf16>
      %269 = arith.index_cast %arg29 : i32 to index
      %c0_88 = arith.constant 0 : index
      %c0_89 = arith.constant 0 : index
      %270 = vector.load %arg21[%269, %c0_88, %c0_89] : memref<2x32x64xbf16, #tpu.memory_space<vmem>>, vector<1x32x64xbf16>
      %271 = vector.shape_cast %270 : vector<1x32x64xbf16> to vector<32x64xbf16>
      %cst_90 = arith.constant dense<0.000000e+00> : vector<12x64xf32>
      %272 = tpu.matmul %268, %271, %cst_90 {dimension_numbers = #tpu.dot_dimension_numbers<[1], [0], [0], [1], [0, 0, 1, 1], [], []>} : vector<12x32xbf16>, vector<32x64xbf16>, vector<12x64xf32> -> vector<12x64xf32>
      %273 = arith.index_cast %arg29 : i32 to index
      %c0_91 = arith.constant 0 : index
      %c0_92 = arith.constant 0 : index
      %274 = vector.load %arg22[%273, %c0_91, %c0_92] : memref<2x1x64xf32, #tpu.memory_space<vmem>>, vector<1x1x64xf32>
      %275 = vector.shape_cast %274 : vector<1x1x64xf32> to vector<1x64xf32>
      %276 = vector.broadcast %275 : vector<1x64xf32> to vector<12x64xf32>
      %277 = arith.addf %272, %276 : vector<12x64xf32>
      %cst_93 = arith.constant 0.000000e+00 : f32
      %278 = vector.broadcast %cst_93 : f32 to vector<12x64xf32>
      %279 = arith.maximumf %277, %278 : vector<12x64xf32>
      %280 = arith.truncf %279 : vector<12x64xf32> to vector<12x64xbf16>
      %281 = arith.index_cast %arg29 : i32 to index
      %c0_94 = arith.constant 0 : index
      %c0_95 = arith.constant 0 : index
      %282 = vector.load %arg23[%281, %c0_94, %c0_95] : memref<2x64x32xbf16, #tpu.memory_space<vmem>>, vector<1x64x32xbf16>
      %283 = vector.shape_cast %282 : vector<1x64x32xbf16> to vector<64x32xbf16>
      %cst_96 = arith.constant dense<0.000000e+00> : vector<12x32xf32>
      %284 = tpu.matmul %280, %283, %cst_96 {dimension_numbers = #tpu.dot_dimension_numbers<[1], [0], [0], [1], [0, 0, 1, 1], [], []>} : vector<12x64xbf16>, vector<64x32xbf16>, vector<12x32xf32> -> vector<12x32xf32>
      %285 = arith.index_cast %arg29 : i32 to index
      %c0_97 = arith.constant 0 : index
      %c0_98 = arith.constant 0 : index
      %286 = vector.load %arg24[%285, %c0_97, %c0_98] : memref<2x1x32xf32, #tpu.memory_space<vmem>>, vector<1x1x32xf32>
      %287 = vector.shape_cast %286 : vector<1x1x32xf32> to vector<1x32xf32>
      %288 = vector.broadcast %287 : vector<1x32xf32> to vector<12x32xf32>
      %289 = arith.addf %284, %288 : vector<12x32xf32>
      %290 = arith.addf %267, %289 : vector<12x32xf32>
      %cst_99 = arith.constant dense<0.000000e+00> : vector<12xf32>
      %291 = vector.multi_reduction <add>, %290, %cst_99 [1] : vector<12x32xf32> to vector<12xf32>
      %292 = vector.shape_cast %291 : vector<12xf32> to vector<12x1xf32>
      %cst_100 = arith.constant 3.200000e+01 : f32
      %293 = vector.broadcast %cst_100 : f32 to vector<12x1xf32>
      %294 = arith.divf %292, %293 : vector<12x1xf32>
      %295 = vector.broadcast %294 : vector<12x1xf32> to vector<12x32xf32>
      %296 = arith.subf %290, %295 : vector<12x32xf32>
      %297 = arith.mulf %296, %296 : vector<12x32xf32>
      %cst_101 = arith.constant dense<0.000000e+00> : vector<12xf32>
      %298 = vector.multi_reduction <add>, %297, %cst_101 [1] : vector<12x32xf32> to vector<12xf32>
      %299 = vector.shape_cast %298 : vector<12xf32> to vector<12x1xf32>
      %cst_102 = arith.constant 3.200000e+01 : f32
      %300 = vector.broadcast %cst_102 : f32 to vector<12x1xf32>
      %301 = arith.divf %299, %300 : vector<12x1xf32>
      %302 = vector.broadcast %294 : vector<12x1xf32> to vector<12x32xf32>
      %303 = arith.subf %290, %302 : vector<12x32xf32>
      %cst_103 = arith.constant 9.99999974E-6 : f32
      %304 = vector.broadcast %cst_103 : f32 to vector<12x1xf32>
      %305 = arith.addf %301, %304 : vector<12x1xf32>
      %306 = math.rsqrt %305 : vector<12x1xf32>
      %307 = vector.broadcast %306 : vector<12x1xf32> to vector<12x32xf32>
      %308 = arith.mulf %303, %307 : vector<12x32xf32>
      %309 = arith.index_cast %arg29 : i32 to index
      %c0_104 = arith.constant 0 : index
      %c0_105 = arith.constant 0 : index
      %310 = vector.load %arg25[%309, %c0_104, %c0_105] : memref<2x1x32xf32, #tpu.memory_space<vmem>>, vector<1x1x32xf32>
      %311 = vector.shape_cast %310 : vector<1x1x32xf32> to vector<1x32xf32>
      %312 = vector.broadcast %311 : vector<1x32xf32> to vector<12x32xf32>
      %313 = arith.mulf %308, %312 : vector<12x32xf32>
      %314 = arith.index_cast %arg29 : i32 to index
      %c0_106 = arith.constant 0 : index
      %c0_107 = arith.constant 0 : index
      %315 = vector.load %arg26[%314, %c0_106, %c0_107] : memref<2x1x32xf32, #tpu.memory_space<vmem>>, vector<1x1x32xf32>
      %316 = vector.shape_cast %315 : vector<1x1x32xf32> to vector<1x32xf32>
      %317 = vector.broadcast %316 : vector<1x32xf32> to vector<12x32xf32>
      %318 = arith.addf %313, %317 : vector<12x32xf32>
      scf.yield %318 : vector<12x32xf32>
    }
    %c2_i32_46 = arith.constant 2 : i32
    %121 = arith.truncf %120 : vector<12x32xf32> to vector<12x32xbf16>
    %c0_47 = arith.constant 0 : index
    %c0_48 = arith.constant 0 : index
    %122 = vector.load %arg9[%c0_47, %c0_48] : memref<32x128xbf16, #tpu.memory_space<vmem>>, vector<32x128xbf16>
    %cst_49 = arith.constant dense<0.000000e+00> : vector<12x128xf32>
    %123 = tpu.matmul %121, %122, %cst_49 {dimension_numbers = #tpu.dot_dimension_numbers<[1], [0], [0], [1], [0, 0, 1, 1], [], []>} : vector<12x32xbf16>, vector<32x128xbf16>, vector<12x128xf32> -> vector<12x128xf32>
    %c0_50 = arith.constant 0 : index
    %c0_51 = arith.constant 0 : index
    %124 = vector.load %arg10[%c0_50, %c0_51] : memref<1x128xf32, #tpu.memory_space<vmem>>, vector<1x128xf32>
    %125 = vector.broadcast %124 : vector<1x128xf32> to vector<12x128xf32>
    %126 = arith.addf %123, %125 : vector<12x128xf32>
    %c0_52 = arith.constant 0 : index
    %c0_53 = arith.constant 0 : index
    %c0_54 = arith.constant 0 : index
    %127 = vector.load %arg28[%c0_52, %c0_53, %c0_54] : memref<1x12x128xf32, #tpu.memory_space<vmem>>, vector<1x12x128xf32>
    %128 = vector.shape_cast %127 : vector<1x12x128xf32> to vector<12x128xf32>
    %129 = vector.shape_cast %126 : vector<12x128xf32> to vector<1x12x128xf32>
    tpu.vector_store %arg28[%c0_52, %c0_53, %c0_54], %129 {strides = array<i32>} : memref<1x12x128xf32, #tpu.memory_space<vmem>>, vector<1x12x128xf32>,
    return
  }
  func.func @transform_0(%arg0: i32) -> (i32, i32, i32) {
    %c0_i32 = arith.constant 0 : i32
    %c0_i32_0 = arith.constant 0 : i32
    %c0_i32_1 = arith.constant 0 : i32
    return %arg0, %c0_i32, %c0_i32_0 : i32, i32, i32
  }
  func.func @transform_1(%arg0: i32) -> (i32, i32, i32) {
    %c0_i32 = arith.constant 0 : i32
    %c0_i32_0 = arith.constant 0 : i32
    %c0_i32_1 = arith.constant 0 : i32
    return %arg0, %c0_i32, %c0_i32_0 : i32, i32, i32
  }
  func.func @transform_2(%arg0: i32) -> (i32, i32, i32) {
    %c0_i32 = arith.constant 0 : i32
    %c0_i32_0 = arith.constant 0 : i32
    %c0_i32_1 = arith.constant 0 : i32
    return %arg0, %c0_i32, %c0_i32_0 : i32, i32, i32
  }
  func.func @transform_3(%arg0: i32) -> (i32, i32, i32) {
    %c0_i32 = arith.constant 0 : i32
    %c0_i32_0 = arith.constant 0 : i32
    %c0_i32_1 = arith.constant 0 : i32
    return %arg0, %c0_i32, %c0_i32_0 : i32, i32, i32
  }
  func.func @transform_4(%arg0: i32) -> (i32, i32) {
    %c0_i32 = arith.constant 0 : i32
    %c0_i32_0 = arith.constant 0 : i32
    %c0_i32_1 = arith.constant 0 : i32
    return %c0_i32, %c0_i32_0 : i32, i32
  }
  func.func @transform_5(%arg0: i32) -> (i32, i32) {
    %c0_i32 = arith.constant 0 : i32
    %c0_i32_0 = arith.constant 0 : i32
    %c0_i32_1 = arith.constant 0 : i32
    return %c0_i32, %c0_i32_0 : i32, i32
  }
  func.func @transform_6(%arg0: i32) -> (i32, i32) {
    %c0_i32 = arith.constant 0 : i32
    %c0_i32_0 = arith.constant 0 : i32
    %c0_i32_1 = arith.constant 0 : i32
    return %c0_i32, %c0_i32_0 : i32, i32
  }
  func.func @transform_7(%arg0: i32) -> (i32, i32) {
    %c0_i32 = arith.constant 0 : i32
    %c0_i32_0 = arith.constant 0 : i32
    %c0_i32_1 = arith.constant 0 : i32
    return %c0_i32, %c0_i32_0 : i32, i32
  }
  func.func @transform_8(%arg0: i32) -> (i32, i32) {
    %c0_i32 = arith.constant 0 : i32
    %c0_i32_0 = arith.constant 0 : i32
    %c0_i32_1 = arith.constant 0 : i32
    return %c0_i32, %c0_i32_0 : i32, i32
  }
  func.func @transform_9(%arg0: i32) -> (i32, i32) {
    %c0_i32 = arith.constant 0 : i32
    %c0_i32_0 = arith.constant 0 : i32
    %c0_i32_1 = arith.constant 0 : i32
    return %c0_i32, %c0_i32_0 : i32, i32
  }
  func.func @transform_10(%arg0: i32) -> (i32, i32, i32) {
    %c0_i32 = arith.constant 0 : i32
    %c0_i32_0 = arith.constant 0 : i32
    %c0_i32_1 = arith.constant 0 : i32
    %c0_i32_2 = arith.constant 0 : i32
    return %c0_i32, %c0_i32_0, %c0_i32_1 : i32, i32, i32
  }
  func.func @transform_11(%arg0: i32) -> (i32, i32, i32) {
    %c0_i32 = arith.constant 0 : i32
    %c0_i32_0 = arith.constant 0 : i32
    %c0_i32_1 = arith.constant 0 : i32
    %c0_i32_2 = arith.constant 0 : i32
    return %c0_i32, %c0_i32_0, %c0_i32_1 : i32, i32, i32
  }
  func.func @transform_12(%arg0: i32) -> (i32, i32, i32) {
    %c0_i32 = arith.constant 0 : i32
    %c0_i32_0 = arith.constant 0 : i32
    %c0_i32_1 = arith.constant 0 : i32
    %c0_i32_2 = arith.constant 0 : i32
    return %c0_i32, %c0_i32_0, %c0_i32_1 : i32, i32, i32
  }
  func.func @transform_13(%arg0: i32) -> (i32, i32, i32) {
    %c0_i32 = arith.constant 0 : i32
    %c0_i32_0 = arith.constant 0 : i32
    %c0_i32_1 = arith.constant 0 : i32
    %c0_i32_2 = arith.constant 0 : i32
    return %c0_i32, %c0_i32_0, %c0_i32_1 : i32, i32, i32
  }
  func.func @transform_14(%arg0: i32) -> (i32, i32, i32) {
    %c0_i32 = arith.constant 0 : i32
    %c0_i32_0 = arith.constant 0 : i32
    %c0_i32_1 = arith.constant 0 : i32
    %c0_i32_2 = arith.constant 0 : i32
    return %c0_i32, %c0_i32_0, %c0_i32_1 : i32, i32, i32
  }
  func.func @transform_15(%arg0: i32) -> (i32, i32, i32) {
    %c0_i32 = arith.constant 0 : i32
    %c0_i32_0 = arith.constant 0 : i32
    %c0_i32_1 = arith.constant 0 : i32
    %c0_i32_2 = arith.constant 0 : i32
    return %c0_i32, %c0_i32_0, %c0_i32_1 : i32, i32, i32
  }
  func.func @transform_16(%arg0: i32) -> (i32, i32, i32) {
    %c0_i32 = arith.constant 0 : i32
    %c0_i32_0 = arith.constant 0 : i32
    %c0_i32_1 = arith.constant 0 : i32
    %c0_i32_2 = arith.constant 0 : i32
    return %c0_i32, %c0_i32_0, %c0_i32_1 : i32, i32, i32
  }
  func.func @transform_17(%arg0: i32) -> (i32, i32, i32) {
    %c0_i32 = arith.constant 0 : i32
    %c0_i32_0 = arith.constant 0 : i32
    %c0_i32_1 = arith.constant 0 : i32
    %c0_i32_2 = arith.constant 0 : i32
    return %c0_i32, %c0_i32_0, %c0_i32_1 : i32, i32, i32
  }
  func.func @transform_18(%arg0: i32) -> (i32, i32, i32) {
    %c0_i32 = arith.constant 0 : i32
    %c0_i32_0 = arith.constant 0 : i32
    %c0_i32_1 = arith.constant 0 : i32
    %c0_i32_2 = arith.constant 0 : i32
    return %c0_i32, %c0_i32_0, %c0_i32_1 : i32, i32, i32
  }
  func.func @transform_19(%arg0: i32) -> (i32, i32, i32) {
    %c0_i32 = arith.constant 0 : i32
    %c0_i32_0 = arith.constant 0 : i32
    %c0_i32_1 = arith.constant 0 : i32
    %c0_i32_2 = arith.constant 0 : i32
    return %c0_i32, %c0_i32_0, %c0_i32_1 : i32, i32, i32
  }
  func.func @transform_20(%arg0: i32) -> (i32, i32, i32) {
    %c0_i32 = arith.constant 0 : i32
    %c0_i32_0 = arith.constant 0 : i32
    %c0_i32_1 = arith.constant 0 : i32
    %c0_i32_2 = arith.constant 0 : i32
    return %c0_i32, %c0_i32_0, %c0_i32_1 : i32, i32, i32
  }
  func.func @transform_21(%arg0: i32) -> (i32, i32, i32) {
    %c0_i32 = arith.constant 0 : i32
    %c0_i32_0 = arith.constant 0 : i32
    %c0_i32_1 = arith.constant 0 : i32
    %c0_i32_2 = arith.constant 0 : i32
    return %c0_i32, %c0_i32_0, %c0_i32_1 : i32, i32, i32
  }
  func.func @transform_22(%arg0: i32) -> (i32, i32, i32) {
    %c0_i32 = arith.constant 0 : i32
    %c0_i32_0 = arith.constant 0 : i32
    %c0_i32_1 = arith.constant 0 : i32
    %c0_i32_2 = arith.constant 0 : i32
    return %c0_i32, %c0_i32_0, %c0_i32_1 : i32, i32, i32
  }
  func.func @transform_23(%arg0: i32) -> (i32, i32, i32) {
    %c0_i32 = arith.constant 0 : i32
    %c0_i32_0 = arith.constant 0 : i32
    %c0_i32_1 = arith.constant 0 : i32
    %c0_i32_2 = arith.constant 0 : i32
    return %c0_i32, %c0_i32_0, %c0_i32_1 : i32, i32, i32
  }
  func.func @transform_24(%arg0: i32) -> (i32, i32, i32) {
    %c0_i32 = arith.constant 0 : i32
    %c0_i32_0 = arith.constant 0 : i32
    %c0_i32_1 = arith.constant 0 : i32
    %c0_i32_2 = arith.constant 0 : i32
    return %c0_i32, %c0_i32_0, %c0_i32_1 : i32, i32, i32
  }
  func.func @transform_25(%arg0: i32) -> (i32, i32, i32) {
    %c0_i32 = arith.constant 0 : i32
    %c0_i32_0 = arith.constant 0 : i32
    %c0_i32_1 = arith.constant 0 : i32
    %c0_i32_2 = arith.constant 0 : i32
    return %c0_i32, %c0_i32_0, %c0_i32_1 : i32, i32, i32
  }
  func.func @transform_26(%arg0: i32) -> (i32, i32, i32) {
    %c0_i32 = arith.constant 0 : i32
    %c0_i32_0 = arith.constant 0 : i32
    %c0_i32_1 = arith.constant 0 : i32
    return %arg0, %c0_i32, %c0_i32_0 : i32, i32, i32
  }
  func.func @transform_27(%arg0: i32) -> (i32, i32, i32) {
    %c0_i32 = arith.constant 0 : i32
    %c0_i32_0 = arith.constant 0 : i32
    %c0_i32_1 = arith.constant 0 : i32
    return %arg0, %c0_i32, %c0_i32_0 : i32, i32, i32
  }
}

</mosaic_0001>

<llo_original>
// kernel: thdroformer_self.1
$region0: #{thdroformer_self.1}
  #allocation0 [shape = 'u32[]', space=smem, size = 0x4, offset = 0x4, fixed_abs, tag = 'smem constant byte address 0x4 - core index']
  #allocation1 [shape = 'u32[144,128]{1,0:T(1,128)}', space=vmem, size = 0x12000, scoped, tag = 'internal scratch']
  %s0 = inlined_call_operand.vmem [shape: f32[2,16,3], index: 0, kind: input, shape index: {}]
  %s1 = inlined_call_operand.vmem [shape: f32[2,12,3], index: 1, kind: input, shape index: {}]
  %s2 = inlined_call_operand.vmem [shape: f32[2,16,8], index: 2, kind: input, shape index: {}]
  %s3 = inlined_call_operand.vmem [shape: f32[2,12,8], index: 3, kind: input, shape index: {}]
  %s4 = inlined_call_operand.vmem [shape: f32[3,32], index: 4, kind: input, shape index: {}]
  %s5 = inlined_call_operand.vmem [shape: f32[1,32], index: 5, kind: input, shape index: {}]
  %s6 = inlined_call_operand.vmem [shape: bf16[8,32], index: 6, kind: input, shape index: {}]
  %s7 = inlined_call_operand.vmem [shape: f32[1,32], index: 7, kind: input, shape index: {}]
  %s8 = inlined_call_operand.vmem [shape: bf16[32,128], index: 8, kind: input, shape index: {}]
  %s9 = inlined_call_operand.vmem [shape: f32[1,128], index: 9, kind: input, shape index: {}]
  %s10 = inlined_call_operand.vmem [shape: bf16[2,32,32], index: 10, kind: input, shape index: {}]
  %s11 = inlined_call_operand.vmem [shape: f32[2,1,32], index: 11, kind: input, shape index: {}]
  %s12 = inlined_call_operand.vmem [shape: bf16[2,32,32], index: 12, kind: input, shape index: {}]
  %s13 = inlined_call_operand.vmem [shape: f32[2,1,32], index: 13, kind: input, shape index: {}]
  %s14 = inlined_call_operand.vmem [shape: bf16[2,32,32], index: 14, kind: input, shape index: {}]
  %s15 = inlined_call_operand.vmem [shape: f32[2,1,32], index: 15, kind: input, shape index: {}]
  %s16 = inlined_call_operand.vmem [shape: bf16[2,32,32], index: 16, kind: input, shape index: {}]
  %s17 = inlined_call_operand.vmem [shape: f32[2,1,32], index: 17, kind: input, shape index: {}]
  %s18 = inlined_call_operand.vmem [shape: f32[2,1,32], index: 18, kind: input, shape index: {}]
  %s19 = inlined_call_operand.vmem [shape: f32[2,1,32], index: 19, kind: input, shape index: {}]
  %s20 = inlined_call_operand.vmem [shape: bf16[2,32,64], index: 20, kind: input, shape index: {}]
  %s21 = inlined_call_operand.vmem [shape: f32[2,1,64], index: 21, kind: input, shape index: {}]
  %s22 = inlined_call_operand.vmem [shape: bf16[2,64,32], index: 22, kind: input, shape index: {}]
  %s23 = inlined_call_operand.vmem [shape: f32[2,1,32], index: 23, kind: input, shape index: {}]
  %s24 = inlined_call_operand.vmem [shape: f32[2,1,32], index: 24, kind: input, shape index: {}]
  %s25 = inlined_call_operand.vmem [shape: f32[2,1,32], index: 25, kind: input, shape index: {}]
  %s26 = inlined_call_operand.vmem [shape: f32[2,16,128], index: 26, kind: output, shape index: {0}]
  %s27 = inlined_call_operand.vmem [shape: f32[2,12,128], index: 27, kind: output, shape index: {1}]
  %28 = xla_tuple %s26, %s27
  %s29 = sld [smem:[#allocation0]]
  $region159: #{thdroformer_self.1} parent=0
    _
  %s31 = ssub.s32 1, %s29
  %s32 = scalar_select 0, %s31, %s29
  loop: start=0, step=1, limit=4
  $region2: #{thdroformer_self.1} parent=0 // loop_pre_header
    _
  $region3: #{thdroformer_self.1} parent=0 // loop_header
    %s34 = sphi 0, %s38
    %p35 = scmp.ge.s32.totalorder %s34, 4
    %s44 = sphi 0, %s46
    %s47 = sphi 0, %s44
    %s48 = sphi 0, %s47
    %s64 = sphi 0, %s48
    %s70 = sphi 0, %s72
    %s73 = sphi 0, %s70
    %s74 = sphi 0, %s73
    %s90 = sphi 0, %s74
    %s96 = sphi 0, %s98
    %s99 = sphi 0, %s96
    %s100 = sphi 0, %s99
    %s116 = sphi 0, %s100
    %s122 = sphi 0, %s124
    %s125 = sphi 0, %s122
    %s126 = sphi 0, %s125
    %s142 = sphi 0, %s126
    %s146 = sphi 0, %s146
    %s148 = sphi 0, %s146
    %s149 = sphi 0, %s148
    %s163 = sphi 0, %s149
    %s167 = sphi 0, %s167
    %s169 = sphi 0, %s167
    %s170 = sphi 0, %s169
    %s184 = sphi 0, %s170
    %s188 = sphi 0, %s188
    %s190 = sphi 0, %s188
    %s191 = sphi 0, %s190
    %s205 = sphi 0, %s191
    %s209 = sphi 0, %s209
    %s211 = sphi 0, %s209
    %s212 = sphi 0, %s211
    %s226 = sphi 0, %s212
    %s230 = sphi 0, %s230
    %s232 = sphi 0, %s230
    %s233 = sphi 0, %s232
    %s247 = sphi 0, %s233
    %s251 = sphi 0, %s251
    %s253 = sphi 0, %s251
    %s254 = sphi 0, %s253
    %s268 = sphi 0, %s254
    %s272 = sphi 0, %s272
    %s274 = sphi 0, %s272
    %s275 = sphi 0, %s274
    %s289 = sphi 0, %s275
    %s293 = sphi 0, %s293
    %s295 = sphi 0, %s293
    %s296 = sphi 0, %s295
    %s310 = sphi 0, %s296
    %s314 = sphi 0, %s314
    %s316 = sphi 0, %s314
    %s317 = sphi 0, %s316
    %s331 = sphi 0, %s317
    %s335 = sphi 0, %s335
    %s337 = sphi 0, %s335
    %s338 = sphi 0, %s337
    %s352 = sphi 0, %s338
    %s356 = sphi 0, %s356
    %s358 = sphi 0, %s356
    %s359 = sphi 0, %s358
    %s373 = sphi 0, %s359
    %s377 = sphi 0, %s377
    %s379 = sphi 0, %s377
    %s380 = sphi 0, %s379
    %s394 = sphi 0, %s380
    %s398 = sphi 0, %s398
    %s400 = sphi 0, %s398
    %s401 = sphi 0, %s400
    %s415 = sphi 0, %s401
    %s419 = sphi 0, %s419
    %s421 = sphi 0, %s419
    %s422 = sphi 0, %s421
    %s436 = sphi 0, %s422
    %s440 = sphi 0, %s440
    %s442 = sphi 0, %s440
    %s443 = sphi 0, %s442
    %s457 = sphi 0, %s443
    %s461 = sphi 0, %s461
    %s463 = sphi 0, %s461
    %s464 = sphi 0, %s463
    %s478 = sphi 0, %s464
    %s482 = sphi 0, %s482
    %s484 = sphi 0, %s482
    %s485 = sphi 0, %s484
    %s499 = sphi 0, %s485
    %s503 = sphi 0, %s503
    %s505 = sphi 0, %s503
    %s506 = sphi 0, %s505
    %s520 = sphi 0, %s506
    %s524 = sphi 0, %s524
    %s526 = sphi 0, %s524
    %s527 = sphi 0, %s526
    %s541 = sphi 0, %s527
    %s545 = sphi 0, %s545
    %s547 = sphi 0, %s545
    %s548 = sphi 0, %s547
    %s562 = sphi 0, %s548
    %s566 = sphi 0, %s566
    %s568 = sphi 0, %s566
    %s569 = sphi 0, %s568
    %s583 = sphi 0, %s569
    %s587 = sphi 0, %s587
    %s589 = sphi 0, %s587
    %s590 = sphi 0, %s589
    %s604 = sphi 0, %s590
    %s610 = sphi 0, %s612
    %s613 = sphi 0, %s610
    %s614 = sphi 0, %s613
    %s630 = sphi 0, %s614
    %s636 = sphi 0, %s638
    %s639 = sphi 0, %s636
    %s640 = sphi 0, %s639
    %s656 = sphi 0, %s640
  $region4: #{thdroformer_self.1} parent=0 // loop_header_branch
    %37 = sbr.rel (%p35) target = $region8
  $region5: #{thdroformer_self.1} parent=0 // loop_body
    %s39 = ssub.s32 %s34, 1
    %s40 = ssub.s32 %s34, 2
    %s41 = sadd.s32 %s34, 1
    %s42 = ssub.s32 %s34, %s41
    %p43 = scmp.eq.s32.totalorder %s42, 0
    %s45 = sadd.s32 %s44, 1
    %s46 = scalar_select %p43, %s44, %s45
    %p49 = pneg %p43
    %p50 = scmp.eq.s32.totalorder %s34, 1
    %p51 = por %p49, %p50
    %p52 = scmp.ne.s32.totalorder %s44, %s47
    %p53 = scmp.eq.s32.totalorder %s34, 0
    %p54 = por %p52, %p53
    %p55 = scmp.ne.s32.totalorder %s44, %s47
    %p56 = scmp.eq.s32.totalorder %s39, 1
    %p57 = por %p55, %p56
    %p58 = scmp.ne.s32.totalorder %s47, %s48
    %p59 = scmp.eq.s32.totalorder %s39, 0
    %p60 = por %p58, %p59
    %p61 = scmp.ne.s32.totalorder %s47, %s48
    %p62 = scmp.eq.s32.totalorder %s40, 1
    %p63 = por %p61, %p62
    %p65 = scmp.ne.s32.totalorder %s48, %s64
    %p66 = scmp.eq.s32.totalorder %s40, 0
    %p67 = por %p65, %p66
    %s68 = ssub.s32 %s34, %s41
    %p69 = scmp.eq.s32.totalorder %s68, 0
    %s71 = sadd.s32 %s70, 1
    %s72 = scalar_select %p69, %s70, %s71
    %p75 = pneg %p69
    %p76 = scmp.eq.s32.totalorder %s34, 1
    %p77 = por %p75, %p76
    %p78 = scmp.ne.s32.totalorder %s70, %s73
    %p79 = scmp.eq.s32.totalorder %s34, 0
    %p80 = por %p78, %p79
    %p81 = scmp.ne.s32.totalorder %s70, %s73
    %p82 = scmp.eq.s32.totalorder %s39, 1
    %p83 = por %p81, %p82
    %p84 = scmp.ne.s32.totalorder %s73, %s74
    %p85 = scmp.eq.s32.totalorder %s39, 0
    %p86 = por %p84, %p85
    %p87 = scmp.ne.s32.totalorder %s73, %s74
    %p88 = scmp.eq.s32.totalorder %s40, 1
    %p89 = por %p87, %p88
    %p91 = scmp.ne.s32.totalorder %s74, %s90
    %p92 = scmp.eq.s32.totalorder %s40, 0
    %p93 = por %p91, %p92
    %s94 = ssub.s32 %s34, %s41
    %p95 = scmp.eq.s32.totalorder %s94, 0
    %s97 = sadd.s32 %s96, 1
    %s98 = scalar_select %p95, %s96, %s97
    %p101 = pneg %p95
    %p102 = scmp.eq.s32.totalorder %s34, 1
    %p103 = por %p101, %p102
    %p104 = scmp.ne.s32.totalorder %s96, %s99
    %p105 = scmp.eq.s32.totalorder %s34, 0
    %p106 = por %p104, %p105
    %p107 = scmp.ne.s32.totalorder %s96, %s99
    %p108 = scmp.eq.s32.totalorder %s39, 1
    %p109 = por %p107, %p108
    %p110 = scmp.ne.s32.totalorder %s99, %s100
    %p111 = scmp.eq.s32.totalorder %s39, 0
    %p112 = por %p110, %p111
    %p113 = scmp.ne.s32.totalorder %s99, %s100
    %p114 = scmp.eq.s32.totalorder %s40, 1
    %p115 = por %p113, %p114
    %p117 = scmp.ne.s32.totalorder %s100, %s116
    %p118 = scmp.eq.s32.totalorder %s40, 0
    %p119 = por %p117, %p118
    %s120 = ssub.s32 %s34, %s41
    %p121 = scmp.eq.s32.totalorder %s120, 0
    %s123 = sadd.s32 %s122, 1
    %s124 = scalar_select %p121, %s122, %s123
    %p127 = pneg %p121
    %p128 = scmp.eq.s32.totalorder %s34, 1
    %p129 = por %p127, %p128
    %p130 = scmp.ne.s32.totalorder %s122, %s125
    %p131 = scmp.eq.s32.totalorder %s34, 0
    %p132 = por %p130, %p131
    %p133 = scmp.ne.s32.totalorder %s122, %s125
    %p134 = scmp.eq.s32.totalorder %s39, 1
    %p135 = por %p133, %p134
    %p136 = scmp.ne.s32.totalorder %s125, %s126
    %p137 = scmp.eq.s32.totalorder %s39, 0
    %p138 = por %p136, %p137
    %p139 = scmp.ne.s32.totalorder %s125, %s126
    %p140 = scmp.eq.s32.totalorder %s40, 1
    %p141 = por %p139, %p140
    %p143 = scmp.ne.s32.totalorder %s126, %s142
    %p144 = scmp.eq.s32.totalorder %s40, 0
    %p145 = por %p143, %p144
    %s147 = sadd.s32 %s146, 1
    %p150 = scmp.eq.s32.totalorder %s34, 1
    %p151 = scmp.ne.s32.totalorder %s146, %s148
    %p152 = scmp.eq.s32.totalorder %s34, 0
    %p153 = por %p151, %p152
    %p154 = scmp.ne.s32.totalorder %s146, %s148
    %p155 = scmp.eq.s32.totalorder %s39, 1
    %p156 = por %p154, %p155
    %p157 = scmp.ne.s32.totalorder %s148, %s149
    %p158 = scmp.eq.s32.totalorder %s39, 0
    %p159 = por %p157, %p158
    %p160 = scmp.ne.s32.totalorder %s148, %s149
    %p161 = scmp.eq.s32.totalorder %s40, 1
    %p162 = por %p160, %p161
    %p164 = scmp.ne.s32.totalorder %s149, %s163
    %p165 = scmp.eq.s32.totalorder %s40, 0
    %p166 = por %p164, %p165
    %s168 = sadd.s32 %s167, 1
    %p171 = scmp.eq.s32.totalorder %s34, 1
    %p172 = scmp.ne.s32.totalorder %s167, %s169
    %p173 = scmp.eq.s32.totalorder %s34, 0
    %p174 = por %p172, %p173
    %p175 = scmp.ne.s32.totalorder %s167, %s169
    %p176 = scmp.eq.s32.totalorder %s39, 1
    %p177 = por %p175, %p176
    %p178 = scmp.ne.s32.totalorder %s169, %s170
    %p179 = scmp.eq.s32.totalorder %s39, 0
    %p180 = por %p178, %p179
    %p181 = scmp.ne.s32.totalorder %s169, %s170
    %p182 = scmp.eq.s32.totalorder %s40, 1
    %p183 = por %p181, %p182
    %p185 = scmp.ne.s32.totalorder %s170, %s184
    %p186 = scmp.eq.s32.totalorder %s40, 0
    %p187 = por %p185, %p186
    %s189 = sadd.s32 %s188, 1
    %p192 = scmp.eq.s32.totalorder %s34, 1
    %p193 = scmp.ne.s32.totalorder %s188, %s190
    %p194 = scmp.eq.s32.totalorder %s34, 0
    %p195 = por %p193, %p194
    %p196 = scmp.ne.s32.totalorder %s188, %s190
    %p197 = scmp.eq.s32.totalorder %s39, 1
    %p198 = por %p196, %p197
    %p199 = scmp.ne.s32.totalorder %s190, %s191
    %p200 = scmp.eq.s32.totalorder %s39, 0
    %p201 = por %p199, %p200
    %p202 = scmp.ne.s32.totalorder %s190, %s191
    %p203 = scmp.eq.s32.totalorder %s40, 1
    %p204 = por %p202, %p203
    %p206 = scmp.ne.s32.totalorder %s191, %s205
    %p207 = scmp.eq.s32.totalorder %s40, 0
    %p208 = por %p206, %p207
    %s210 = sadd.s32 %s209, 1
    %p213 = scmp.eq.s32.totalorder %s34, 1
    %p214 = scmp.ne.s32.totalorder %s209, %s211
    %p215 = scmp.eq.s32.totalorder %s34, 0
    %p216 = por %p214, %p215
    %p217 = scmp.ne.s32.totalorder %s209, %s211
    %p218 = scmp.eq.s32.totalorder %s39, 1
    %p219 = por %p217, %p218
    %p220 = scmp.ne.s32.totalorder %s211, %s212
    %p221 = scmp.eq.s32.totalorder %s39, 0
    %p222 = por %p220, %p221
    %p223 = scmp.ne.s32.totalorder %s211, %s212
    %p224 = scmp.eq.s32.totalorder %s40, 1
    %p225 = por %p223, %p224
    %p227 = scmp.ne.s32.totalorder %s212, %s226
    %p228 = scmp.eq.s32.totalorder %s40, 0
    %p229 = por %p227, %p228
    %s231 = sadd.s32 %s230, 1
    %p234 = scmp.eq.s32.totalorder %s34, 1
    %p235 = scmp.ne.s32.totalorder %s230, %s232
    %p236 = scmp.eq.s32.totalorder %s34, 0
    %p237 = por %p235, %p236
    %p238 = scmp.ne.s32.totalorder %s230, %s232
    %p239 = scmp.eq.s32.totalorder %s39, 1
    %p240 = por %p238, %p239
    %p241 = scmp.ne.s32.totalorder %s232, %s233
    %p242 = scmp.eq.s32.totalorder %s39, 0
    %p243 = por %p241, %p242
    %p244 = scmp.ne.s32.totalorder %s232, %s233
    %p245 = scmp.eq.s32.totalorder %s40, 1
    %p246 = por %p244, %p245
    %p248 = scmp.ne.s32.totalorder %s233, %s247
    %p249 = scmp.eq.s32.totalorder %s40, 0
    %p250 = por %p248, %p249
    %s252 = sadd.s32 %s251, 1
    %p255 = scmp.eq.s32.totalorder %s34, 1
    %p256 = scmp.ne.s32.totalorder %s251, %s253
    %p257 = scmp.eq.s32.totalorder %s34, 0
    %p258 = por %p256, %p257
    %p259 = scmp.ne.s32.totalorder %s251, %s253
    %p260 = scmp.eq.s32.totalorder %s39, 1
    %p261 = por %p259, %p260
    %p262 = scmp.ne.s32.totalorder %s253, %s254
    %p263 = scmp.eq.s32.totalorder %s39, 0
    %p264 = por %p262, %p263
    %p265 = scmp.ne.s32.totalorder %s253, %s254
    %p266 = scmp.eq.s32.totalorder %s40, 1
    %p267 = por %p265, %p266
    %p269 = scmp.ne.s32.totalorder %s254, %s268
    %p270 = scmp.eq.s32.totalorder %s40, 0
    %p271 = por %p269, %p270
    %s273 = sadd.s32 %s272, 1
    %p276 = scmp.eq.s32.totalorder %s34, 1
    %p277 = scmp.ne.s32.totalorder %s272, %s274
    %p278 = scmp.eq.s32.totalorder %s34, 0
    %p279 = por %p277, %p278
    %p280 = scmp.ne.s32.totalorder %s272, %s274
    %p281 = scmp.eq.s32.totalorder %s39, 1
    %p282 = por %p280, %p281
    %p283 = scmp.ne.s32.totalorder %s274, %s275
    %p284 = scmp.eq.s32.totalorder %s39, 0
    %p285 = por %p283, %p284
    %p286 = scmp.ne.s32.totalorder %s274, %s275
    %p287 = scmp.eq.s32.totalorder %s40, 1
    %p288 = por %p286, %p287
    %p290 = scmp.ne.s32.totalorder %s275, %s289
    %p291 = scmp.eq.s32.totalorder %s40, 0
    %p292 = por %p290, %p291
    %s294 = sadd.s32 %s293, 1
    %p297 = scmp.eq.s32.totalorder %s34, 1
    %p298 = scmp.ne.s32.totalorder %s293, %s295
    %p299 = scmp.eq.s32.totalorder %s34, 0
    %p300 = por %p298, %p299
    %p301 = scmp.ne.s32.totalorder %s293, %s295
    %p302 = scmp.eq.s32.totalorder %s39, 1
    %p303 = por %p301, %p302
    %p304 = scmp.ne.s32.totalorder %s295, %s296
    %p305 = scmp.eq.s32.totalorder %s39, 0
    %p306 = por %p304, %p305
    %p307 = scmp.ne.s32.totalorder %s295, %s296
    %p308 = scmp.eq.s32.totalorder %s40, 1
    %p309 = por %p307, %p308
    %p311 = scmp.ne.s32.totalorder %s296, %s310
    %p312 = scmp.eq.s32.totalorder %s40, 0
    %p313 = por %p311, %p312
    %s315 = sadd.s32 %s314, 1
    %p318 = scmp.eq.s32.totalorder %s34, 1
    %p319 = scmp.ne.s32.totalorder %s314, %s316
    %p320 = scmp.eq.s32.totalorder %s34, 0
    %p321 = por %p319, %p320
    %p322 = scmp.ne.s32.totalorder %s314, %s316
    %p323 = scmp.eq.s32.totalorder %s39, 1
    %p324 = por %p322, %p323
    %p325 = scmp.ne.s32.totalorder %s316, %s317
    %p326 = scmp.eq.s32.totalorder %s39, 0
    %p327 = por %p325, %p326
    %p328 = scmp.ne.s32.totalorder %s316, %s317
    %p329 = scmp.eq.s32.totalorder %s40, 1
    %p330 = por %p328, %p329
    %p332 = scmp.ne.s32.totalorder %s317, %s331
    %p333 = scmp.eq.s32.totalorder %s40, 0
    %p334 = por %p332, %p333
    %s336 = sadd.s32 %s335, 1
    %p339 = scmp.eq.s32.totalorder %s34, 1
    %p340 = scmp.ne.s32.totalorder %s335, %s337
    %p341 = scmp.eq.s32.totalorder %s34, 0
    %p342 = por %p340, %p341
    %p343 = scmp.ne.s32.totalorder %s335, %s337
    %p344 = scmp.eq.s32.totalorder %s39, 1
    %p345 = por %p343, %p344
    %p346 = scmp.ne.s32.totalorder %s337, %s338
    %p347 = scmp.eq.s32.totalorder %s39, 0
    %p348 = por %p346, %p347
    %p349 = scmp.ne.s32.totalorder %s337, %s338
    %p350 = scmp.eq.s32.totalorder %s40, 1
    %p351 = por %p349, %p350
    %p353 = scmp.ne.s32.totalorder %s338, %s352
    %p354 = scmp.eq.s32.totalorder %s40, 0
    %p355 = por %p353, %p354
    %s357 = sadd.s32 %s356, 1
    %p360 = scmp.eq.s32.totalorder %s34, 1
    %p361 = scmp.ne.s32.totalorder %s356, %s358
    %p362 = scmp.eq.s32.totalorder %s34, 0
    %p363 = por %p361, %p362
    %p364 = scmp.ne.s32.totalorder %s356, %s358
    %p365 = scmp.eq.s32.totalorder %s39, 1
    %p366 = por %p364, %p365
    %p367 = scmp.ne.s32.totalorder %s358, %s359
    %p368 = scmp.eq.s32.totalorder %s39, 0
    %p369 = por %p367, %p368
    %p370 = scmp.ne.s32.totalorder %s358, %s359
    %p371 = scmp.eq.s32.totalorder %s40, 1
    %p372 = por %p370, %p371
    %p374 = scmp.ne.s32.totalorder %s359, %s373
    %p375 = scmp.eq.s32.totalorder %s40, 0
    %p376 = por %p374, %p375
    %s378 = sadd.s32 %s377, 1
    %p381 = scmp.eq.s32.totalorder %s34, 1
    %p382 = scmp.ne.s32.totalorder %s377, %s379
    %p383 = scmp.eq.s32.totalorder %s34, 0
    %p384 = por %p382, %p383
    %p385 = scmp.ne.s32.totalorder %s377, %s379
    %p386 = scmp.eq.s32.totalorder %s39, 1
    %p387 = por %p385, %p386
    %p388 = scmp.ne.s32.totalorder %s379, %s380
    %p389 = scmp.eq.s32.totalorder %s39, 0
    %p390 = por %p388, %p389
    %p391 = scmp.ne.s32.totalorder %s379, %s380
    %p392 = scmp.eq.s32.totalorder %s40, 1
    %p393 = por %p391, %p392
    %p395 = scmp.ne.s32.totalorder %s380, %s394
    %p396 = scmp.eq.s32.totalorder %s40, 0
    %p397 = por %p395, %p396
    %s399 = sadd.s32 %s398, 1
    %p402 = scmp.eq.s32.totalorder %s34, 1
    %p403 = scmp.ne.s32.totalorder %s398, %s400
    %p404 = scmp.eq.s32.totalorder %s34, 0
    %p405 = por %p403, %p404
    %p406 = scmp.ne.s32.totalorder %s398, %s400
    %p407 = scmp.eq.s32.totalorder %s39, 1
    %p408 = por %p406, %p407
    %p409 = scmp.ne.s32.totalorder %s400, %s401
    %p410 = scmp.eq.s32.totalorder %s39, 0
    %p411 = por %p409, %p410
    %p412 = scmp.ne.s32.totalorder %s400, %s401
    %p413 = scmp.eq.s32.totalorder %s40, 1
    %p414 = por %p412, %p413
    %p416 = scmp.ne.s32.totalorder %s401, %s415
    %p417 = scmp.eq.s32.totalorder %s40, 0
    %p418 = por %p416, %p417
    %s420 = sadd.s32 %s419, 1
    %p423 = scmp.eq.s32.totalorder %s34, 1
    %p424 = scmp.ne.s32.totalorder %s419, %s421
    %p425 = scmp.eq.s32.totalorder %s34, 0
    %p426 = por %p424, %p425
    %p427 = scmp.ne.s32.totalorder %s419, %s421
    %p428 = scmp.eq.s32.totalorder %s39, 1
    %p429 = por %p427, %p428
    %p430 = scmp.ne.s32.totalorder %s421, %s422
    %p431 = scmp.eq.s32.totalorder %s39, 0
    %p432 = por %p430, %p431
    %p433 = scmp.ne.s32.totalorder %s421, %s422
    %p434 = scmp.eq.s32.totalorder %s40, 1
    %p435 = por %p433, %p434
    %p437 = scmp.ne.s32.totalorder %s422, %s436
    %p438 = scmp.eq.s32.totalorder %s40, 0
    %p439 = por %p437, %p438
    %s441 = sadd.s32 %s440, 1
    %p444 = scmp.eq.s32.totalorder %s34, 1
    %p445 = scmp.ne.s32.totalorder %s440, %s442
    %p446 = scmp.eq.s32.totalorder %s34, 0
    %p447 = por %p445, %p446
    %p448 = scmp.ne.s32.totalorder %s440, %s442
    %p449 = scmp.eq.s32.totalorder %s39, 1
    %p450 = por %p448, %p449
    %p451 = scmp.ne.s32.totalorder %s442, %s443
    %p452 = scmp.eq.s32.totalorder %s39, 0
    %p453 = por %p451, %p452
    %p454 = scmp.ne.s32.totalorder %s442, %s443
    %p455 = scmp.eq.s32.totalorder %s40, 1
    %p456 = por %p454, %p455
    %p458 = scmp.ne.s32.totalorder %s443, %s457
    %p459 = scmp.eq.s32.totalorder %s40, 0
    %p460 = por %p458, %p459
    %s462 = sadd.s32 %s461, 1
    %p465 = scmp.eq.s32.totalorder %s34, 1
    %p466 = scmp.ne.s32.totalorder %s461, %s463
    %p467 = scmp.eq.s32.totalorder %s34, 0
    %p468 = por %p466, %p467
    %p469 = scmp.ne.s32.totalorder %s461, %s463
    %p470 = scmp.eq.s32.totalorder %s39, 1
    %p471 = por %p469, %p470
    %p472 = scmp.ne.s32.totalorder %s463, %s464
    %p473 = scmp.eq.s32.totalorder %s39, 0
    %p474 = por %p472, %p473
    %p475 = scmp.ne.s32.totalorder %s463, %s464
    %p476 = scmp.eq.s32.totalorder %s40, 1
    %p477 = por %p475, %p476
    %p479 = scmp.ne.s32.totalorder %s464, %s478
    %p480 = scmp.eq.s32.totalorder %s40, 0
    %p481 = por %p479, %p480
    %s483 = sadd.s32 %s482, 1
    %p486 = scmp.eq.s32.totalorder %s34, 1
    %p487 = scmp.ne.s32.totalorder %s482, %s484
    %p488 = scmp.eq.s32.totalorder %s34, 0
    %p489 = por %p487, %p488
    %p490 = scmp.ne.s32.totalorder %s482, %s484
    %p491 = scmp.eq.s32.totalorder %s39, 1
    %p492 = por %p490, %p491
    %p493 = scmp.ne.s32.totalorder %s484, %s485
    %p494 = scmp.eq.s32.totalorder %s39, 0
    %p495 = por %p493, %p494
    %p496 = scmp.ne.s32.totalorder %s484, %s485
    %p497 = scmp.eq.s32.totalorder %s40, 1
    %p498 = por %p496, %p497
    %p500 = scmp.ne.s32.totalorder %s485, %s499
    %p501 = scmp.eq.s32.totalorder %s40, 0
    %p502 = por %p500, %p501
    %s504 = sadd.s32 %s503, 1
    %p507 = scmp.eq.s32.totalorder %s34, 1
    %p508 = scmp.ne.s32.totalorder %s503, %s505
    %p509 = scmp.eq.s32.totalorder %s34, 0
    %p510 = por %p508, %p509
    %p511 = scmp.ne.s32.totalorder %s503, %s505
    %p512 = scmp.eq.s32.totalorder %s39, 1
    %p513 = por %p511, %p512
    %p514 = scmp.ne.s32.totalorder %s505, %s506
    %p515 = scmp.eq.s32.totalorder %s39, 0
    %p516 = por %p514, %p515
    %p517 = scmp.ne.s32.totalorder %s505, %s506
    %p518 = scmp.eq.s32.totalorder %s40, 1
    %p519 = por %p517, %p518
    %p521 = scmp.ne.s32.totalorder %s506, %s520
    %p522 = scmp.eq.s32.totalorder %s40, 0
    %p523 = por %p521, %p522
    %s525 = sadd.s32 %s524, 1
    %p528 = scmp.eq.s32.totalorder %s34, 1
    %p529 = scmp.ne.s32.totalorder %s524, %s526
    %p530 = scmp.eq.s32.totalorder %s34, 0
    %p531 = por %p529, %p530
    %p532 = scmp.ne.s32.totalorder %s524, %s526
    %p533 = scmp.eq.s32.totalorder %s39, 1
    %p534 = por %p532, %p533
    %p535 = scmp.ne.s32.totalorder %s526, %s527
    %p536 = scmp.eq.s32.totalorder %s39, 0
    %p537 = por %p535, %p536
    %p538 = scmp.ne.s32.totalorder %s526, %s527
    %p539 = scmp.eq.s32.totalorder %s40, 1
    %p540 = por %p538, %p539
    %p542 = scmp.ne.s32.totalorder %s527, %s541
    %p543 = scmp.eq.s32.totalorder %s40, 0
    %p544 = por %p542, %p543
    %s546 = sadd.s32 %s545, 1
    %p549 = scmp.eq.s32.totalorder %s34, 1
    %p550 = scmp.ne.s32.totalorder %s545, %s547
    %p551 = scmp.eq.s32.totalorder %s34, 0
    %p552 = por %p550, %p551
    %p553 = scmp.ne.s32.totalorder %s545, %s547
    %p554 = scmp.eq.s32.totalorder %s39, 1
    %p555 = por %p553, %p554
    %p556 = scmp.ne.s32.totalorder %s547, %s548
    %p557 = scmp.eq.s32.totalorder %s39, 0
    %p558 = por %p556, %p557
    %p559 = scmp.ne.s32.totalorder %s547, %s548
    %p560 = scmp.eq.s32.totalorder %s40, 1
    %p561 = por %p559, %p560
    %p563 = scmp.ne.s32.totalorder %s548, %s562
    %p564 = scmp.eq.s32.totalorder %s40, 0
    %p565 = por %p563, %p564
    %s567 = sadd.s32 %s566, 1
    %p570 = scmp.eq.s32.totalorder %s34, 1
    %p571 = scmp.ne.s32.totalorder %s566, %s568
    %p572 = scmp.eq.s32.totalorder %s34, 0
    %p573 = por %p571, %p572
    %p574 = scmp.ne.s32.totalorder %s566, %s568
    %p575 = scmp.eq.s32.totalorder %s39, 1
    %p576 = por %p574, %p575
    %p577 = scmp.ne.s32.totalorder %s568, %s569
    %p578 = scmp.eq.s32.totalorder %s39, 0
    %p579 = por %p577, %p578
    %p580 = scmp.ne.s32.totalorder %s568, %s569
    %p581 = scmp.eq.s32.totalorder %s40, 1
    %p582 = por %p580, %p581
    %p584 = scmp.ne.s32.totalorder %s569, %s583
    %p585 = scmp.eq.s32.totalorder %s40, 0
    %p586 = por %p584, %p585
    %s588 = sadd.s32 %s587, 1
    %p591 = scmp.eq.s32.totalorder %s34, 1
    %p592 = scmp.ne.s32.totalorder %s587, %s589
    %p593 = scmp.eq.s32.totalorder %s34, 0
    %p594 = por %p592, %p593
    %p595 = scmp.ne.s32.totalorder %s587, %s589
    %p596 = scmp.eq.s32.totalorder %s39, 1
    %p597 = por %p595, %p596
    %p598 = scmp.ne.s32.totalorder %s589, %s590
    %p599 = scmp.eq.s32.totalorder %s39, 0
    %p600 = por %p598, %p599
    %p601 = scmp.ne.s32.totalorder %s589, %s590
    %p602 = scmp.eq.s32.totalorder %s40, 1
    %p603 = por %p601, %p602
    %p605 = scmp.ne.s32.totalorder %s590, %s604
    %p606 = scmp.eq.s32.totalorder %s40, 0
    %p607 = por %p605, %p606
    %s608 = ssub.s32 %s34, %s41
    %p609 = scmp.eq.s32.totalorder %s608, 0
    %s611 = sadd.s32 %s610, 1
    %s612 = scalar_select %p609, %s610, %s611
    %p615 = pneg %p609
    %p616 = scmp.eq.s32.totalorder %s34, 1
    %p617 = por %p615, %p616
    %p618 = scmp.ne.s32.totalorder %s610, %s613
    %p619 = scmp.eq.s32.totalorder %s34, 0
    %p620 = por %p618, %p619
    %p621 = scmp.ne.s32.totalorder %s610, %s613
    %p622 = scmp.eq.s32.totalorder %s39, 1
    %p623 = por %p621, %p622
    %p624 = scmp.ne.s32.totalorder %s613, %s614
    %p625 = scmp.eq.s32.totalorder %s39, 0
    %p626 = por %p624, %p625
    %p627 = scmp.ne.s32.totalorder %s613, %s614
    %p628 = scmp.eq.s32.totalorder %s40, 1
    %p629 = por %p627, %p628
    %p631 = scmp.ne.s32.totalorder %s614, %s630
    %p632 = scmp.eq.s32.totalorder %s40, 0
    %p633 = por %p631, %p632
    %s634 = ssub.s32 %s34, %s41
    %p635 = scmp.eq.s32.totalorder %s634, 0
    %s637 = sadd.s32 %s636, 1
    %s638 = scalar_select %p635, %s636, %s637
    %p641 = pneg %p635
    %p642 = scmp.eq.s32.totalorder %s34, 1
    %p643 = por %p641, %p642
    %p644 = scmp.ne.s32.totalorder %s636, %s639
    %p645 = scmp.eq.s32.totalorder %s34, 0
    %p646 = por %p644, %p645
    %p647 = scmp.ne.s32.totalorder %s636, %s639
    %p648 = scmp.eq.s32.totalorder %s39, 1
    %p649 = por %p647, %p648
    %p650 = scmp.ne.s32.totalorder %s639, %s640
    %p651 = scmp.eq.s32.totalorder %s39, 0
    %p652 = por %p650, %p651
    %p653 = scmp.ne.s32.totalorder %s639, %s640
    %p654 = scmp.eq.s32.totalorder %s40, 1
    %p655 = por %p653, %p654
    %p657 = scmp.ne.s32.totalorder %s640, %s656
    %p658 = scmp.eq.s32.totalorder %s40, 0
    %p659 = por %p657, %p658
    %p660 = scmp.le.s32.totalorder 1, %s34
    %p661 = scmp.lt.s32.totalorder %s34, 3
    %p662 = pnand %p660, %p661
    %p663 = pneg %p662
    // Predicated region
    $region9: #{thdroformer_self.1} parent=5 // pred_check
      _
    $region10: #{thdroformer_self.1} parent=5 // pred_check_branch
      %665 = sbr.rel (%p662) target = $region12
    $region11: #{thdroformer_self.1} parent=5 // pred_region
      %s666 = ssub.s32 %s34, 1
      // Predicated region
      $region13: #{thdroformer_self.1} parent=11 // pred_check
        %p667 = pneg %p159
      $region14: #{thdroformer_self.1} parent=11 // pred_check_branch
        %669 = sbr.rel (%p667) target = $region16
      $region15: #{thdroformer_self.1} parent=11 // pred_region
        _
      $region16: #{thdroformer_self.1} parent=11 // pred_fallthru
        _
      // Predicated region
      $region17: #{thdroformer_self.1} parent=11 // pred_check
        %p670 = pneg %p180
      $region18: #{thdroformer_self.1} parent=11 // pred_check_branch
        %672 = sbr.rel (%p670) target = $region20
      $region19: #{thdroformer_self.1} parent=11 // pred_region
        _
      $region20: #{thdroformer_self.1} parent=11 // pred_fallthru
        _
      // Predicated region
      $region21: #{thdroformer_self.1} parent=11 // pred_check
        %p673 = pneg %p201
      $region22: #{thdroformer_self.1} parent=11 // pred_check_branch
        %675 = sbr.rel (%p673) target = $region24
      $region23: #{thdroformer_self.1} parent=11 // pred_region
        _
      $region24: #{thdroformer_self.1} parent=11 // pred_fallthru
        _
      // Predicated region
      $region25: #{thdroformer_self.1} parent=11 // pred_check
        %p676 = pneg %p222
      $region26: #{thdroformer_self.1} parent=11 // pred_check_branch
        %678 = sbr.rel (%p676) target = $region28
      $region27: #{thdroformer_self.1} parent=11 // pred_region
        _
      $region28: #{thdroformer_self.1} parent=11 // pred_fallthru
        _
      // Predicated region
      $region29: #{thdroformer_self.1} parent=11 // pred_check
        %p679 = pneg %p243
      $region30: #{thdroformer_self.1} parent=11 // pred_check_branch
        %681 = sbr.rel (%p679) target = $region32
      $region31: #{thdroformer_self.1} parent=11 // pred_region
        _
      $region32: #{thdroformer_self.1} parent=11 // pred_fallthru
        _
      // Predicated region
      $region33: #{thdroformer_self.1} parent=11 // pred_check
        %p682 = pneg %p264
      $region34: #{thdroformer_self.1} parent=11 // pred_check_branch
        %684 = sbr.rel (%p682) target = $region36
      $region35: #{thdroformer_self.1} parent=11 // pred_region
        _
      $region36: #{thdroformer_self.1} parent=11 // pred_fallthru
        _
      // Predicated region
      $region37: #{thdroformer_self.1} parent=11 // pred_check
        %p685 = pneg %p285
      $region38: #{thdroformer_self.1} parent=11 // pred_check_branch
        %687 = sbr.rel (%p685) target = $region40
      $region39: #{thdroformer_self.1} parent=11 // pred_region
        _
      $region40: #{thdroformer_self.1} parent=11 // pred_fallthru
        _
      // Predicated region
      $region41: #{thdroformer_self.1} parent=11 // pred_check
        %p688 = pneg %p306
      $region42: #{thdroformer_self.1} parent=11 // pred_check_branch
        %690 = sbr.rel (%p688) target = $region44
      $region43: #{thdroformer_self.1} parent=11 // pred_region
        _
      $region44: #{thdroformer_self.1} parent=11 // pred_fallthru
        _
      // Predicated region
      $region45: #{thdroformer_self.1} parent=11 // pred_check
        %p691 = pneg %p327
      $region46: #{thdroformer_self.1} parent=11 // pred_check_branch
        %693 = sbr.rel (%p691) target = $region48
      $region47: #{thdroformer_self.1} parent=11 // pred_region
        _
      $region48: #{thdroformer_self.1} parent=11 // pred_fallthru
        _
      // Predicated region
      $region49: #{thdroformer_self.1} parent=11 // pred_check
        %p694 = pneg %p348
      $region50: #{thdroformer_self.1} parent=11 // pred_check_branch
        %696 = sbr.rel (%p694) target = $region52
      $region51: #{thdroformer_self.1} parent=11 // pred_region
        _
      $region52: #{thdroformer_self.1} parent=11 // pred_fallthru
        _
      // Predicated region
      $region53: #{thdroformer_self.1} parent=11 // pred_check
        %p697 = pneg %p369
      $region54: #{thdroformer_self.1} parent=11 // pred_check_branch
        %699 = sbr.rel (%p697) target = $region56
      $region55: #{thdroformer_self.1} parent=11 // pred_region
        _
      $region56: #{thdroformer_self.1} parent=11 // pred_fallthru
        _
      // Predicated region
      $region57: #{thdroformer_self.1} parent=11 // pred_check
        %p700 = pneg %p390
      $region58: #{thdroformer_self.1} parent=11 // pred_check_branch
        %702 = sbr.rel (%p700) target = $region60
      $region59: #{thdroformer_self.1} parent=11 // pred_region
        _
      $region60: #{thdroformer_self.1} parent=11 // pred_fallthru
        _
      // Predicated region
      $region61: #{thdroformer_self.1} parent=11 // pred_check
        %p703 = pneg %p411
      $region62: #{thdroformer_self.1} parent=11 // pred_check_branch
        %705 = sbr.rel (%p703) target = $region64
      $region63: #{thdroformer_self.1} parent=11 // pred_region
        _
      $region64: #{thdroformer_self.1} parent=11 // pred_fallthru
        _
      // Predicated region
      $region65: #{thdroformer_self.1} parent=11 // pred_check
        %p706 = pneg %p432
      $region66: #{thdroformer_self.1} parent=11 // pred_check_branch
        %708 = sbr.rel (%p706) target = $region68
      $region67: #{thdroformer_self.1} parent=11 // pred_region
        _
      $region68: #{thdroformer_self.1} parent=11 // pred_fallthru
        _
      // Predicated region
      $region69: #{thdroformer_self.1} parent=11 // pred_check
        %p709 = pneg %p453
      $region70: #{thdroformer_self.1} parent=11 // pred_check_branch
        %711 = sbr.rel (%p709) target = $region72
      $region71: #{thdroformer_self.1} parent=11 // pred_region
        _
      $region72: #{thdroformer_self.1} parent=11 // pred_fallthru
        _
      // Predicated region
      $region73: #{thdroformer_self.1} parent=11 // pred_check
        %p712 = pneg %p474
      $region74: #{thdroformer_self.1} parent=11 // pred_check_branch
        %714 = sbr.rel (%p712) target = $region76
      $region75: #{thdroformer_self.1} parent=11 // pred_region
        _
      $region76: #{thdroformer_self.1} parent=11 // pred_fallthru
        _
      // Predicated region
      $region77: #{thdroformer_self.1} parent=11 // pred_check
        %p715 = pneg %p495
      $region78: #{thdroformer_self.1} parent=11 // pred_check_branch
        %717 = sbr.rel (%p715) target = $region80
      $region79: #{thdroformer_self.1} parent=11 // pred_region
        _
      $region80: #{thdroformer_self.1} parent=11 // pred_fallthru
        _
      // Predicated region
      $region81: #{thdroformer_self.1} parent=11 // pred_check
        %p718 = pneg %p516
      $region82: #{thdroformer_self.1} parent=11 // pred_check_branch
        %720 = sbr.rel (%p718) target = $region84
      $region83: #{thdroformer_self.1} parent=11 // pred_region
        _
      $region84: #{thdroformer_self.1} parent=11 // pred_fallthru
        _
      // Predicated region
      $region85: #{thdroformer_self.1} parent=11 // pred_check
        %p721 = pneg %p537
      $region86: #{thdroformer_self.1} parent=11 // pred_check_branch
        %723 = sbr.rel (%p721) target = $region88
      $region87: #{thdroformer_self.1} parent=11 // pred_region
        _
      $region88: #{thdroformer_self.1} parent=11 // pred_fallthru
        _
      // Predicated region
      $region89: #{thdroformer_self.1} parent=11 // pred_check
        %p724 = pneg %p558
      $region90: #{thdroformer_self.1} parent=11 // pred_check_branch
        %726 = sbr.rel (%p724) target = $region92
      $region91: #{thdroformer_self.1} parent=11 // pred_region
        _
      $region92: #{thdroformer_self.1} parent=11 // pred_fallthru
        _
      // Predicated region
      $region93: #{thdroformer_self.1} parent=11 // pred_check
        %p727 = pneg %p579
      $region94: #{thdroformer_self.1} parent=11 // pred_check_branch
        %729 = sbr.rel (%p727) target = $region96
      $region95: #{thdroformer_self.1} parent=11 // pred_region
        _
      $region96: #{thdroformer_self.1} parent=11 // pred_fallthru
        _
      // Predicated region
      $region97: #{thdroformer_self.1} parent=11 // pred_check
        %p730 = pneg %p600
      $region98: #{thdroformer_self.1} parent=11 // pred_check_branch
        %732 = sbr.rel (%p730) target = $region100
      $region99: #{thdroformer_self.1} parent=11 // pred_region
        _
      $region100: #{thdroformer_self.1} parent=11 // pred_fallthru
        _
    $region12: #{thdroformer_self.1} parent=5 // pred_fallthru
      _
    %p733 = scmp.lt.s32.totalorder %s34, 2
    // Predicated region
    $region101: #{thdroformer_self.1} parent=5 // pred_check
      %p734 = pneg %p733
    $region102: #{thdroformer_self.1} parent=5 // pred_check_branch
      %736 = sbr.rel (%p734) target = $region104
    $region103: #{thdroformer_self.1} parent=5 // pred_region
      // Predicated region
      $region105: #{thdroformer_self.1} parent=103 // pred_check
        %p737 = pneg %p54
      $region106: #{thdroformer_self.1} parent=103 // pred_check_branch
        %739 = sbr.rel (%p737) target = $region108
      $region107: #{thdroformer_self.1} parent=103 // pred_region
        %p740 = scmp.lt.s32.totalorder %s34, 1
        %s741 = scalar_select %p740, %s34, 1
        %s742 = smul.addr %s741, 2
        %s743 = smul.addr %s742, 8
        %s744 = scalar_lea.vmem %s0, %s743
      $region108: #{thdroformer_self.1} parent=103 // pred_fallthru
        _
      // Predicated region
      $region109: #{thdroformer_self.1} parent=103 // pred_check
        %p745 = pneg %p80
      $region110: #{thdroformer_self.1} parent=103 // pred_check_branch
        %747 = sbr.rel (%p745) target = $region112
      $region111: #{thdroformer_self.1} parent=103 // pred_region
        %p748 = scmp.lt.s32.totalorder %s34, 1
        %s749 = scalar_select %p748, %s34, 1
        %s750 = smul.addr %s749, 2
        %s751 = smul.addr %s750, 8
        %s752 = scalar_lea.vmem %s1, %s751
      $region112: #{thdroformer_self.1} parent=103 // pred_fallthru
        _
      // Predicated region
      $region113: #{thdroformer_self.1} parent=103 // pred_check
        %p753 = pneg %p106
      $region114: #{thdroformer_self.1} parent=103 // pred_check_branch
        %755 = sbr.rel (%p753) target = $region116
      $region115: #{thdroformer_self.1} parent=103 // pred_region
        %p756 = scmp.lt.s32.totalorder %s34, 1
        %s757 = scalar_select %p756, %s34, 1
        %s758 = smul.addr %s757, 2
        %s759 = smul.addr %s758, 8
        %s760 = scalar_lea.vmem %s2, %s759
      $region116: #{thdroformer_self.1} parent=103 // pred_fallthru
        _
      // Predicated region
      $region117: #{thdroformer_self.1} parent=103 // pred_check
        %p761 = pneg %p132
      $region118: #{thdroformer_self.1} parent=103 // pred_check_branch
        %763 = sbr.rel (%p761) target = $region120
      $region119: #{thdroformer_self.1} parent=103 // pred_region
        %p764 = scmp.lt.s32.totalorder %s34, 1
        %s765 = scalar_select %p764, %s34, 1
        %s766 = smul.addr %s765, 2
        %s767 = smul.addr %s766, 8
        %s768 = scalar_lea.vmem %s3, %s767
      $region120: #{thdroformer_self.1} parent=103 // pred_fallthru
        _
    $region104: #{thdroformer_self.1} parent=5 // pred_fallthru
      _
    %p769 = scmp.le.s32.totalorder 1, %s34
    %p770 = scmp.lt.s32.totalorder %s34, 3
    %p771 = pnand %p769, %p770
    %p772 = pneg %p771
    // Predicated region
    $region121: #{thdroformer_self.1} parent=5 // pred_check
      _
    $region122: #{thdroformer_self.1} parent=5 // pred_check_branch
      %774 = sbr.rel (%p771) target = $region124
    $region123: #{thdroformer_self.1} parent=5 // pred_region
      %s775 = ssub.s32 %s34, 1
      %p776 = scmp.lt.s32.totalorder %s39, 1
      %s777 = scalar_select %p776, %s39, 1
      %s778 = smul.addr %s777, 2
      %s779 = smul.addr %s778, 8
      %s780 = scalar_lea.vmem %s0, %s779
      %p781 = pneg %p60
      %p782 = pneg %p57
      %p783 = scmp.lt.s32.totalorder %s39, 1
      %s784 = scalar_select %p783, %s39, 1
      %s785 = smul.addr %s784, 2
      %s786 = smul.addr %s785, 8
      %s787 = scalar_lea.vmem %s1, %s786
      %p788 = pneg %p86
      %p789 = pneg %p83
      %p790 = scmp.lt.s32.totalorder %s39, 1
      %s791 = scalar_select %p790, %s39, 1
      %s792 = smul.addr %s791, 2
      %s793 = smul.addr %s792, 8
      %s794 = scalar_lea.vmem %s2, %s793
      %p795 = pneg %p112
      %p796 = pneg %p109
      %p797 = scmp.lt.s32.totalorder %s39, 1
      %s798 = scalar_select %p797, %s39, 1
      %s799 = smul.addr %s798, 2
      %s800 = smul.addr %s799, 8
      %s801 = scalar_lea.vmem %s3, %s800
      %p802 = pneg %p138
      %p803 = pneg %p135
      %p804 = pneg %p159
      %p805 = pneg %p156
      %p806 = pneg %p180
      %p807 = pneg %p177
      %p808 = pneg %p201
      %p809 = pneg %p198
      %p810 = pneg %p222
      %p811 = pneg %p219
      %p812 = pneg %p243
      %p813 = pneg %p240
      %p814 = pneg %p264
      %p815 = pneg %p261
      %p816 = pneg %p285
      %p817 = pneg %p282
      %p818 = pneg %p306
      %p819 = pneg %p303
      %p820 = pneg %p327
      %p821 = pneg %p324
      %p822 = pneg %p348
      %p823 = pneg %p345
      %p824 = pneg %p369
      %p825 = pneg %p366
      %p826 = pneg %p390
      %p827 = pneg %p387
      %p828 = pneg %p411
      %p829 = pneg %p408
      %p830 = pneg %p432
      %p831 = pneg %p429
      %p832 = pneg %p453
      %p833 = pneg %p450
      %p834 = pneg %p474
      %p835 = pneg %p471
      %p836 = pneg %p495
      %p837 = pneg %p492
      %p838 = pneg %p516
      %p839 = pneg %p513
      %p840 = pneg %p537
      %p841 = pneg %p534
      %p842 = pneg %p558
      %p843 = pneg %p555
      %p844 = pneg %p579
      %p845 = pneg %p576
      %p846 = pneg %p600
      %p847 = pneg %p597
      %p848 = pneg %p626
      %p849 = pneg %p623
      %p850 = scmp.lt.s32.totalorder %s39, 1
      %s851 = scalar_select %p850, %s39, 1
      %s852 = smul.addr %s851, 2
      %s853 = smul.addr %s852, 8
      %s854 = scalar_lea.vmem %s26, %s853
      %p855 = pneg %p652
      %p856 = pneg %p649
      %p857 = scmp.lt.s32.totalorder %s39, 1
      %s858 = scalar_select %p857, %s39, 1
      %s859 = smul.addr %s858, 2
      %s860 = smul.addr %s859, 8
      %s861 = scalar_lea.vmem %s27, %s860
      %p862 = scmp.lt.s32.totalorder %s39, 1
      %s863 = scalar_select %p862, %s39, 1
      %s864 = smul.addr %s863, 2
      %s865 = smul.addr %s864, 8
      %s866 = scalar_lea.vmem %s0, %s865
      %p867 = scmp.lt.s32.totalorder %s39, 1
      %s868 = scalar_select %p867, %s39, 1
      %s869 = smul.addr %s868, 2
      %s870 = smul.addr %s869, 8
      %s871 = scalar_lea.vmem %s1, %s870
      %p872 = scmp.lt.s32.totalorder %s39, 1
      %s873 = scalar_select %p872, %s39, 1
      %s874 = smul.addr %s873, 2
      %s875 = smul.addr %s874, 8
      %s876 = scalar_lea.vmem %s2, %s875
      %p877 = scmp.lt.s32.totalorder %s39, 1
      %s878 = scalar_select %p877, %s39, 1
      %s879 = smul.addr %s878, 2
      %s880 = smul.addr %s879, 8
      %s881 = scalar_lea.vmem %s3, %s880
      %p882 = scmp.lt.s32.totalorder %s39, 1
      %s883 = scalar_select %p882, %s39, 1
      %s884 = smul.addr %s883, 2
      %s885 = smul.addr %s884, 8
      %s886 = scalar_lea.vmem %s26, %s885
      %p887 = scmp.lt.s32.totalorder %s39, 1
      %s888 = scalar_select %p887, %s39, 1
      %s889 = smul.addr %s888, 2
      %s890 = smul.addr %s889, 8
      %s891 = scalar_lea.vmem %s27, %s890
      %v893 = vld [vmem:[%s866] sm:$0xff]
      %v894 = vld [vmem:[%s866 + $0x8] sm:$0xff]
      %v895 = vld [vmem:[%s4] sm:$0x1]
      %897 = vset.pattern.permute.xlu0 0
      %898 = vperm.xlu0 %897, %v893
      %v899 = vpop.permute.xlu0 %898
      %902 = vset.pattern.permute.xlu0 0
      %903 = vperm.xlu0 %902, %v894
      %v904 = vpop.permute.xlu0 %903
      %v906 = vlaneseq
      %v907 = vshrl.u32 %v906, 7
      %v908 = vsub.s32 0, %v907
      %v909 = vrot.slane %v895, %v908
      %v910 = vmul.f32 %v899, %v909
      %v911 = vmul.f32 %v904, %v909
      %v912 = vld [vmem:[%s4 + $0x1] sm:$0x1]
      %913 = vset.pattern.permute.xlu0 1
      %914 = vperm.xlu0 %913, %v893
      %v915 = vpop.permute.xlu0 %914
      %917 = vset.pattern.permute.xlu0 1
      %918 = vperm.xlu0 %917, %v894
      %v919 = vpop.permute.xlu0 %918
      %v921 = vlaneseq
      %v922 = vshrl.u32 %v921, 7
      %v923 = vsub.s32 0, %v922
      %v924 = vrot.slane %v912, %v923
      %v925 = vmul.f32 %v915, %v924
      %v926 = vmul.f32 %v919, %v924
      %v927 = vadd.f32 %v910, %v925
      %v928 = vadd.f32 %v911, %v926
      %v929 = vld [vmem:[%s4 + $0x2] sm:$0x1]
      %930 = vset.pattern.permute.xlu0 2
      %931 = vperm.xlu0 %930, %v893
      %v932 = vpop.permute.xlu0 %931
      %934 = vset.pattern.permute.xlu0 2
      %935 = vperm.xlu0 %934, %v894
      %v936 = vpop.permute.xlu0 %935
      %v938 = vlaneseq
      %v939 = vshrl.u32 %v938, 7
      %v940 = vsub.s32 0, %v939
      %v941 = vrot.slane %v929, %v940
      %v942 = vmul.f32 %v932, %v941
      %v943 = vmul.f32 %v936, %v941
      %v944 = vadd.f32 %v927, %v942
      %v945 = vadd.f32 %v928, %v943
      %v946 = vld [vmem:[%s5] sm:$0x1]
      %v948 = vlaneseq
      %v949 = vshrl.u32 %v948, 7
      %v950 = vsub.s32 0, %v949
      %v951 = vrot.slane %v946, %v950
      %v953 = vadd.f32 %v944, %v951
      %v954 = vadd.f32 %v945, %v951
      %v955 = vand.u32 2147483647, %v953
      %vm956 = vcmp.le.f32.partialorder %v955, 0.7853982
      %vm957 = vcmp.lt.s32.totalorder %v953, 0
      %v958 = vand.u32 %v953, 2139095040
      %v959 = vshrl.u32 %v958, 23
      %v960 = vsub.s32 %v959, 127
      %v961 = vand.u32 2147483647, %v953
      %v962 = vand.u32 %v961, 8388607
      %v963 = vor.u32 %v962, 8388608
      %v964 = vsub.s32 0, %v963
      %v965 = vadd.s32 %v960, 1
      %vm966 = vcmp.gt.s32.totalorder %v965, 0
      %v967 = vsel %vm966, %v965, 0
      %v968 = vshrl.u32 %v967, 5
      %v969 = vand.u32 %v967, 31
      %v970 = vsub.s32 32, %v969
      %v971 = vshrl.u32 683565275, %v970
      %v972 = vshll.u32 683565275, %v969
      %v973 = vshrl.u32 2475754826, %v970
      %v974 = vor.u32 %v972, %v973
      %v975 = vshll.u32 2475754826, %v969
      %v976 = vshrl.u32 2131351028, %v970
      %v977 = vor.u32 %v975, %v976
      %v978 = vshll.u32 2131351028, %v969
      %v979 = vshrl.u32 2102212464, %v970
      %v980 = vor.u32 %v978, %v979
      %v981 = vshll.u32 2102212464, %v969
      %v982 = vshrl.u32 920167782, %v970
      %v983 = vor.u32 %v981, %v982
      %v984 = vshll.u32 920167782, %v969
      %v985 = vshrl.u32 1326507024, %v970
      %v986 = vor.u32 %v984, %v985
      %vm987 = vcmp.lt.s32.totalorder %v968, 1
      %vm988 = vcmp.lt.s32.totalorder %v968, 2
      %vm989 = vcmp.lt.s32.totalorder %v968, 3
      %vm990 = vcmp.lt.s32.totalorder %v968, 4
      %v991 = vsel %vm987, %v971, %v974
      %v992 = vsel %vm990, %v980, 2102212464
      %v993 = vsel %vm989, %v977, %v992
      %v994 = vsel %vm988, %v991, %v993
      %v995 = vsel %vm987, %v974, %v977
      %v996 = vsel %vm990, %v983, 920167782
      %v997 = vsel %vm989, %v980, %v996
      %v998 = vsel %vm988, %v995, %v997
      %v999 = vsel %vm987, %v977, %v980
      %v1000 = vsel %vm990, %v986, 1326507024
      %v1001 = vsel %vm989, %v983, %v1000
      %v1002 = vsel %vm988, %v999, %v1001
      %v1003 = vshll.u32 %v963, 8
      %v1004 = vmul.u32.u64.compose %v1003, %v1002
      %v1005 = vextract.low.u32 %v1004
      %v1006 = vextract.high.u32 %v1004
      %v1007 = vmul.u32.u64.compose %v1003, %v998
      %v1008 = vextract.low.u32 %v1007
      %v1009 = vextract.high.u32 %v1007
      %v1010 = vmul.u32 %v1003, %v994
      %v1011 = vadd.s32 %v1006, %v1008
      %vm1012 = vc.u32 %v1006, %v1008
      %v1013 = vadd.s32 %v1009, 1
      %v1014 = vsel %vm1012, %v1013, %v1009
      %v1015 = vadd.s32 %v1010, %v1014
      %v1016 = vadd.s32 %v1015, 536870912
      %v1017 = vshrl.u32 %v1016, 30
      %v1018 = vshll.u32 %v1017, 30
      %v1019 = vsub.s32 %v1015, %v1018
      %vm1020 = vcmp.lt.s32.totalorder %v1019, 0
      %v1021 = vsub.s32 0, %v1019
      %v1022 = vsel %vm1020, %v1021, %v1019
      %v1023 = vclz %v1022
      %v1024 = vsub.s32 %v1023, 2
      %vm1025 = vcmp.gt.s32.totalorder 0, %v1024
      %v1026 = vsel %vm1025, 0, %v1024
      %v1027 = vsub.s32 32, %v1026
      %v1028 = vshll.u32 %v1019, %v1026
      %v1029 = vshrl.u32 %v1011, %v1027
      %v1030 = vor.u32 %v1028, %v1029
      %v1031 = vsub.s32 4294967266, %v1026
      %v1032 = vadd.s32 %v1031, 127
      %v1033 = vshll.u32 %v1032, 23
      %v1034 = vor.u32 4788187, %v1033
      %v1035 = vand.u32 2147483647, %v1034
      %v1037 = vcvt.s32.f32 %v1030
      %v1038 = vmul.f32 %v1037, %v1035
      %v1039 = vxor.u32 %v1038, 2147483648
      %v1040 = vsel %vm957, %v1039, %v1038
      %v1041 = vsub.s32 4, %v1017
      %v1042 = vsel %vm957, %v1041, %v1017
      %v1043 = vsel %vm956, %v953, %v1040
      %v1044 = vsel %vm956, 0, %v1042
      %v1045 = vcosq.f32.pop %v1043
      %v1046 = vsinq.f32.pop %v1043
      %vm1047 = vweird.f32 %v953
      %v1048 = vand.u32 %v1044, 3
      %vm1049 = vcmp.lt.s32.totalorder %v1048, 2
      %vm1050 = vcmp.eq.s32.totalorder %v1048, 0
      %v1051 = vxor.u32 %v1046, 2147483648
      %v1052 = vsel %vm1050, %v1045, %v1051
      %vm1053 = vcmp.eq.s32.totalorder %v1048, 2
      %v1054 = vxor.u32 %v1045, 2147483648
      %v1055 = vsel %vm1053, %v1054, %v1046
      %v1056 = vsel %vm1049, %v1052, %v1055
      %v1057 = vsel %vm1047, nan, %v1056
      %v1058 = vand.u32 2147483647, %v954
      %vm1059 = vcmp.le.f32.partialorder %v1058, 0.7853982
      %vm1060 = vcmp.lt.s32.totalorder %v954, 0
      %v1061 = vand.u32 %v954, 2139095040
      %v1062 = vshrl.u32 %v1061, 23
      %v1063 = vsub.s32 %v1062, 127
      %v1064 = vand.u32 2147483647, %v954
      %v1065 = vand.u32 %v1064, 8388607
      %v1066 = vor.u32 %v1065, 8388608
      %v1067 = vsub.s32 0, %v1066
      %v1068 = vadd.s32 %v1063, 1
      %vm1069 = vcmp.gt.s32.totalorder %v1068, 0
      %v1070 = vsel %vm1069, %v1068, 0
      %v1071 = vshrl.u32 %v1070, 5
      %v1072 = vand.u32 %v1070, 31
      %v1073 = vsub.s32 32, %v1072
      %v1074 = vshrl.u32 683565275, %v1073
      %v1075 = vshll.u32 683565275, %v1072
      %v1076 = vshrl.u32 2475754826, %v1073
      %v1077 = vor.u32 %v1075, %v1076
      %v1078 = vshll.u32 2475754826, %v1072
      %v1079 = vshrl.u32 2131351028, %v1073
      %v1080 = vor.u32 %v1078, %v1079
      %v1081 = vshll.u32 2131351028, %v1072
      %v1082 = vshrl.u32 2102212464, %v1073
      %v1083 = vor.u32 %v1081, %v1082
      %v1084 = vshll.u32 2102212464, %v1072
      %v1085 = vshrl.u32 920167782, %v1073
      %v1086 = vor.u32 %v1084, %v1085
      %v1087 = vshll.u32 920167782, %v1072
      %v1088 = vshrl.u32 1326507024, %v1073
      %v1089 = vor.u32 %v1087, %v1088
      %vm1090 = vcmp.lt.s32.totalorder %v1071, 1
      %vm1091 = vcmp.lt.s32.totalorder %v1071, 2
      %vm1092 = vcmp.lt.s32.totalorder %v1071, 3
      %vm1093 = vcmp.lt.s32.totalorder %v1071, 4
      %v1094 = vsel %vm1090, %v1074, %v1077
      %v1095 = vsel %vm1093, %v1083, 2102212464
      %v1096 = vsel %vm1092, %v1080, %v1095
      %v1097 = vsel %vm1091, %v1094, %v1096
      %v1098 = vsel %vm1090, %v1077, %v1080
      %v1099 = vsel %vm1093, %v1086, 920167782
      %v1100 = vsel %vm1092, %v1083, %v1099
      %v1101 = vsel %vm1091, %v1098, %v1100
      %v1102 = vsel %vm1090, %v1080, %v1083
      %v1103 = vsel %vm1093, %v1089, 1326507024
      %v1104 = vsel %vm1092, %v1086, %v1103
      %v1105 = vsel %vm1091, %v1102, %v1104
      %v1106 = vshll.u32 %v1066, 8
      %v1107 = vmul.u32.u64.compose %v1106, %v1105
      %v1108 = vextract.low.u32 %v1107
      %v1109 = vextract.high.u32 %v1107
      %v1110 = vmul.u32.u64.compose %v1106, %v1101
      %v1111 = vextract.low.u32 %v1110
      %v1112 = vextract.high.u32 %v1110
      %v1113 = vmul.u32 %v1106, %v1097
      %v1114 = vadd.s32 %v1109, %v1111
      %vm1115 = vc.u32 %v1109, %v1111
      %v1116 = vadd.s32 %v1112, 1
      %v1117 = vsel %vm1115, %v1116, %v1112
      %v1118 = vadd.s32 %v1113, %v1117
      %v1119 = vadd.s32 %v1118, 536870912
      %v1120 = vshrl.u32 %v1119, 30
      %v1121 = vshll.u32 %v1120, 30
      %v1122 = vsub.s32 %v1118, %v1121
      %vm1123 = vcmp.lt.s32.totalorder %v1122, 0
      %v1124 = vsub.s32 0, %v1122
      %v1125 = vsel %vm1123, %v1124, %v1122
      %v1126 = vclz %v1125
      %v1127 = vsub.s32 %v1126, 2
      %vm1128 = vcmp.gt.s32.totalorder 0, %v1127
      %v1129 = vsel %vm1128, 0, %v1127
      %v1130 = vsub.s32 32, %v1129
      %v1131 = vshll.u32 %v1122, %v1129
      %v1132 = vshrl.u32 %v1114, %v1130
      %v1133 = vor.u32 %v1131, %v1132
      %v1134 = vsub.s32 4294967266, %v1129
      %v1135 = vadd.s32 %v1134, 127
      %v1136 = vshll.u32 %v1135, 23
      %v1137 = vor.u32 4788187, %v1136
      %v1138 = vand.u32 2147483647, %v1137
      %v1140 = vcvt.s32.f32 %v1133
      %v1141 = vmul.f32 %v1140, %v1138
      %v1142 = vxor.u32 %v1141, 2147483648
      %v1143 = vsel %vm1060, %v1142, %v1141
      %v1144 = vsub.s32 4, %v1120
      %v1145 = vsel %vm1060, %v1144, %v1120
      %v1146 = vsel %vm1059, %v954, %v1143
      %v1147 = vsel %vm1059, 0, %v1145
      %v1148 = vcosq.f32.pop %v1146
      %v1149 = vsinq.f32.pop %v1146
      %vm1150 = vweird.f32 %v954
      %v1151 = vand.u32 %v1147, 3
      %vm1152 = vcmp.lt.s32.totalorder %v1151, 2
      %vm1153 = vcmp.eq.s32.totalorder %v1151, 0
      %v1154 = vxor.u32 %v1149, 2147483648
      %v1155 = vsel %vm1153, %v1148, %v1154
      %vm1156 = vcmp.eq.s32.totalorder %v1151, 2
      %v1157 = vxor.u32 %v1148, 2147483648
      %v1158 = vsel %vm1156, %v1157, %v1149
      %v1159 = vsel %vm1152, %v1155, %v1158
      %v1160 = vsel %vm1150, nan, %v1159
      %v1161 = vand.u32 2147483647, %v953
      %vm1162 = vcmp.le.f32.partialorder %v1161, 0.7853982
      %vm1163 = vcmp.lt.s32.totalorder %v953, 0
      %v1164 = vand.u32 %v953, 2139095040
      %v1165 = vshrl.u32 %v1164, 23
      %v1166 = vsub.s32 %v1165, 127
      %v1167 = vand.u32 2147483647, %v953
      %v1168 = vand.u32 %v1167, 8388607
      %v1169 = vor.u32 %v1168, 8388608
      %v1170 = vsub.s32 0, %v1169
      %v1171 = vadd.s32 %v1166, 1
      %vm1172 = vcmp.gt.s32.totalorder %v1171, 0
      %v1173 = vsel %vm1172, %v1171, 0
      %v1174 = vshrl.u32 %v1173, 5
      %v1175 = vand.u32 %v1173, 31
      %v1176 = vsub.s32 32, %v1175
      %v1177 = vshrl.u32 683565275, %v1176
      %v1178 = vshll.u32 683565275, %v1175
      %v1179 = vshrl.u32 2475754826, %v1176
      %v1180 = vor.u32 %v1178, %v1179
      %v1181 = vshll.u32 2475754826, %v1175
      %v1182 = vshrl.u32 2131351028, %v1176
      %v1183 = vor.u32 %v1181, %v1182
      %v1184 = vshll.u32 2131351028, %v1175
      %v1185 = vshrl.u32 2102212464, %v1176
      %v1186 = vor.u32 %v1184, %v1185
      %v1187 = vshll.u32 2102212464, %v1175
      %v1188 = vshrl.u32 920167782, %v1176
      %v1189 = vor.u32 %v1187, %v1188
      %v1190 = vshll.u32 920167782, %v1175
      %v1191 = vshrl.u32 1326507024, %v1176
      %v1192 = vor.u32 %v1190, %v1191
      %vm1193 = vcmp.lt.s32.totalorder %v1174, 1
      %vm1194 = vcmp.lt.s32.totalorder %v1174, 2
      %vm1195 = vcmp.lt.s32.totalorder %v1174, 3
      %vm1196 = vcmp.lt.s32.totalorder %v1174, 4
      %v1197 = vsel %vm1193, %v1177, %v1180
      %v1198 = vsel %vm1196, %v1186, 2102212464
      %v1199 = vsel %vm1195, %v1183, %v1198
      %v1200 = vsel %vm1194, %v1197, %v1199
      %v1201 = vsel %vm1193, %v1180, %v1183
      %v1202 = vsel %vm1196, %v1189, 920167782
      %v1203 = vsel %vm1195, %v1186, %v1202
      %v1204 = vsel %vm1194, %v1201, %v1203
      %v1205 = vsel %vm1193, %v1183, %v1186
      %v1206 = vsel %vm1196, %v1192, 1326507024
      %v1207 = vsel %vm1195, %v1189, %v1206
      %v1208 = vsel %vm1194, %v1205, %v1207
      %v1209 = vshll.u32 %v1169, 8
      %v1210 = vmul.u32.u64.compose %v1209, %v1208
      %v1211 = vextract.low.u32 %v1210
      %v1212 = vextract.high.u32 %v1210
      %v1213 = vmul.u32.u64.compose %v1209, %v1204
      %v1214 = vextract.low.u32 %v1213
      %v1215 = vextract.high.u32 %v1213
      %v1216 = vmul.u32 %v1209, %v1200
      %v1217 = vadd.s32 %v1212, %v1214
      %vm1218 = vc.u32 %v1212, %v1214
      %v1219 = vadd.s32 %v1215, 1
      %v1220 = vsel %vm1218, %v1219, %v1215
      %v1221 = vadd.s32 %v1216, %v1220
      %v1222 = vadd.s32 %v1221, 536870912
      %v1223 = vshrl.u32 %v1222, 30
      %v1224 = vshll.u32 %v1223, 30
      %v1225 = vsub.s32 %v1221, %v1224
      %vm1226 = vcmp.lt.s32.totalorder %v1225, 0
      %v1227 = vsub.s32 0, %v1225
      %v1228 = vsel %vm1226, %v1227, %v1225
      %v1229 = vclz %v1228
      %v1230 = vsub.s32 %v1229, 2
      %vm1231 = vcmp.gt.s32.totalorder 0, %v1230
      %v1232 = vsel %vm1231, 0, %v1230
      %v1233 = vsub.s32 32, %v1232
      %v1234 = vshll.u32 %v1225, %v1232
      %v1235 = vshrl.u32 %v1217, %v1233
      %v1236 = vor.u32 %v1234, %v1235
      %v1237 = vsub.s32 4294967266, %v1232
      %v1238 = vadd.s32 %v1237, 127
      %v1239 = vshll.u32 %v1238, 23
      %v1240 = vor.u32 4788187, %v1239
      %v1241 = vand.u32 2147483647, %v1240
      %v1243 = vcvt.s32.f32 %v1236
      %v1244 = vmul.f32 %v1243, %v1241
      %v1245 = vxor.u32 %v1244, 2147483648
      %v1246 = vsel %vm1163, %v1245, %v1244
      %v1247 = vsub.s32 4, %v1223
      %v1248 = vsel %vm1163, %v1247, %v1223
      %v1249 = vsel %vm1162, %v953, %v1246
      %v1250 = vsel %vm1162, 0, %v1248
      %v1251 = vcosq.f32.pop %v1249
      %v1252 = vsinq.f32.pop %v1249
      %vm1253 = vweird.f32 %v953
      %v1254 = vadd.s32 %v1250, 3
      %v1255 = vand.u32 %v1254, 3
      %vm1256 = vcmp.lt.s32.totalorder %v1255, 2
      %vm1257 = vcmp.eq.s32.totalorder %v1255, 0
      %v1258 = vxor.u32 %v1252, 2147483648
      %v1259 = vsel %vm1257, %v1251, %v1258
      %vm1260 = vcmp.eq.s32.totalorder %v1255, 2
      %v1261 = vxor.u32 %v1251, 2147483648
      %v1262 = vsel %vm1260, %v1261, %v1252
      %v1263 = vsel %vm1256, %v1259, %v1262
      %v1264 = vsel %vm1253, nan, %v1263
      %v1265 = vand.u32 2147483647, %v954
      %vm1266 = vcmp.le.f32.partialorder %v1265, 0.7853982
      %vm1267 = vcmp.lt.s32.totalorder %v954, 0
      %v1268 = vand.u32 %v954, 2139095040
      %v1269 = vshrl.u32 %v1268, 23
      %v1270 = vsub.s32 %v1269, 127
      %v1271 = vand.u32 2147483647, %v954
      %v1272 = vand.u32 %v1271, 8388607
      %v1273 = vor.u32 %v1272, 8388608
      %v1274 = vsub.s32 0, %v1273
      %v1275 = vadd.s32 %v1270, 1
      %vm1276 = vcmp.gt.s32.totalorder %v1275, 0
      %v1277 = vsel %vm1276, %v1275, 0
      %v1278 = vshrl.u32 %v1277, 5
      %v1279 = vand.u32 %v1277, 31
      %v1280 = vsub.s32 32, %v1279
      %v1281 = vshrl.u32 683565275, %v1280
      %v1282 = vshll.u32 683565275, %v1279
      %v1283 = vshrl.u32 2475754826, %v1280
      %v1284 = vor.u32 %v1282, %v1283
      %v1285 = vshll.u32 2475754826, %v1279
      %v1286 = vshrl.u32 2131351028, %v1280
      %v1287 = vor.u32 %v1285, %v1286
      %v1288 = vshll.u32 2131351028, %v1279
      %v1289 = vshrl.u32 2102212464, %v1280
      %v1290 = vor.u32 %v1288, %v1289
      %v1291 = vshll.u32 2102212464, %v1279
      %v1292 = vshrl.u32 920167782, %v1280
      %v1293 = vor.u32 %v1291, %v1292
      %v1294 = vshll.u32 920167782, %v1279
      %v1295 = vshrl.u32 1326507024, %v1280
      %v1296 = vor.u32 %v1294, %v1295
      %vm1297 = vcmp.lt.s32.totalorder %v1278, 1
      %vm1298 = vcmp.lt.s32.totalorder %v1278, 2
      %vm1299 = vcmp.lt.s32.totalorder %v1278, 3
      %vm1300 = vcmp.lt.s32.totalorder %v1278, 4
      %v1301 = vsel %vm1297, %v1281, %v1284
      %v1302 = vsel %vm1300, %v1290, 2102212464
      %v1303 = vsel %vm1299, %v1287, %v1302
      %v1304 = vsel %vm1298, %v1301, %v1303
      %v1305 = vsel %vm1297, %v1284, %v1287
      %v1306 = vsel %vm1300, %v1293, 920167782
      %v1307 = vsel %vm1299, %v1290, %v1306
      %v1308 = vsel %vm1298, %v1305, %v1307
      %v1309 = vsel %vm1297, %v1287, %v1290
      %v1310 = vsel %vm1300, %v1296, 1326507024
      %v1311 = vsel %vm1299, %v1293, %v1310
      %v1312 = vsel %vm1298, %v1309, %v1311
      %v1313 = vshll.u32 %v1273, 8
      %v1314 = vmul.u32.u64.compose %v1313, %v1312
      %v1315 = vextract.low.u32 %v1314
      %v1316 = vextract.high.u32 %v1314
      %v1317 = vmul.u32.u64.compose %v1313, %v1308
      %v1318 = vextract.low.u32 %v1317
      %v1319 = vextract.high.u32 %v1317
      %v1320 = vmul.u32 %v1313, %v1304
      %v1321 = vadd.s32 %v1316, %v1318
      %vm1322 = vc.u32 %v1316, %v1318
      %v1323 = vadd.s32 %v1319, 1
      %v1324 = vsel %vm1322, %v1323, %v1319
      %v1325 = vadd.s32 %v1320, %v1324
      %v1326 = vadd.s32 %v1325, 536870912
      %v1327 = vshrl.u32 %v1326, 30
      %v1328 = vshll.u32 %v1327, 30
      %v1329 = vsub.s32 %v1325, %v1328
      %vm1330 = vcmp.lt.s32.totalorder %v1329, 0
      %v1331 = vsub.s32 0, %v1329
      %v1332 = vsel %vm1330, %v1331, %v1329
      %v1333 = vclz %v1332
      %v1334 = vsub.s32 %v1333, 2
      %vm1335 = vcmp.gt.s32.totalorder 0, %v1334
      %v1336 = vsel %vm1335, 0, %v1334
      %v1337 = vsub.s32 32, %v1336
      %v1338 = vshll.u32 %v1329, %v1336
      %v1339 = vshrl.u32 %v1321, %v1337
      %v1340 = vor.u32 %v1338, %v1339
      %v1341 = vsub.s32 4294967266, %v1336
      %v1342 = vadd.s32 %v1341, 127
      %v1343 = vshll.u32 %v1342, 23
      %v1344 = vor.u32 4788187, %v1343
      %v1345 = vand.u32 2147483647, %v1344
      %v1347 = vcvt.s32.f32 %v1340
      %v1348 = vmul.f32 %v1347, %v1345
      %v1349 = vxor.u32 %v1348, 2147483648
      %v1350 = vsel %vm1267, %v1349, %v1348
      %v1351 = vsub.s32 4, %v1327
      %v1352 = vsel %vm1267, %v1351, %v1327
      %v1353 = vsel %vm1266, %v954, %v1350
      %v1354 = vsel %vm1266, 0, %v1352
      %v1355 = vcosq.f32.pop %v1353
      %v1356 = vsinq.f32.pop %v1353
      %vm1357 = vweird.f32 %v954
      %v1358 = vadd.s32 %v1354, 3
      %v1359 = vand.u32 %v1358, 3
      %vm1360 = vcmp.lt.s32.totalorder %v1359, 2
      %vm1361 = vcmp.eq.s32.totalorder %v1359, 0
      %v1362 = vxor.u32 %v1356, 2147483648
      %v1363 = vsel %vm1361, %v1355, %v1362
      %vm1364 = vcmp.eq.s32.totalorder %v1359, 2
      %v1365 = vxor.u32 %v1355, 2147483648
      %v1366 = vsel %vm1364, %v1365, %v1356
      %v1367 = vsel %vm1360, %v1363, %v1366
      %v1368 = vsel %vm1357, nan, %v1367
      %1371 = vrot.lane.b32.xlu0 %v1057, 120
      %v1372 = vpop.permute.xlu0 %1371
      %1373 = vrot.lane.b32.xlu0 %v1160, 120
      %v1374 = vpop.permute.xlu0 %1373
      %1377 = vrot.lane.b32.xlu0 %v1057, 112
      %v1378 = vpop.permute.xlu0 %1377
      %1379 = vrot.lane.b32.xlu0 %v1160, 112
      %v1380 = vpop.permute.xlu0 %1379
      %1383 = vrot.lane.b32.xlu0 %v1057, 104
      %v1384 = vpop.permute.xlu0 %1383
      %1385 = vrot.lane.b32.xlu0 %v1160, 104
      %v1386 = vpop.permute.xlu0 %1385
      %1391 = vrot.lane.b32.xlu0 %v1264, 120
      %v1392 = vpop.permute.xlu0 %1391
      %1393 = vrot.lane.b32.xlu0 %v1368, 120
      %v1394 = vpop.permute.xlu0 %1393
      %1395 = vrot.lane.b32.xlu0 %v1264, 112
      %v1396 = vpop.permute.xlu0 %1395
      %1397 = vrot.lane.b32.xlu0 %v1368, 112
      %v1398 = vpop.permute.xlu0 %1397
      %1399 = vrot.lane.b32.xlu0 %v1264, 104
      %v1400 = vpop.permute.xlu0 %1399
      %1401 = vrot.lane.b32.xlu0 %v1368, 104
      %v1402 = vpop.permute.xlu0 %1401
      %v1403 = vld [vmem:[%s876] sm:$0xff]
      %v1404 = vld [vmem:[%s876 + $0x8] sm:$0xff]
      %v1405 = vpack.c.bf16 %v1404, %v1403
      %v1406 = vld [vmem:[%s6] sm:$0xf]
      %v1407 = vld [vmem:[%s7] sm:$0x1]
      %v1409 = vlaneseq
      %v1410 = vshrl.u32 %v1409, 7
      %v1411 = vsub.s32 0, %v1410
      %v1412 = vrot.slane %v1407, %v1411
      %vm1414 = vcmask 64512
      %v1416 = vsel %vm1414, %v1405, 0
      %vm1418 = vcmask 1043456
      %v1420 = vsel %vm1418, %v1406, 0
      %1422 = vmatprep.subr.bf16.mxu0 0
      %1423 = vmatpush1.bf16.msra.mxu0 %v1420
      %1424 = vmatprep.subr.bf16.mxu0 0
      %1425 = vmatpush1.bf16.msra.mxu0 0
      %1426 = vmatprep.subr.bf16.mxu0 0
      %1427 = vmatpush1.bf16.msra.mxu0 0
      %1428 = vmatprep.subr.bf16.mxu0 0
      %1429 = vmatpush1.bf16.msra.mxu0 0
      %1430 = vmatprep.subr.bf16.mxu0 0
      %1431 = vmatpush1.bf16.msra.mxu0 0
      %1432 = vmatprep.subr.bf16.mxu0 0
      %1433 = vmatpush1.bf16.msra.mxu0 0
      %1434 = vmatprep.subr.bf16.mxu0 0
      %1435 = vmatpush1.bf16.msra.mxu0 0
      %1436 = vmatprep.subr.bf16.mxu0 0
      %1437 = vmatpush1.bf16.msra.mxu0 0
      %1438 = vmatprep.subr.bf16.mxu0 0
      %1439 = vmatpush1.bf16.msra.mxu0 0
      %1440 = vmatprep.subr.bf16.mxu0 0
      %1441 = vmatpush1.bf16.msra.mxu0 0
      %1442 = vmatprep.subr.bf16.mxu0 0
      %1443 = vmatpush1.bf16.msra.mxu0 0
      %1444 = vmatprep.subr.bf16.mxu0 0
      %1445 = vmatpush1.bf16.msra.mxu0 0
      %1446 = vmatprep.subr.bf16.mxu0 0
      %1447 = vmatpush1.bf16.msra.mxu0 0
      %1448 = vmatprep.subr.bf16.mxu0 0
      %1449 = vmatpush1.bf16.msra.mxu0 0
      %1450 = vmatprep.subr.bf16.mxu0 0
      %1451 = vmatpush1.bf16.msra.mxu0 0
      %1452 = vmatprep.subr.bf16.mxu0 0
      %1453 = vmatpush1.bf16.msra.mxu0 0
      %1454 = vmatprep.mubr.bf16.mxu0 0
      %1455 = vmatmul.mubr.bf16.gmra.mrb[0].mxu0 %v1416
      %v1456 = vpop.f32.mrb[0].mxu0
      %v1457 = vadd.f32 %v1412, %v1456
      %v1458 = vpop.f32.mrb[0].mxu0
      %v1459 = vpop.f32.mrb[0].mxu0
      %v1460 = vadd.f32 %v1412, %v1459
      %v1461 = vpop.f32.mrb[0].mxu0
      %1462 = vdwg.mxu0
      loop: start=0, step=1, limit=2
      $region125: #{thdroformer_self.1} parent=123 // loop_pre_header
        _
      $region126: #{thdroformer_self.1} parent=123 // loop_header
        %s1464 = sphi 0, %s1468
        %p1465 = scmp.ge.s32.totalorder %s1464, 2
        %v1469 = vphi %v1457, %v2843
        %v1470 = vphi %v1460, %v2844
      $region127: #{thdroformer_self.1} parent=123 // loop_header_branch
        %1467 = sbr.rel (%p1465) target = $region131
      $region128: #{thdroformer_self.1} parent=123 // loop_body
        %v1471 = vpack.c.bf16 %v1470, %v1469
        %s1472 = smul.u32 %s1464, 4
        %s1473 = smul.addr %s1472, 4
        %s1474 = scalar_lea.vmem %s10, %s1473
        %v1475 = vld [vmem:[%s1474] sm:$0xf]
        %v1476 = vld [vmem:[%s1474 + $0x4] sm:$0xf]
        %v1477 = vld [vmem:[%s1474 + $0x8] sm:$0xf]
        %v1478 = vld [vmem:[%s1474 + $0xc] sm:$0xf]
        %s1479 = scalar_lea.vmem %s11, %s1464
        %v1480 = vld [vmem:[%s1479] sm:$0x1]
        %v1482 = vlaneseq
        %v1483 = vshrl.u32 %v1482, 7
        %v1484 = vsub.s32 0, %v1483
        %v1485 = vrot.slane %v1480, %v1484
        %v1491 = vunpack.c.l.b16 %v1475
        %v1492 = vunpack.c.l.b16 %v1476
        %v1493 = vunpack.c.l.b16 %v1477
        %v1494 = vunpack.c.l.b16 %v1478
        %v1495 = vpack.c.b16 %v1492, %v1491
        %v1496 = vpack.c.b16 %v1494, %v1493
        %vm1499 = vcmask 261120
        %v1501 = vsel %vm1499, %v1471, 0
        %1503 = vmatprep.subr.bf16.mxu0 0
        %1504 = vmatpush1.bf16.msra.mxu0 %v1495
        %1505 = vmatprep.subr.bf16.mxu0 0
        %1506 = vmatpush1.bf16.msra.mxu0 %v1496
        %1507 = vmatprep.subr.bf16.mxu0 0
        %1508 = vmatpush1.bf16.msra.mxu0 0
        %1509 = vmatprep.subr.bf16.mxu0 0
        %1510 = vmatpush1.bf16.msra.mxu0 0
        %1511 = vmatprep.subr.bf16.mxu0 0
        %1512 = vmatpush1.bf16.msra.mxu0 0
        %1513 = vmatprep.subr.bf16.mxu0 0
        %1514 = vmatpush1.bf16.msra.mxu0 0
        %1515 = vmatprep.subr.bf16.mxu0 0
        %1516 = vmatpush1.bf16.msra.mxu0 0
        %1517 = vmatprep.subr.bf16.mxu0 0
        %1518 = vmatpush1.bf16.msra.mxu0 0
        %1519 = vmatprep.subr.bf16.mxu0 0
        %1520 = vmatpush1.bf16.msra.mxu0 0
        %1521 = vmatprep.subr.bf16.mxu0 0
        %1522 = vmatpush1.bf16.msra.mxu0 0
        %1523 = vmatprep.subr.bf16.mxu0 0
        %1524 = vmatpush1.bf16.msra.mxu0 0
        %1525 = vmatprep.subr.bf16.mxu0 0
        %1526 = vmatpush1.bf16.msra.mxu0 0
        %1527 = vmatprep.subr.bf16.mxu0 0
        %1528 = vmatpush1.bf16.msra.mxu0 0
        %1529 = vmatprep.subr.bf16.mxu0 0
        %1530 = vmatpush1.bf16.msra.mxu0 0
        %1531 = vmatprep.subr.bf16.mxu0 0
        %1532 = vmatpush1.bf16.msra.mxu0 0
        %1533 = vmatprep.subr.bf16.mxu0 0
        %1534 = vmatpush1.bf16.msra.mxu0 0
        %1535 = vmatprep.mubr.bf16.mxu0 0
        %1536 = vmatmul.mubr.bf16.gmra.mrb[0].mxu0 %v1501
        %v1537 = vpop.f32.mrb[0].mxu0
        %v1538 = vadd.f32 %v1485, %v1537
        %v1539 = vpop.f32.mrb[0].mxu0
        %v1540 = vpop.f32.mrb[0].mxu0
        %v1541 = vadd.f32 %v1485, %v1540
        %v1542 = vpop.f32.mrb[0].mxu0
        %1543 = vdwg.mxu0
        %s1544 = smul.addr %s1472, 4
        %s1545 = scalar_lea.vmem %s12, %s1544
        %v1546 = vld [vmem:[%s1545] sm:$0xf]
        %v1547 = vld [vmem:[%s1545 + $0x4] sm:$0xf]
        %v1548 = vld [vmem:[%s1545 + $0x8] sm:$0xf]
        %v1549 = vld [vmem:[%s1545 + $0xc] sm:$0xf]
        %s1550 = scalar_lea.vmem %s13, %s1464
        %v1551 = vld [vmem:[%s1550] sm:$0x1]
        %v1553 = vlaneseq
        %v1554 = vshrl.u32 %v1553, 7
        %v1555 = vsub.s32 0, %v1554
        %v1556 = vrot.slane %v1551, %v1555
        %v1562 = vunpack.c.l.b16 %v1546
        %v1563 = vunpack.c.l.b16 %v1547
        %v1564 = vunpack.c.l.b16 %v1548
        %v1565 = vunpack.c.l.b16 %v1549
        %v1566 = vpack.c.b16 %v1563, %v1562
        %v1567 = vpack.c.b16 %v1565, %v1564
        %1570 = vmatprep.subr.bf16.mxu0 0
        %1571 = vmatpush1.bf16.msra.mxu0 %v1566
        %1572 = vmatprep.subr.bf16.mxu0 0
        %1573 = vmatpush1.bf16.msra.mxu0 %v1567
        %1574 = vmatprep.subr.bf16.mxu0 0
        %1575 = vmatpush1.bf16.msra.mxu0 0
        %1576 = vmatprep.subr.bf16.mxu0 0
        %1577 = vmatpush1.bf16.msra.mxu0 0
        %1578 = vmatprep.subr.bf16.mxu0 0
        %1579 = vmatpush1.bf16.msra.mxu0 0
        %1580 = vmatprep.subr.bf16.mxu0 0
        %1581 = vmatpush1.bf16.msra.mxu0 0
        %1582 = vmatprep.subr.bf16.mxu0 0
        %1583 = vmatpush1.bf16.msra.mxu0 0
        %1584 = vmatprep.subr.bf16.mxu0 0
        %1585 = vmatpush1.bf16.msra.mxu0 0
        %1586 = vmatprep.subr.bf16.mxu0 0
        %1587 = vmatpush1.bf16.msra.mxu0 0
        %1588 = vmatprep.subr.bf16.mxu0 0
        %1589 = vmatpush1.bf16.msra.mxu0 0
        %1590 = vmatprep.subr.bf16.mxu0 0
        %1591 = vmatpush1.bf16.msra.mxu0 0
        %1592 = vmatprep.subr.bf16.mxu0 0
        %1593 = vmatpush1.bf16.msra.mxu0 0
        %1594 = vmatprep.subr.bf16.mxu0 0
        %1595 = vmatpush1.bf16.msra.mxu0 0
        %1596 = vmatprep.subr.bf16.mxu0 0
        %1597 = vmatpush1.bf16.msra.mxu0 0
        %1598 = vmatprep.subr.bf16.mxu0 0
        %1599 = vmatpush1.bf16.msra.mxu0 0
        %1600 = vmatprep.subr.bf16.mxu0 0
        %1601 = vmatpush1.bf16.msra.mxu0 0
        %1602 = vmatprep.mubr.bf16.mxu0 0
        %1603 = vmatmul.mubr.bf16.gmra.mrb[0].mxu0 %v1501
        %v1604 = vpop.f32.mrb[0].mxu0
        %v1605 = vadd.f32 %v1556, %v1604
        %v1606 = vpop.f32.mrb[0].mxu0
        %v1607 = vpop.f32.mrb[0].mxu0
        %v1608 = vadd.f32 %v1556, %v1607
        %v1609 = vpop.f32.mrb[0].mxu0
        %1610 = vdwg.mxu0
        %s1611 = smul.addr %s1472, 4
        %s1612 = scalar_lea.vmem %s14, %s1611
        %v1613 = vld [vmem:[%s1612] sm:$0xf]
        %v1614 = vld [vmem:[%s1612 + $0x4] sm:$0xf]
        %v1615 = vld [vmem:[%s1612 + $0x8] sm:$0xf]
        %v1616 = vld [vmem:[%s1612 + $0xc] sm:$0xf]
        %s1617 = scalar_lea.vmem %s15, %s1464
        %v1618 = vld [vmem:[%s1617] sm:$0x1]
        %v1620 = vlaneseq
        %v1621 = vshrl.u32 %v1620, 7
        %v1622 = vsub.s32 0, %v1621
        %v1623 = vrot.slane %v1618, %v1622
        %v1629 = vunpack.c.l.b16 %v1613
        %v1630 = vunpack.c.l.b16 %v1614
        %v1631 = vunpack.c.l.b16 %v1615
        %v1632 = vunpack.c.l.b16 %v1616
        %v1633 = vpack.c.b16 %v1630, %v1629
        %v1634 = vpack.c.b16 %v1632, %v1631
        %1637 = vmatprep.subr.bf16.mxu0 0
        %1638 = vmatpush1.bf16.msra.mxu0 %v1633
        %1639 = vmatprep.subr.bf16.mxu0 0
        %1640 = vmatpush1.bf16.msra.mxu0 %v1634
        %1641 = vmatprep.subr.bf16.mxu0 0
        %1642 = vmatpush1.bf16.msra.mxu0 0
        %1643 = vmatprep.subr.bf16.mxu0 0
        %1644 = vmatpush1.bf16.msra.mxu0 0
        %1645 = vmatprep.subr.bf16.mxu0 0
        %1646 = vmatpush1.bf16.msra.mxu0 0
        %1647 = vmatprep.subr.bf16.mxu0 0
        %1648 = vmatpush1.bf16.msra.mxu0 0
        %1649 = vmatprep.subr.bf16.mxu0 0
        %1650 = vmatpush1.bf16.msra.mxu0 0
        %1651 = vmatprep.subr.bf16.mxu0 0
        %1652 = vmatpush1.bf16.msra.mxu0 0
        %1653 = vmatprep.subr.bf16.mxu0 0
        %1654 = vmatpush1.bf16.msra.mxu0 0
        %1655 = vmatprep.subr.bf16.mxu0 0
        %1656 = vmatpush1.bf16.msra.mxu0 0
        %1657 = vmatprep.subr.bf16.mxu0 0
        %1658 = vmatpush1.bf16.msra.mxu0 0
        %1659 = vmatprep.subr.bf16.mxu0 0
        %1660 = vmatpush1.bf16.msra.mxu0 0
        %1661 = vmatprep.subr.bf16.mxu0 0
        %1662 = vmatpush1.bf16.msra.mxu0 0
        %1663 = vmatprep.subr.bf16.mxu0 0
        %1664 = vmatpush1.bf16.msra.mxu0 0
        %1665 = vmatprep.subr.bf16.mxu0 0
        %1666 = vmatpush1.bf16.msra.mxu0 0
        %1667 = vmatprep.subr.bf16.mxu0 0
        %1668 = vmatpush1.bf16.msra.mxu0 0
        %1669 = vmatprep.mubr.bf16.mxu0 0
        %1670 = vmatmul.mubr.bf16.gmra.mrb[0].mxu0 %v1501
        %v1671 = vpop.f32.mrb[0].mxu0
        %v1672 = vadd.f32 %v1623, %v1671
        %v1673 = vpop.f32.mrb[0].mxu0
        %v1674 = vpop.f32.mrb[0].mxu0
        %v1675 = vadd.f32 %v1623, %v1674
        %v1676 = vpop.f32.mrb[0].mxu0
        %1677 = vdwg.mxu0
        %1680 = vrot.lane.b32.xlu0 %v1538, 120
        %v1681 = vpop.permute.xlu0 %1680
        %1682 = vrot.lane.b32.xlu0 %v1541, 120
        %v1683 = vpop.permute.xlu0 %1682
        %1686 = vrot.lane.b32.xlu0 %v1538, 112
        %v1687 = vpop.permute.xlu0 %1686
        %1688 = vrot.lane.b32.xlu0 %v1541, 112
        %v1689 = vpop.permute.xlu0 %1688
        %1692 = vrot.lane.b32.xlu0 %v1538, 104
        %v1693 = vpop.permute.xlu0 %1692
        %1694 = vrot.lane.b32.xlu0 %v1541, 104
        %v1695 = vpop.permute.xlu0 %1694
        %v1698 = vmul.f32 %v1538, %v1057
        %v1699 = vmul.f32 %v1541, %v1160
        %v1700 = vmul.f32 %v1681, %v1372
        %v1701 = vmul.f32 %v1683, %v1374
        %v1702 = vmul.f32 %v1687, %v1378
        %v1703 = vmul.f32 %v1689, %v1380
        %v1704 = vmul.f32 %v1693, %v1384
        %v1705 = vmul.f32 %v1695, %v1386
        %1706 = vrot.lane.b32.xlu0 %v1264, 4
        %v1707 = vpop.permute.xlu0 %1706
        %1708 = vrot.lane.b32.xlu0 %v1368, 4
        %v1709 = vpop.permute.xlu0 %1708
        %1710 = vrot.lane.b32.xlu0 %v1392, 4
        %v1711 = vpop.permute.xlu0 %1710
        %1712 = vrot.lane.b32.xlu0 %v1394, 4
        %v1713 = vpop.permute.xlu0 %1712
        %1714 = vrot.lane.b32.xlu0 %v1396, 4
        %v1715 = vpop.permute.xlu0 %1714
        %1716 = vrot.lane.b32.xlu0 %v1398, 4
        %v1717 = vpop.permute.xlu0 %1716
        %1718 = vrot.lane.b32.xlu0 %v1400, 4
        %v1719 = vpop.permute.xlu0 %1718
        %1720 = vrot.lane.b32.xlu0 %v1402, 4
        %v1721 = vpop.permute.xlu0 %1720
        %v1730 = vmul.f32 %v1538, %v1707
        %v1731 = vmul.f32 %v1541, %v1709
        %v1732 = vmul.f32 %v1681, %v1711
        %v1733 = vmul.f32 %v1683, %v1713
        %v1734 = vmul.f32 %v1687, %v1715
        %v1735 = vmul.f32 %v1689, %v1717
        %v1736 = vmul.f32 %v1693, %v1719
        %v1737 = vmul.f32 %v1695, %v1721
        %1746 = vrot.lane.b32.xlu0 %v1730, 124
        %v1747 = vpop.permute.xlu0 %1746
        %1748 = vrot.lane.b32.xlu0 %v1731, 124
        %v1749 = vpop.permute.xlu0 %1748
        %1750 = vrot.lane.b32.xlu0 %v1732, 124
        %v1751 = vpop.permute.xlu0 %1750
        %1752 = vrot.lane.b32.xlu0 %v1733, 124
        %v1753 = vpop.permute.xlu0 %1752
        %1754 = vrot.lane.b32.xlu0 %v1734, 124
        %v1755 = vpop.permute.xlu0 %1754
        %1756 = vrot.lane.b32.xlu0 %v1735, 124
        %v1757 = vpop.permute.xlu0 %1756
        %1758 = vrot.lane.b32.xlu0 %v1736, 124
        %v1759 = vpop.permute.xlu0 %1758
        %1760 = vrot.lane.b32.xlu0 %v1737, 124
        %v1761 = vpop.permute.xlu0 %1760
        %v1770 = vsub.f32 %v1698, %v1747
        %v1771 = vsub.f32 %v1699, %v1749
        %v1772 = vsub.f32 %v1700, %v1751
        %v1773 = vsub.f32 %v1701, %v1753
        %v1774 = vsub.f32 %v1702, %v1755
        %v1775 = vsub.f32 %v1703, %v1757
        %v1776 = vsub.f32 %v1704, %v1759
        %v1777 = vsub.f32 %v1705, %v1761
        %1778 = vrot.lane.b32.xlu0 %v1264, 124
        %v1779 = vpop.permute.xlu0 %1778
        %1780 = vrot.lane.b32.xlu0 %v1368, 124
        %v1781 = vpop.permute.xlu0 %1780
        %1782 = vrot.lane.b32.xlu0 %v1392, 124
        %v1783 = vpop.permute.xlu0 %1782
        %1784 = vrot.lane.b32.xlu0 %v1394, 124
        %v1785 = vpop.permute.xlu0 %1784
        %1786 = vrot.lane.b32.xlu0 %v1396, 124
        %v1787 = vpop.permute.xlu0 %1786
        %1788 = vrot.lane.b32.xlu0 %v1398, 124
        %v1789 = vpop.permute.xlu0 %1788
        %1790 = vrot.lane.b32.xlu0 %v1400, 124
        %v1791 = vpop.permute.xlu0 %1790
        %1792 = vrot.lane.b32.xlu0 %v1402, 124
        %v1793 = vpop.permute.xlu0 %1792
        %v1802 = vmul.f32 %v1538, %v1779
        %v1803 = vmul.f32 %v1541, %v1781
        %v1804 = vmul.f32 %v1681, %v1783
        %v1805 = vmul.f32 %v1683, %v1785
        %v1806 = vmul.f32 %v1687, %v1787
        %v1807 = vmul.f32 %v1689, %v1789
        %v1808 = vmul.f32 %v1693, %v1791
        %v1809 = vmul.f32 %v1695, %v1793
        %1818 = vrot.lane.b32.xlu0 %v1802, 4
        %v1819 = vpop.permute.xlu0 %1818
        %1820 = vrot.lane.b32.xlu0 %v1803, 4
        %v1821 = vpop.permute.xlu0 %1820
        %1822 = vrot.lane.b32.xlu0 %v1804, 4
        %v1823 = vpop.permute.xlu0 %1822
        %1824 = vrot.lane.b32.xlu0 %v1805, 4
        %v1825 = vpop.permute.xlu0 %1824
        %1826 = vrot.lane.b32.xlu0 %v1806, 4
        %v1827 = vpop.permute.xlu0 %1826
        %1828 = vrot.lane.b32.xlu0 %v1807, 4
        %v1829 = vpop.permute.xlu0 %1828
        %1830 = vrot.lane.b32.xlu0 %v1808, 4
        %v1831 = vpop.permute.xlu0 %1830
        %1832 = vrot.lane.b32.xlu0 %v1809, 4
        %v1833 = vpop.permute.xlu0 %1832
        %v1842 = vadd.f32 %v1698, %v1819
        %v1843 = vadd.f32 %v1699, %v1821
        %v1844 = vadd.f32 %v1700, %v1823
        %v1845 = vadd.f32 %v1701, %v1825
        %v1846 = vadd.f32 %v1702, %v1827
        %v1847 = vadd.f32 %v1703, %v1829
        %v1848 = vadd.f32 %v1704, %v1831
        %v1849 = vadd.f32 %v1705, %v1833
        %vm1850 = vcmask 31744
        %v1851 = vsel %vm1850, %v1770, %v1842
        %v1852 = vsel %vm1850, %v1771, %v1843
        %v1853 = vsel %vm1850, %v1772, %v1844
        %v1854 = vsel %vm1850, %v1773, %v1845
        %v1855 = vsel %vm1850, %v1774, %v1846
        %v1856 = vsel %vm1850, %v1775, %v1847
        %v1857 = vsel %vm1850, %v1776, %v1848
        %v1858 = vsel %vm1850, %v1777, %v1849
        %v1859 = vpack.c.bf16 %v1852, %v1851
        %v1860 = vpack.c.bf16 %v1854, %v1853
        %v1861 = vpack.c.bf16 %v1856, %v1855
        %v1862 = vpack.c.bf16 %v1858, %v1857
        %1865 = vrot.lane.b32.xlu0 %v1605, 120
        %v1866 = vpop.permute.xlu0 %1865
        %1867 = vrot.lane.b32.xlu0 %v1608, 120
        %v1868 = vpop.permute.xlu0 %1867
        %1871 = vrot.lane.b32.xlu0 %v1605, 112
        %v1872 = vpop.permute.xlu0 %1871
        %1873 = vrot.lane.b32.xlu0 %v1608, 112
        %v1874 = vpop.permute.xlu0 %1873
        %1877 = vrot.lane.b32.xlu0 %v1605, 104
        %v1878 = vpop.permute.xlu0 %1877
        %1879 = vrot.lane.b32.xlu0 %v1608, 104
        %v1880 = vpop.permute.xlu0 %1879
        %v1883 = vmul.f32 %v1605, %v1057
        %v1884 = vmul.f32 %v1608, %v1160
        %v1885 = vmul.f32 %v1866, %v1372
        %v1886 = vmul.f32 %v1868, %v1374
        %v1887 = vmul.f32 %v1872, %v1378
        %v1888 = vmul.f32 %v1874, %v1380
        %v1889 = vmul.f32 %v1878, %v1384
        %v1890 = vmul.f32 %v1880, %v1386
        %v1891 = vmul.f32 %v1605, %v1707
        %v1892 = vmul.f32 %v1608, %v1709
        %v1893 = vmul.f32 %v1866, %v1711
        %v1894 = vmul.f32 %v1868, %v1713
        %v1895 = vmul.f32 %v1872, %v1715
        %v1896 = vmul.f32 %v1874, %v1717
        %v1897 = vmul.f32 %v1878, %v1719
        %v1898 = vmul.f32 %v1880, %v1721
        %1907 = vrot.lane.b32.xlu0 %v1891, 124
        %v1908 = vpop.permute.xlu0 %1907
        %1909 = vrot.lane.b32.xlu0 %v1892, 124
        %v1910 = vpop.permute.xlu0 %1909
        %1911 = vrot.lane.b32.xlu0 %v1893, 124
        %v1912 = vpop.permute.xlu0 %1911
        %1913 = vrot.lane.b32.xlu0 %v1894, 124
        %v1914 = vpop.permute.xlu0 %1913
        %1915 = vrot.lane.b32.xlu0 %v1895, 124
        %v1916 = vpop.permute.xlu0 %1915
        %1917 = vrot.lane.b32.xlu0 %v1896, 124
        %v1918 = vpop.permute.xlu0 %1917
        %1919 = vrot.lane.b32.xlu0 %v1897, 124
        %v1920 = vpop.permute.xlu0 %1919
        %1921 = vrot.lane.b32.xlu0 %v1898, 124
        %v1922 = vpop.permute.xlu0 %1921
        %v1931 = vsub.f32 %v1883, %v1908
        %v1932 = vsub.f32 %v1884, %v1910
        %v1933 = vsub.f32 %v1885, %v1912
        %v1934 = vsub.f32 %v1886, %v1914
        %v1935 = vsub.f32 %v1887, %v1916
        %v1936 = vsub.f32 %v1888, %v1918
        %v1937 = vsub.f32 %v1889, %v1920
        %v1938 = vsub.f32 %v1890, %v1922
        %v1939 = vmul.f32 %v1605, %v1779
        %v1940 = vmul.f32 %v1608, %v1781
        %v1941 = vmul.f32 %v1866, %v1783
        %v1942 = vmul.f32 %v1868, %v1785
        %v1943 = vmul.f32 %v1872, %v1787
        %v1944 = vmul.f32 %v1874, %v1789
        %v1945 = vmul.f32 %v1878, %v1791
        %v1946 = vmul.f32 %v1880, %v1793
        %1955 = vrot.lane.b32.xlu0 %v1939, 4
        %v1956 = vpop.permute.xlu0 %1955
        %1957 = vrot.lane.b32.xlu0 %v1940, 4
        %v1958 = vpop.permute.xlu0 %1957
        %1959 = vrot.lane.b32.xlu0 %v1941, 4
        %v1960 = vpop.permute.xlu0 %1959
        %1961 = vrot.lane.b32.xlu0 %v1942, 4
        %v1962 = vpop.permute.xlu0 %1961
        %1963 = vrot.lane.b32.xlu0 %v1943, 4
        %v1964 = vpop.permute.xlu0 %1963
        %1965 = vrot.lane.b32.xlu0 %v1944, 4
        %v1966 = vpop.permute.xlu0 %1965
        %1967 = vrot.lane.b32.xlu0 %v1945, 4
        %v1968 = vpop.permute.xlu0 %1967
        %1969 = vrot.lane.b32.xlu0 %v1946, 4
        %v1970 = vpop.permute.xlu0 %1969
        %v1979 = vadd.f32 %v1883, %v1956
        %v1980 = vadd.f32 %v1884, %v1958
        %v1981 = vadd.f32 %v1885, %v1960
        %v1982 = vadd.f32 %v1886, %v1962
        %v1983 = vadd.f32 %v1887, %v1964
        %v1984 = vadd.f32 %v1888, %v1966
        %v1985 = vadd.f32 %v1889, %v1968
        %v1986 = vadd.f32 %v1890, %v1970
        %v1987 = vsel %vm1850, %v1931, %v1979
        %v1988 = vsel %vm1850, %v1932, %v1980
        %v1989 = vsel %vm1850, %v1933, %v1981
        %v1990 = vsel %vm1850, %v1934, %v1982
        %v1991 = vsel %vm1850, %v1935, %v1983
        %v1992 = vsel %vm1850, %v1936, %v1984
        %v1993 = vsel %vm1850, %v1937, %v1985
        %v1994 = vsel %vm1850, %v1938, %v1986
        %v1995 = vpack.c.bf16 %v1988, %v1987
        %v1996 = vpack.c.bf16 %v1990, %v1989
        %v1997 = vpack.c.bf16 %v1992, %v1991
        %v1998 = vpack.c.bf16 %v1994, %v1993
        %2001 = vrot.lane.b32.xlu0 %v1672, 120
        %v2002 = vpop.permute.xlu0 %2001
        %2003 = vrot.lane.b32.xlu0 %v1675, 120
        %v2004 = vpop.permute.xlu0 %2003
        %2007 = vrot.lane.b32.xlu0 %v1672, 112
        %v2008 = vpop.permute.xlu0 %2007
        %2009 = vrot.lane.b32.xlu0 %v1675, 112
        %v2010 = vpop.permute.xlu0 %2009
        %2013 = vrot.lane.b32.xlu0 %v1672, 104
        %v2014 = vpop.permute.xlu0 %2013
        %2015 = vrot.lane.b32.xlu0 %v1675, 104
        %v2016 = vpop.permute.xlu0 %2015
        %v2019 = vpack.c.bf16 %v1675, %v1672
        %v2020 = vpack.c.bf16 %v2004, %v2002
        %v2021 = vpack.c.bf16 %v2010, %v2008
        %v2022 = vpack.c.bf16 %v2016, %v2014
        %v2024 = vsel %vm1414, %v1859, 0
        %v2027 = vsel %vm1414, %v1995, 0
        %2029 = vmatprep.subr.bf16.mxu0 0
        %2030 = vmatpush1.bf16.xpose.msra.mxu0 %v2027
        %2031 = vmatprep.subr.bf16.mxu0 0
        %2032 = vmatpush1.bf16.xpose.msra.mxu0 0
        %2033 = vmatprep.subr.bf16.mxu0 0
        %2034 = vmatpush1.bf16.xpose.msra.mxu0 0
        %2035 = vmatprep.subr.bf16.mxu0 0
        %2036 = vmatpush1.bf16.xpose.msra.mxu0 0
        %2037 = vmatprep.subr.bf16.mxu0 0
        %2038 = vmatpush1.bf16.xpose.msra.mxu0 0
        %2039 = vmatprep.subr.bf16.mxu0 0
        %2040 = vmatpush1.bf16.xpose.msra.mxu0 0
        %2041 = vmatprep.subr.bf16.mxu0 0
        %2042 = vmatpush1.bf16.xpose.msra.mxu0 0
        %2043 = vmatprep.subr.bf16.mxu0 0
        %2044 = vmatpush1.bf16.xpose.msra.mxu0 0
        %2045 = vmatprep.subr.bf16.mxu0 0
        %2046 = vmatpush1.bf16.xpose.msra.mxu0 0
        %2047 = vmatprep.subr.bf16.mxu0 0
        %2048 = vmatpush1.bf16.xpose.msra.mxu0 0
        %2049 = vmatprep.subr.bf16.mxu0 0
        %2050 = vmatpush1.bf16.xpose.msra.mxu0 0
        %2051 = vmatprep.subr.bf16.mxu0 0
        %2052 = vmatpush1.bf16.xpose.msra.mxu0 0
        %2053 = vmatprep.subr.bf16.mxu0 0
        %2054 = vmatpush1.bf16.xpose.msra.mxu0 0
        %2055 = vmatprep.subr.bf16.mxu0 0
        %2056 = vmatpush1.bf16.xpose.msra.mxu0 0
        %2057 = vmatprep.subr.bf16.mxu0 0
        %2058 = vmatpush1.bf16.xpose.msra.mxu0 0
        %2059 = vmatprep.subr.bf16.mxu0 0
        %2060 = vmatpush1.bf16.xpose.msra.mxu0 0
        %2061 = vmatprep.mubr.bf16.mxu0 0
        %2062 = vmatmul.mubr.bf16.gmra.mrb[0].mxu0 %v2024
        %v2063 = vpop.f32.mrb[0].mxu0
        %v2064 = vadd.f32 0.0, %v2063
        %v2065 = vpop.f32.mrb[0].mxu0
        %v2066 = vpop.f32.mrb[0].mxu0
        %v2067 = vadd.f32 0.0, %v2066
        %v2068 = vpop.f32.mrb[0].mxu0
        %2069 = vdwg.mxu0
        %v2071 = vsel %vm1414, %v1860, 0
        %v2074 = vsel %vm1414, %v1996, 0
        %2076 = vmatprep.subr.bf16.mxu0 0
        %2077 = vmatpush1.bf16.xpose.msra.mxu0 %v2074
        %2078 = vmatprep.subr.bf16.mxu0 0
        %2079 = vmatpush1.bf16.xpose.msra.mxu0 0
        %2080 = vmatprep.subr.bf16.mxu0 0
        %2081 = vmatpush1.bf16.xpose.msra.mxu0 0
        %2082 = vmatprep.subr.bf16.mxu0 0
        %2083 = vmatpush1.bf16.xpose.msra.mxu0 0
        %2084 = vmatprep.subr.bf16.mxu0 0
        %2085 = vmatpush1.bf16.xpose.msra.mxu0 0
        %2086 = vmatprep.subr.bf16.mxu0 0
        %2087 = vmatpush1.bf16.xpose.msra.mxu0 0
        %2088 = vmatprep.subr.bf16.mxu0 0
        %2089 = vmatpush1.bf16.xpose.msra.mxu0 0
        %2090 = vmatprep.subr.bf16.mxu0 0
        %2091 = vmatpush1.bf16.xpose.msra.mxu0 0
        %2092 = vmatprep.subr.bf16.mxu0 0
        %2093 = vmatpush1.bf16.xpose.msra.mxu0 0
        %2094 = vmatprep.subr.bf16.mxu0 0
        %2095 = vmatpush1.bf16.xpose.msra.mxu0 0
        %2096 = vmatprep.subr.bf16.mxu0 0
        %2097 = vmatpush1.bf16.xpose.msra.mxu0 0
        %2098 = vmatprep.subr.bf16.mxu0 0
        %2099 = vmatpush1.bf16.xpose.msra.mxu0 0
        %2100 = vmatprep.subr.bf16.mxu0 0
        %2101 = vmatpush1.bf16.xpose.msra.mxu0 0
        %2102 = vmatprep.subr.bf16.mxu0 0
        %2103 = vmatpush1.bf16.xpose.msra.mxu0 0
        %2104 = vmatprep.subr.bf16.mxu0 0
        %2105 = vmatpush1.bf16.xpose.msra.mxu0 0
        %2106 = vmatprep.subr.bf16.mxu0 0
        %2107 = vmatpush1.bf16.xpose.msra.mxu0 0
        %2108 = vmatprep.mubr.bf16.mxu0 0
        %2109 = vmatmul.mubr.bf16.gmra.mrb[0].mxu0 %v2071
        %v2110 = vpop.f32.mrb[0].mxu0
        %v2111 = vadd.f32 0.0, %v2110
        %v2112 = vpop.f32.mrb[0].mxu0
        %v2113 = vpop.f32.mrb[0].mxu0
        %v2114 = vadd.f32 0.0, %v2113
        %v2115 = vpop.f32.mrb[0].mxu0
        %2116 = vdwg.mxu0
        %v2118 = vsel %vm1414, %v1861, 0
        %v2121 = vsel %vm1414, %v1997, 0
        %2123 = vmatprep.subr.bf16.mxu0 0
        %2124 = vmatpush1.bf16.xpose.msra.mxu0 %v2121
        %2125 = vmatprep.subr.bf16.mxu0 0
        %2126 = vmatpush1.bf16.xpose.msra.mxu0 0
        %2127 = vmatprep.subr.bf16.mxu0 0
        %2128 = vmatpush1.bf16.xpose.msra.mxu0 0
        %2129 = vmatprep.subr.bf16.mxu0 0
        %2130 = vmatpush1.bf16.xpose.msra.mxu0 0
        %2131 = vmatprep.subr.bf16.mxu0 0
        %2132 = vmatpush1.bf16.xpose.msra.mxu0 0
        %2133 = vmatprep.subr.bf16.mxu0 0
        %2134 = vmatpush1.bf16.xpose.msra.mxu0 0
        %2135 = vmatprep.subr.bf16.mxu0 0
        %2136 = vmatpush1.bf16.xpose.msra.mxu0 0
        %2137 = vmatprep.subr.bf16.mxu0 0
        %2138 = vmatpush1.bf16.xpose.msra.mxu0 0
        %2139 = vmatprep.subr.bf16.mxu0 0
        %2140 = vmatpush1.bf16.xpose.msra.mxu0 0
        %2141 = vmatprep.subr.bf16.mxu0 0
        %2142 = vmatpush1.bf16.xpose.msra.mxu0 0
        %2143 = vmatprep.subr.bf16.mxu0 0
        %2144 = vmatpush1.bf16.xpose.msra.mxu0 0
        %2145 = vmatprep.subr.bf16.mxu0 0
        %2146 = vmatpush1.bf16.xpose.msra.mxu0 0
        %2147 = vmatprep.subr.bf16.mxu0 0
        %2148 = vmatpush1.bf16.xpose.msra.mxu0 0
        %2149 = vmatprep.subr.bf16.mxu0 0
        %2150 = vmatpush1.bf16.xpose.msra.mxu0 0
        %2151 = vmatprep.subr.bf16.mxu0 0
        %2152 = vmatpush1.bf16.xpose.msra.mxu0 0
        %2153 = vmatprep.subr.bf16.mxu0 0
        %2154 = vmatpush1.bf16.xpose.msra.mxu0 0
        %2155 = vmatprep.mubr.bf16.mxu0 0
        %2156 = vmatmul.mubr.bf16.gmra.mrb[0].mxu0 %v2118
        %v2157 = vpop.f32.mrb[0].mxu0
        %v2158 = vadd.f32 0.0, %v2157
        %v2159 = vpop.f32.mrb[0].mxu0
        %v2160 = vpop.f32.mrb[0].mxu0
        %v2161 = vadd.f32 0.0, %v2160
        %v2162 = vpop.f32.mrb[0].mxu0
        %2163 = vdwg.mxu0
        %v2165 = vsel %vm1414, %v1862, 0
        %v2168 = vsel %vm1414, %v1998, 0
        %2170 = vmatprep.subr.bf16.mxu0 0
        %2171 = vmatpush1.bf16.xpose.msra.mxu0 %v2168
        %2172 = vmatprep.subr.bf16.mxu0 0
        %2173 = vmatpush1.bf16.xpose.msra.mxu0 0
        %2174 = vmatprep.subr.bf16.mxu0 0
        %2175 = vmatpush1.bf16.xpose.msra.mxu0 0
        %2176 = vmatprep.subr.bf16.mxu0 0
        %2177 = vmatpush1.bf16.xpose.msra.mxu0 0
        %2178 = vmatprep.subr.bf16.mxu0 0
        %2179 = vmatpush1.bf16.xpose.msra.mxu0 0
        %2180 = vmatprep.subr.bf16.mxu0 0
        %2181 = vmatpush1.bf16.xpose.msra.mxu0 0
        %2182 = vmatprep.subr.bf16.mxu0 0
        %2183 = vmatpush1.bf16.xpose.msra.mxu0 0
        %2184 = vmatprep.subr.bf16.mxu0 0
        %2185 = vmatpush1.bf16.xpose.msra.mxu0 0
        %2186 = vmatprep.subr.bf16.mxu0 0
        %2187 = vmatpush1.bf16.xpose.msra.mxu0 0
        %2188 = vmatprep.subr.bf16.mxu0 0
        %2189 = vmatpush1.bf16.xpose.msra.mxu0 0
        %2190 = vmatprep.subr.bf16.mxu0 0
        %2191 = vmatpush1.bf16.xpose.msra.mxu0 0
        %2192 = vmatprep.subr.bf16.mxu0 0
        %2193 = vmatpush1.bf16.xpose.msra.mxu0 0
        %2194 = vmatprep.subr.bf16.mxu0 0
        %2195 = vmatpush1.bf16.xpose.msra.mxu0 0
        %2196 = vmatprep.subr.bf16.mxu0 0
        %2197 = vmatpush1.bf16.xpose.msra.mxu0 0
        %2198 = vmatprep.subr.bf16.mxu0 0
        %2199 = vmatpush1.bf16.xpose.msra.mxu0 0
        %2200 = vmatprep.subr.bf16.mxu0 0
        %2201 = vmatpush1.bf16.xpose.msra.mxu0 0
        %2202 = vmatprep.mubr.bf16.mxu0 0
        %2203 = vmatmul.mubr.bf16.gmra.mrb[0].mxu0 %v2165
        %v2204 = vpop.f32.mrb[0].mxu0
        %v2205 = vadd.f32 0.0, %v2204
        %v2206 = vpop.f32.mrb[0].mxu0
        %v2207 = vpop.f32.mrb[0].mxu0
        %v2208 = vadd.f32 0.0, %v2207
        %v2209 = vpop.f32.mrb[0].mxu0
        %2210 = vdwg.mxu0
        %vm2211 = vcmask 130048
        %v2212 = vsel %vm2211, %v2064, -inf
        %2213 = vmax.xlane.f32.xlu0 %v2212
        %v2214 = vpop.xlane.xlu0 %2213
        %v2215 = vsel %vm2211, %v2067, -inf
        %2216 = vmax.xlane.f32.xlu0 %v2215
        %v2217 = vpop.xlane.xlu0 %2216
        %v2218 = vsel %vm2211, %v2111, -inf
        %2219 = vmax.xlane.f32.xlu0 %v2218
        %v2220 = vpop.xlane.xlu0 %2219
        %v2221 = vsel %vm2211, %v2114, -inf
        %2222 = vmax.xlane.f32.xlu0 %v2221
        %v2223 = vpop.xlane.xlu0 %2222
        %v2224 = vsel %vm2211, %v2158, -inf
        %2225 = vmax.xlane.f32.xlu0 %v2224
        %v2226 = vpop.xlane.xlu0 %2225
        %v2227 = vsel %vm2211, %v2161, -inf
        %2228 = vmax.xlane.f32.xlu0 %v2227
        %v2229 = vpop.xlane.xlu0 %2228
        %v2230 = vsel %vm2211, %v2205, -inf
        %2231 = vmax.xlane.f32.xlu0 %v2230
        %v2232 = vpop.xlane.xlu0 %2231
        %v2233 = vsel %vm2211, %v2208, -inf
        %2234 = vmax.xlane.f32.xlu0 %v2233
        %v2235 = vpop.xlane.xlu0 %2234
        %v2236 = vsub.f32 %v2064, %v2214
        %v2237 = vsub.f32 %v2067, %v2217
        %v2238 = vsub.f32 %v2111, %v2220
        %v2239 = vsub.f32 %v2114, %v2223
        %v2240 = vsub.f32 %v2158, %v2226
        %v2241 = vsub.f32 %v2161, %v2229
        %v2242 = vsub.f32 %v2205, %v2232
        %v2243 = vsub.f32 %v2208, %v2235
        %v2244 = vpack.c.bf16 %v2237, %v2236
        %v2245 = vpack.c.bf16 %v2239, %v2238
        %v2246 = vpack.c.bf16 %v2241, %v2240
        %v2247 = vpack.c.bf16 %v2243, %v2242
        %v2249 = vmul.bf16 %v2244, 1069105081
        %v2250 = vpow.bf16.pop %v2249
        %v2252 = vmul.bf16 %v2245, 1069105081
        %v2253 = vpow.bf16.pop %v2252
        %v2255 = vmul.bf16 %v2246, 1069105081
        %v2256 = vpow.bf16.pop %v2255
        %v2258 = vmul.bf16 %v2247, 1069105081
        %v2259 = vpow.bf16.pop %v2258
        %v2260 = vunpack.c.l.bf16 %v2250
        %v2261 = vunpack.c.h.bf16 %v2250
        %v2262 = vunpack.c.l.bf16 %v2253
        %v2263 = vunpack.c.h.bf16 %v2253
        %v2264 = vunpack.c.l.bf16 %v2256
        %v2265 = vunpack.c.h.bf16 %v2256
        %v2266 = vunpack.c.l.bf16 %v2259
        %v2267 = vunpack.c.h.bf16 %v2259
        %v2268 = vsel %vm2211, %v2260, 0.0
        %2269 = vadd.xlane.f32.xlu0 %v2268
        %v2270 = vpop.xlane.xlu0 %2269
        %v2271 = vsel %vm2211, %v2261, 0.0
        %2272 = vadd.xlane.f32.xlu0 %v2271
        %v2273 = vpop.xlane.xlu0 %2272
        %v2274 = vsel %vm2211, %v2262, 0.0
        %2275 = vadd.xlane.f32.xlu0 %v2274
        %v2276 = vpop.xlane.xlu0 %2275
        %v2277 = vsel %vm2211, %v2263, 0.0
        %2278 = vadd.xlane.f32.xlu0 %v2277
        %v2279 = vpop.xlane.xlu0 %2278
        %v2280 = vsel %vm2211, %v2264, 0.0
        %2281 = vadd.xlane.f32.xlu0 %v2280
        %v2282 = vpop.xlane.xlu0 %2281
        %v2283 = vsel %vm2211, %v2265, 0.0
        %2284 = vadd.xlane.f32.xlu0 %v2283
        %v2285 = vpop.xlane.xlu0 %2284
        %v2286 = vsel %vm2211, %v2266, 0.0
        %2287 = vadd.xlane.f32.xlu0 %v2286
        %v2288 = vpop.xlane.xlu0 %2287
        %v2289 = vsel %vm2211, %v2267, 0.0
        %2290 = vadd.xlane.f32.xlu0 %v2289
        %v2291 = vpop.xlane.xlu0 %2290
        %v2293 = vsel %vm2211, %v2250, 0
        %2295 = vmatprep.subr.bf16.mxu0 0
        %2296 = vmatpush1.bf16.msra.mxu0 %v2019
        %2297 = vmatprep.subr.bf16.mxu0 0
        %2298 = vmatpush1.bf16.msra.mxu0 0
        %2299 = vmatprep.subr.bf16.mxu0 0
        %2300 = vmatpush1.bf16.msra.mxu0 0
        %2301 = vmatprep.subr.bf16.mxu0 0
        %2302 = vmatpush1.bf16.msra.mxu0 0
        %2303 = vmatprep.subr.bf16.mxu0 0
        %2304 = vmatpush1.bf16.msra.mxu0 0
        %2305 = vmatprep.subr.bf16.mxu0 0
        %2306 = vmatpush1.bf16.msra.mxu0 0
        %2307 = vmatprep.subr.bf16.mxu0 0
        %2308 = vmatpush1.bf16.msra.mxu0 0
        %2309 = vmatprep.subr.bf16.mxu0 0
        %2310 = vmatpush1.bf16.msra.mxu0 0
        %2311 = vmatprep.subr.bf16.mxu0 0
        %2312 = vmatpush1.bf16.msra.mxu0 0
        %2313 = vmatprep.subr.bf16.mxu0 0
        %2314 = vmatpush1.bf16.msra.mxu0 0
        %2315 = vmatprep.subr.bf16.mxu0 0
        %2316 = vmatpush1.bf16.msra.mxu0 0
        %2317 = vmatprep.subr.bf16.mxu0 0
        %2318 = vmatpush1.bf16.msra.mxu0 0
        %2319 = vmatprep.subr.bf16.mxu0 0
        %2320 = vmatpush1.bf16.msra.mxu0 0
        %2321 = vmatprep.subr.bf16.mxu0 0
        %2322 = vmatpush1.bf16.msra.mxu0 0
        %2323 = vmatprep.subr.bf16.mxu0 0
        %2324 = vmatpush1.bf16.msra.mxu0 0
        %2325 = vmatprep.subr.bf16.mxu0 0
        %2326 = vmatpush1.bf16.msra.mxu0 0
        %2327 = vmatprep.mubr.bf16.mxu0 0
        %2328 = vmatmul.mubr.bf16.gmra.mrb[0].mxu0 %v2293
        %v2329 = vpop.f32.mrb[0].mxu0
        %v2330 = vadd.f32 0.0, %v2329
        %v2331 = vpop.f32.mrb[0].mxu0
        %v2332 = vpop.f32.mrb[0].mxu0
        %v2333 = vadd.f32 0.0, %v2332
        %v2334 = vpop.f32.mrb[0].mxu0
        %2335 = vdwg.mxu0
        %v2337 = vsel %vm2211, %v2253, 0
        %2339 = vmatprep.subr.bf16.mxu0 0
        %2340 = vmatpush1.bf16.msra.mxu0 %v2020
        %2341 = vmatprep.subr.bf16.mxu0 0
        %2342 = vmatpush1.bf16.msra.mxu0 0
        %2343 = vmatprep.subr.bf16.mxu0 0
        %2344 = vmatpush1.bf16.msra.mxu0 0
        %2345 = vmatprep.subr.bf16.mxu0 0
        %2346 = vmatpush1.bf16.msra.mxu0 0
        %2347 = vmatprep.subr.bf16.mxu0 0
        %2348 = vmatpush1.bf16.msra.mxu0 0
        %2349 = vmatprep.subr.bf16.mxu0 0
        %2350 = vmatpush1.bf16.msra.mxu0 0
        %2351 = vmatprep.subr.bf16.mxu0 0
        %2352 = vmatpush1.bf16.msra.mxu0 0
        %2353 = vmatprep.subr.bf16.mxu0 0
        %2354 = vmatpush1.bf16.msra.mxu0 0
        %2355 = vmatprep.subr.bf16.mxu0 0
        %2356 = vmatpush1.bf16.msra.mxu0 0
        %2357 = vmatprep.subr.bf16.mxu0 0
        %2358 = vmatpush1.bf16.msra.mxu0 0
        %2359 = vmatprep.subr.bf16.mxu0 0
        %2360 = vmatpush1.bf16.msra.mxu0 0
        %2361 = vmatprep.subr.bf16.mxu0 0
        %2362 = vmatpush1.bf16.msra.mxu0 0
        %2363 = vmatprep.subr.bf16.mxu0 0
        %2364 = vmatpush1.bf16.msra.mxu0 0
        %2365 = vmatprep.subr.bf16.mxu0 0
        %2366 = vmatpush1.bf16.msra.mxu0 0
        %2367 = vmatprep.subr.bf16.mxu0 0
        %2368 = vmatpush1.bf16.msra.mxu0 0
        %2369 = vmatprep.subr.bf16.mxu0 0
        %2370 = vmatpush1.bf16.msra.mxu0 0
        %2371 = vmatprep.mubr.bf16.mxu0 0
        %2372 = vmatmul.mubr.bf16.gmra.mrb[0].mxu0 %v2337
        %v2373 = vpop.f32.mrb[0].mxu0
        %v2374 = vadd.f32 0.0, %v2373
        %v2375 = vpop.f32.mrb[0].mxu0
        %v2376 = vpop.f32.mrb[0].mxu0
        %v2377 = vadd.f32 0.0, %v2376
        %v2378 = vpop.f32.mrb[0].mxu0
        %2379 = vdwg.mxu0
        %v2381 = vsel %vm2211, %v2256, 0
        %2383 = vmatprep.subr.bf16.mxu0 0
        %2384 = vmatpush1.bf16.msra.mxu0 %v2021
        %2385 = vmatprep.subr.bf16.mxu0 0
        %2386 = vmatpush1.bf16.msra.mxu0 0
        %2387 = vmatprep.subr.bf16.mxu0 0
        %2388 = vmatpush1.bf16.msra.mxu0 0
        %2389 = vmatprep.subr.bf16.mxu0 0
        %2390 = vmatpush1.bf16.msra.mxu0 0
        %2391 = vmatprep.subr.bf16.mxu0 0
        %2392 = vmatpush1.bf16.msra.mxu0 0
        %2393 = vmatprep.subr.bf16.mxu0 0
        %2394 = vmatpush1.bf16.msra.mxu0 0
        %2395 = vmatprep.subr.bf16.mxu0 0
        %2396 = vmatpush1.bf16.msra.mxu0 0
        %2397 = vmatprep.subr.bf16.mxu0 0
        %2398 = vmatpush1.bf16.msra.mxu0 0
        %2399 = vmatprep.subr.bf16.mxu0 0
        %2400 = vmatpush1.bf16.msra.mxu0 0
        %2401 = vmatprep.subr.bf16.mxu0 0
        %2402 = vmatpush1.bf16.msra.mxu0 0
        %2403 = vmatprep.subr.bf16.mxu0 0
        %2404 = vmatpush1.bf16.msra.mxu0 0
        %2405 = vmatprep.subr.bf16.mxu0 0
        %2406 = vmatpush1.bf16.msra.mxu0 0
        %2407 = vmatprep.subr.bf16.mxu0 0
        %2408 = vmatpush1.bf16.msra.mxu0 0
        %2409 = vmatprep.subr.bf16.mxu0 0
        %2410 = vmatpush1.bf16.msra.mxu0 0
        %2411 = vmatprep.subr.bf16.mxu0 0
        %2412 = vmatpush1.bf16.msra.mxu0 0
        %2413 = vmatprep.subr.bf16.mxu0 0
        %2414 = vmatpush1.bf16.msra.mxu0 0
        %2415 = vmatprep.mubr.bf16.mxu0 0
        %2416 = vmatmul.mubr.bf16.gmra.mrb[0].mxu0 %v2381
        %v2417 = vpop.f32.mrb[0].mxu0
        %v2418 = vadd.f32 0.0, %v2417
        %v2419 = vpop.f32.mrb[0].mxu0
        %v2420 = vpop.f32.mrb[0].mxu0
        %v2421 = vadd.f32 0.0, %v2420
        %v2422 = vpop.f32.mrb[0].mxu0
        %2423 = vdwg.mxu0
        %v2425 = vsel %vm2211, %v2259, 0
        %2427 = vmatprep.subr.bf16.mxu0 0
        %2428 = vmatpush1.bf16.msra.mxu0 %v2022
        %2429 = vmatprep.subr.bf16.mxu0 0
        %2430 = vmatpush1.bf16.msra.mxu0 0
        %2431 = vmatprep.subr.bf16.mxu0 0
        %2432 = vmatpush1.bf16.msra.mxu0 0
        %2433 = vmatprep.subr.bf16.mxu0 0
        %2434 = vmatpush1.bf16.msra.mxu0 0
        %2435 = vmatprep.subr.bf16.mxu0 0
        %2436 = vmatpush1.bf16.msra.mxu0 0
        %2437 = vmatprep.subr.bf16.mxu0 0
        %2438 = vmatpush1.bf16.msra.mxu0 0
        %2439 = vmatprep.subr.bf16.mxu0 0
        %2440 = vmatpush1.bf16.msra.mxu0 0
        %2441 = vmatprep.subr.bf16.mxu0 0
        %2442 = vmatpush1.bf16.msra.mxu0 0
        %2443 = vmatprep.subr.bf16.mxu0 0
        %2444 = vmatpush1.bf16.msra.mxu0 0
        %2445 = vmatprep.subr.bf16.mxu0 0
        %2446 = vmatpush1.bf16.msra.mxu0 0
        %2447 = vmatprep.subr.bf16.mxu0 0
        %2448 = vmatpush1.bf16.msra.mxu0 0
        %2449 = vmatprep.subr.bf16.mxu0 0
        %2450 = vmatpush1.bf16.msra.mxu0 0
        %2451 = vmatprep.subr.bf16.mxu0 0
        %2452 = vmatpush1.bf16.msra.mxu0 0
        %2453 = vmatprep.subr.bf16.mxu0 0
        %2454 = vmatpush1.bf16.msra.mxu0 0
        %2455 = vmatprep.subr.bf16.mxu0 0
        %2456 = vmatpush1.bf16.msra.mxu0 0
        %2457 = vmatprep.subr.bf16.mxu0 0
        %2458 = vmatpush1.bf16.msra.mxu0 0
        %2459 = vmatprep.mubr.bf16.mxu0 0
        %2460 = vmatmul.mubr.bf16.gmra.mrb[0].mxu0 %v2425
        %v2461 = vpop.f32.mrb[0].mxu0
        %v2462 = vadd.f32 0.0, %v2461
        %v2463 = vpop.f32.mrb[0].mxu0
        %v2464 = vpop.f32.mrb[0].mxu0
        %v2465 = vadd.f32 0.0, %v2464
        %v2466 = vpop.f32.mrb[0].mxu0
        %2467 = vdwg.mxu0
        %v2468 = vrcp.pop %v2270
        %v2469 = vrcp.pop %v2273
        %v2470 = vrcp.pop %v2276
        %v2471 = vrcp.pop %v2279
        %v2472 = vrcp.pop %v2282
        %v2473 = vrcp.pop %v2285
        %v2474 = vrcp.pop %v2288
        %v2475 = vrcp.pop %v2291
        %v2476 = vmul.f32 %v2330, %v2468
        %v2477 = vmul.f32 %v2333, %v2469
        %v2478 = vmul.f32 %v2374, %v2470
        %v2479 = vmul.f32 %v2377, %v2471
        %v2480 = vmul.f32 %v2418, %v2472
        %v2481 = vmul.f32 %v2421, %v2473
        %v2482 = vmul.f32 %v2462, %v2474
        %v2483 = vmul.f32 %v2465, %v2475
        %2486 = vrot.lane.b32.xlu0 %v2478, 8
        %v2487 = vpop.permute.xlu0 %2486
        %2488 = vrot.lane.b32.xlu0 %v2479, 8
        %v2489 = vpop.permute.xlu0 %2488
        %2494 = vrot.lane.b32.xlu0 %v2480, 16
        %v2495 = vpop.permute.xlu0 %2494
        %2496 = vrot.lane.b32.xlu0 %v2481, 16
        %v2497 = vpop.permute.xlu0 %2496
        %2502 = vrot.lane.b32.xlu0 %v2482, 24
        %v2503 = vpop.permute.xlu0 %2502
        %2504 = vrot.lane.b32.xlu0 %v2483, 24
        %v2505 = vpop.permute.xlu0 %2504
        %v2508 = vsel %vm1414, %v2476, %v2487
        %v2509 = vsel %vm1414, %v2477, %v2489
        %v2510 = vsel %vm2211, %v2508, %v2495
        %v2511 = vsel %vm2211, %v2509, %v2497
        %vm2512 = vcmask 195584
        %v2513 = vsel %vm2512, %v2510, %v2503
        %v2514 = vsel %vm2512, %v2511, %v2505
        %v2515 = vpack.c.bf16 %v2514, %v2513
        %s2516 = smul.addr %s1472, 4
        %s2517 = scalar_lea.vmem %s16, %s2516
        %v2518 = vld [vmem:[%s2517] sm:$0xf]
        %v2519 = vld [vmem:[%s2517 + $0x4] sm:$0xf]
        %v2520 = vld [vmem:[%s2517 + $0x8] sm:$0xf]
        %v2521 = vld [vmem:[%s2517 + $0xc] sm:$0xf]
        %s2522 = scalar_lea.vmem %s17, %s1464
        %v2523 = vld [vmem:[%s2522] sm:$0x1]
        %v2525 = vlaneseq
        %v2526 = vshrl.u32 %v2525, 7
        %v2527 = vsub.s32 0, %v2526
        %v2528 = vrot.slane %v2523, %v2527
        %v2534 = vunpack.c.l.b16 %v2518
        %v2535 = vunpack.c.l.b16 %v2519
        %v2536 = vunpack.c.l.b16 %v2520
        %v2537 = vunpack.c.l.b16 %v2521
        %v2538 = vpack.c.b16 %v2535, %v2534
        %v2539 = vpack.c.b16 %v2537, %v2536
        %v2543 = vsel %vm1499, %v2515, 0
        %2545 = vmatprep.subr.bf16.mxu0 0
        %2546 = vmatpush1.bf16.msra.mxu0 %v2538
        %2547 = vmatprep.subr.bf16.mxu0 0
        %2548 = vmatpush1.bf16.msra.mxu0 %v2539
        %2549 = vmatprep.subr.bf16.mxu0 0
        %2550 = vmatpush1.bf16.msra.mxu0 0
        %2551 = vmatprep.subr.bf16.mxu0 0
        %2552 = vmatpush1.bf16.msra.mxu0 0
        %2553 = vmatprep.subr.bf16.mxu0 0
        %2554 = vmatpush1.bf16.msra.mxu0 0
        %2555 = vmatprep.subr.bf16.mxu0 0
        %2556 = vmatpush1.bf16.msra.mxu0 0
        %2557 = vmatprep.subr.bf16.mxu0 0
        %2558 = vmatpush1.bf16.msra.mxu0 0
        %2559 = vmatprep.subr.bf16.mxu0 0
        %2560 = vmatpush1.bf16.msra.mxu0 0
        %2561 = vmatprep.subr.bf16.mxu0 0
        %2562 = vmatpush1.bf16.msra.mxu0 0
        %2563 = vmatprep.subr.bf16.mxu0 0
        %2564 = vmatpush1.bf16.msra.mxu0 0
        %2565 = vmatprep.subr.bf16.mxu0 0
        %2566 = vmatpush1.bf16.msra.mxu0 0
        %2567 = vmatprep.subr.bf16.mxu0 0
        %2568 = vmatpush1.bf16.msra.mxu0 0
        %2569 = vmatprep.subr.bf16.mxu0 0
        %2570 = vmatpush1.bf16.msra.mxu0 0
        %2571 = vmatprep.subr.bf16.mxu0 0
        %2572 = vmatpush1.bf16.msra.mxu0 0
        %2573 = vmatprep.subr.bf16.mxu0 0
        %2574 = vmatpush1.bf16.msra.mxu0 0
        %2575 = vmatprep.subr.bf16.mxu0 0
        %2576 = vmatpush1.bf16.msra.mxu0 0
        %2577 = vmatprep.mubr.bf16.mxu0 0
        %2578 = vmatmul.mubr.bf16.gmra.mrb[0].mxu0 %v2543
        %v2579 = vpop.f32.mrb[0].mxu0
        %v2580 = vadd.f32 %v2528, %v2579
        %v2581 = vpop.f32.mrb[0].mxu0
        %v2582 = vpop.f32.mrb[0].mxu0
        %v2583 = vadd.f32 %v2528, %v2582
        %v2584 = vpop.f32.mrb[0].mxu0
        %2585 = vdwg.mxu0
        %v2586 = vadd.f32 %v1469, %v2580
        %v2587 = vadd.f32 %v1470, %v2583
        %v2588 = vsel %vm1499, %v2586, 0.0
        %2589 = vadd.xlane.f32.xlu0 %v2588
        %v2590 = vpop.xlane.xlu0 %2589
        %v2591 = vsel %vm1499, %v2587, 0.0
        %2592 = vadd.xlane.f32.xlu0 %v2591
        %v2593 = vpop.xlane.xlu0 %2592
        %v2594 = vrcp.pop 32.0
        %v2595 = vmul.f32 %v2590, %v2594
        %v2596 = vmul.f32 %v2593, %v2594
        %v2597 = vsub.f32 %v2586, %v2595
        %v2598 = vsub.f32 %v2587, %v2596
        %v2599 = vmul.f32 %v2597, %v2597
        %v2600 = vmul.f32 %v2598, %v2598
        %v2601 = vsel %vm1499, %v2599, 0.0
        %2602 = vadd.xlane.f32.xlu0 %v2601
        %v2603 = vpop.xlane.xlu0 %2602
        %v2604 = vsel %vm1499, %v2600, 0.0
        %2605 = vadd.xlane.f32.xlu0 %v2604
        %v2606 = vpop.xlane.xlu0 %2605
        %v2607 = vmul.f32 %v2603, %v2594
        %v2608 = vmul.f32 %v2606, %v2594
        %v2609 = vadd.f32 %v2607, 1e-05
        %v2610 = vadd.f32 %v2608, 1e-05
        %v2611 = vrsqrt.pop %v2609
        %v2612 = vrsqrt.pop %v2610
        %v2613 = vmul.f32 %v2597, %v2611
        %v2614 = vmul.f32 %v2598, %v2612
        %s2615 = scalar_lea.vmem %s18, %s1464
        %v2616 = vld [vmem:[%s2615] sm:$0x1]
        %v2618 = vlaneseq
        %v2619 = vshrl.u32 %v2618, 7
        %v2620 = vsub.s32 0, %v2619
        %v2621 = vrot.slane %v2616, %v2620
        %v2623 = vmul.f32 %v2613, %v2621
        %v2624 = vmul.f32 %v2614, %v2621
        %s2625 = scalar_lea.vmem %s19, %s1464
        %v2626 = vld [vmem:[%s2625] sm:$0x1]
        %v2628 = vlaneseq
        %v2629 = vshrl.u32 %v2628, 7
        %v2630 = vsub.s32 0, %v2629
        %v2631 = vrot.slane %v2626, %v2630
        %v2633 = vadd.f32 %v2623, %v2631
        %v2634 = vadd.f32 %v2624, %v2631
        %v2635 = vpack.c.bf16 %v2634, %v2633
        %s2636 = smul.addr %s1472, 4
        %s2637 = scalar_lea.vmem %s20, %s2636
        %v2638 = vld [vmem:[%s2637] sm:$0xf]
        %v2639 = vld [vmem:[%s2637 + $0x4] sm:$0xf]
        %v2640 = vld [vmem:[%s2637 + $0x8] sm:$0xf]
        %v2641 = vld [vmem:[%s2637 + $0xc] sm:$0xf]
        %s2642 = scalar_lea.vmem %s21, %s1464
        %v2643 = vld [vmem:[%s2642] sm:$0x1]
        %v2645 = vlaneseq
        %v2646 = vshrl.u32 %v2645, 7
        %v2647 = vsub.s32 0, %v2646
        %v2648 = vrot.slane %v2643, %v2647
        %v2654 = vunpack.c.l.b16 %v2638
        %v2655 = vunpack.c.l.b16 %v2639
        %v2656 = vunpack.c.l.b16 %v2640
        %v2657 = vunpack.c.l.b16 %v2641
        %v2658 = vpack.c.b16 %v2655, %v2654
        %v2659 = vpack.c.b16 %v2657, %v2656
        %v2663 = vsel %vm1499, %v2635, 0
        %2665 = vmatprep.subr.bf16.mxu0 0
        %2666 = vmatpush1.bf16.msra.mxu0 %v2658
        %2667 = vmatprep.subr.bf16.mxu0 0
        %2668 = vmatpush1.bf16.msra.mxu0 %v2659
        %2669 = vmatprep.subr.bf16.mxu0 0
        %2670 = vmatpush1.bf16.msra.mxu0 0
        %2671 = vmatprep.subr.bf16.mxu0 0
        %2672 = vmatpush1.bf16.msra.mxu0 0
        %2673 = vmatprep.subr.bf16.mxu0 0
        %2674 = vmatpush1.bf16.msra.mxu0 0
        %2675 = vmatprep.subr.bf16.mxu0 0
        %2676 = vmatpush1.bf16.msra.mxu0 0
        %2677 = vmatprep.subr.bf16.mxu0 0
        %2678 = vmatpush1.bf16.msra.mxu0 0
        %2679 = vmatprep.subr.bf16.mxu0 0
        %2680 = vmatpush1.bf16.msra.mxu0 0
        %2681 = vmatprep.subr.bf16.mxu0 0
        %2682 = vmatpush1.bf16.msra.mxu0 0
        %2683 = vmatprep.subr.bf16.mxu0 0
        %2684 = vmatpush1.bf16.msra.mxu0 0
        %2685 = vmatprep.subr.bf16.mxu0 0
        %2686 = vmatpush1.bf16.msra.mxu0 0
        %2687 = vmatprep.subr.bf16.mxu0 0
        %2688 = vmatpush1.bf16.msra.mxu0 0
        %2689 = vmatprep.subr.bf16.mxu0 0
        %2690 = vmatpush1.bf16.msra.mxu0 0
        %2691 = vmatprep.subr.bf16.mxu0 0
        %2692 = vmatpush1.bf16.msra.mxu0 0
        %2693 = vmatprep.subr.bf16.mxu0 0
        %2694 = vmatpush1.bf16.msra.mxu0 0
        %2695 = vmatprep.subr.bf16.mxu0 0
        %2696 = vmatpush1.bf16.msra.mxu0 0
        %2697 = vmatprep.mubr.bf16.mxu0 0
        %2698 = vmatmul.mubr.bf16.gmra.mrb[0].mxu0 %v2663
        %v2699 = vpop.f32.mrb[0].mxu0
        %v2700 = vadd.f32 %v2648, %v2699
        %v2701 = vpop.f32.mrb[0].mxu0
        %v2702 = vpop.f32.mrb[0].mxu0
        %v2703 = vadd.f32 %v2648, %v2702
        %v2704 = vpop.f32.mrb[0].mxu0
        %2705 = vdwg.mxu0
        %v2706 = vmax.f32 %v2700, 0.0
        %v2707 = vmax.f32 %v2703, 0.0
        %v2708 = vpack.c.bf16 %v2707, %v2706
        %s2709 = smul.u32 %s1464, 8
        %s2710 = smul.addr %s2709, 4
        %s2711 = scalar_lea.vmem %s22, %s2710
        %v2712 = vld [vmem:[%s2711] sm:$0xf]
        %v2713 = vld [vmem:[%s2711 + $0x4] sm:$0xf]
        %v2714 = vld [vmem:[%s2711 + $0x8] sm:$0xf]
        %v2715 = vld [vmem:[%s2711 + $0xc] sm:$0xf]
        %v2716 = vld [vmem:[%s2711 + $0x10] sm:$0xf]
        %v2717 = vld [vmem:[%s2711 + $0x14] sm:$0xf]
        %v2718 = vld [vmem:[%s2711 + $0x18] sm:$0xf]
        %v2719 = vld [vmem:[%s2711 + $0x1c] sm:$0xf]
        %s2720 = scalar_lea.vmem %s23, %s1464
        %v2721 = vld [vmem:[%s2720] sm:$0x1]
        %v2723 = vlaneseq
        %v2724 = vshrl.u32 %v2723, 7
        %v2725 = vsub.s32 0, %v2724
        %v2726 = vrot.slane %v2721, %v2725
        %v2736 = vunpack.c.l.b16 %v2712
        %v2737 = vunpack.c.l.b16 %v2713
        %v2738 = vunpack.c.l.b16 %v2714
        %v2739 = vunpack.c.l.b16 %v2715
        %v2740 = vunpack.c.l.b16 %v2716
        %v2741 = vunpack.c.l.b16 %v2717
        %v2742 = vunpack.c.l.b16 %v2718
        %v2743 = vunpack.c.l.b16 %v2719
        %v2744 = vpack.c.b16 %v2737, %v2736
        %v2745 = vpack.c.b16 %v2739, %v2738
        %v2746 = vpack.c.b16 %v2741, %v2740
        %v2747 = vpack.c.b16 %v2743, %v2742
        %vm2752 = vcmask 523264
        %v2754 = vsel %vm2752, %v2708, 0
        %2756 = vmatprep.subr.bf16.mxu0 0
        %2757 = vmatpush1.bf16.msra.mxu0 %v2744
        %2758 = vmatprep.subr.bf16.mxu0 0
        %2759 = vmatpush1.bf16.msra.mxu0 %v2745
        %2760 = vmatprep.subr.bf16.mxu0 0
        %2761 = vmatpush1.bf16.msra.mxu0 %v2746
        %2762 = vmatprep.subr.bf16.mxu0 0
        %2763 = vmatpush1.bf16.msra.mxu0 %v2747
        %2764 = vmatprep.subr.bf16.mxu0 0
        %2765 = vmatpush1.bf16.msra.mxu0 0
        %2766 = vmatprep.subr.bf16.mxu0 0
        %2767 = vmatpush1.bf16.msra.mxu0 0
        %2768 = vmatprep.subr.bf16.mxu0 0
        %2769 = vmatpush1.bf16.msra.mxu0 0
        %2770 = vmatprep.subr.bf16.mxu0 0
        %2771 = vmatpush1.bf16.msra.mxu0 0
        %2772 = vmatprep.subr.bf16.mxu0 0
        %2773 = vmatpush1.bf16.msra.mxu0 0
        %2774 = vmatprep.subr.bf16.mxu0 0
        %2775 = vmatpush1.bf16.msra.mxu0 0
        %2776 = vmatprep.subr.bf16.mxu0 0
        %2777 = vmatpush1.bf16.msra.mxu0 0
        %2778 = vmatprep.subr.bf16.mxu0 0
        %2779 = vmatpush1.bf16.msra.mxu0 0
        %2780 = vmatprep.subr.bf16.mxu0 0
        %2781 = vmatpush1.bf16.msra.mxu0 0
        %2782 = vmatprep.subr.bf16.mxu0 0
        %2783 = vmatpush1.bf16.msra.mxu0 0
        %2784 = vmatprep.subr.bf16.mxu0 0
        %2785 = vmatpush1.bf16.msra.mxu0 0
        %2786 = vmatprep.subr.bf16.mxu0 0
        %2787 = vmatpush1.bf16.msra.mxu0 0
        %2788 = vmatprep.mubr.bf16.mxu0 0
        %2789 = vmatmul.mubr.bf16.gmra.mrb[0].mxu0 %v2754
        %v2790 = vpop.f32.mrb[0].mxu0
        %v2791 = vadd.f32 %v2726, %v2790
        %v2792 = vpop.f32.mrb[0].mxu0
        %v2793 = vpop.f32.mrb[0].mxu0
        %v2794 = vadd.f32 %v2726, %v2793
        %v2795 = vpop.f32.mrb[0].mxu0
        %2796 = vdwg.mxu0
        %v2797 = vadd.f32 %v2633, %v2791
        %v2798 = vadd.f32 %v2634, %v2794
        %v2799 = vsel %vm1499, %v2797, 0.0
        %2800 = vadd.xlane.f32.xlu0 %v2799
        %v2801 = vpop.xlane.xlu0 %2800
        %v2802 = vsel %vm1499, %v2798, 0.0
        %2803 = vadd.xlane.f32.xlu0 %v2802
        %v2804 = vpop.xlane.xlu0 %2803
        %v2805 = vmul.f32 %v2801, %v2594
        %v2806 = vmul.f32 %v2804, %v2594
        %v2807 = vsub.f32 %v2797, %v2805
        %v2808 = vsub.f32 %v2798, %v2806
        %v2809 = vmul.f32 %v2807, %v2807
        %v2810 = vmul.f32 %v2808, %v2808
        %v2811 = vsel %vm1499, %v2809, 0.0
        %2812 = vadd.xlane.f32.xlu0 %v2811
        %v2813 = vpop.xlane.xlu0 %2812
        %v2814 = vsel %vm1499, %v2810, 0.0
        %2815 = vadd.xlane.f32.xlu0 %v2814
        %v2816 = vpop.xlane.xlu0 %2815
        %v2817 = vmul.f32 %v2813, %v2594
        %v2818 = vmul.f32 %v2816, %v2594
        %v2819 = vadd.f32 %v2817, 1e-05
        %v2820 = vadd.f32 %v2818, 1e-05
        %v2821 = vrsqrt.pop %v2819
        %v2822 = vrsqrt.pop %v2820
        %v2823 = vmul.f32 %v2807, %v2821
        %v2824 = vmul.f32 %v2808, %v2822
        %s2825 = scalar_lea.vmem %s24, %s1464
        %v2826 = vld [vmem:[%s2825] sm:$0x1]
        %v2828 = vlaneseq
        %v2829 = vshrl.u32 %v2828, 7
        %v2830 = vsub.s32 0, %v2829
        %v2831 = vrot.slane %v2826, %v2830
        %v2833 = vmul.f32 %v2823, %v2831
        %v2834 = vmul.f32 %v2824, %v2831
        %s2835 = scalar_lea.vmem %s25, %s1464
        %v2836 = vld [vmem:[%s2835] sm:$0x1]
        %v2838 = vlaneseq
        %v2839 = vshrl.u32 %v2838, 7
        %v2840 = vsub.s32 0, %v2839
        %v2841 = vrot.slane %v2836, %v2840
        %v2843 = vadd.f32 %v2833, %v2841
        %v2844 = vadd.f32 %v2834, %v2841
      $region129: #{thdroformer_self.1} parent=123 // loop_footer
        %s1468 = sadd.s32 1, %s1464
      $region130: #{thdroformer_self.1} parent=123 // loop_footer_branch
        %1463 = sbr.rel target = $region126
      $region131: #{thdroformer_self.1} parent=123 // loop_exit
        _
      %v2845 = vpack.c.bf16 %v1470, %v1469
      %v2846 = vld [vmem:[%s8] sm:$0xf]
      %v2847 = vld [vmem:[%s8 + $0x4] sm:$0xf]
      %v2848 = vld [vmem:[%s8 + $0x8] sm:$0xf]
      %v2849 = vld [vmem:[%s8 + $0xc] sm:$0xf]
      %v2850 = vld [vmem:[%s9] sm:$0x1]
      %v2852 = vlaneseq
      %v2853 = vshrl.u32 %v2852, 7
      %v2854 = vsub.s32 0, %v2853
      %v2855 = vrot.slane %v2850, %v2854
      %v2861 = vunpack.c.l.b16 %v2846
      %v2862 = vunpack.c.l.b16 %v2847
      %v2863 = vunpack.c.l.b16 %v2848
      %v2864 = vunpack.c.l.b16 %v2849
      %v2865 = vpack.c.b16 %v2862, %v2861
      %v2866 = vpack.c.b16 %v2864, %v2863
      %vm2869 = vcmask 261120
      %v2871 = vsel %vm2869, %v2845, 0
      %2873 = vmatprep.subr.bf16.mxu0 0
      %2874 = vmatpush1.bf16.msra.mxu0 %v2865
      %2875 = vmatprep.subr.bf16.mxu0 0
      %2876 = vmatpush1.bf16.msra.mxu0 %v2866
      %2877 = vmatprep.subr.bf16.mxu0 0
      %2878 = vmatpush1.bf16.msra.mxu0 0
      %2879 = vmatprep.subr.bf16.mxu0 0
      %2880 = vmatpush1.bf16.msra.mxu0 0
      %2881 = vmatprep.subr.bf16.mxu0 0
      %2882 = vmatpush1.bf16.msra.mxu0 0
      %2883 = vmatprep.subr.bf16.mxu0 0
      %2884 = vmatpush1.bf16.msra.mxu0 0
      %2885 = vmatprep.subr.bf16.mxu0 0
      %2886 = vmatpush1.bf16.msra.mxu0 0
      %2887 = vmatprep.subr.bf16.mxu0 0
      %2888 = vmatpush1.bf16.msra.mxu0 0
      %2889 = vmatprep.subr.bf16.mxu0 0
      %2890 = vmatpush1.bf16.msra.mxu0 0
      %2891 = vmatprep.subr.bf16.mxu0 0
      %2892 = vmatpush1.bf16.msra.mxu0 0
      %2893 = vmatprep.subr.bf16.mxu0 0
      %2894 = vmatpush1.bf16.msra.mxu0 0
      %2895 = vmatprep.subr.bf16.mxu0 0
      %2896 = vmatpush1.bf16.msra.mxu0 0
      %2897 = vmatprep.subr.bf16.mxu0 0
      %2898 = vmatpush1.bf16.msra.mxu0 0
      %2899 = vmatprep.subr.bf16.mxu0 0
      %2900 = vmatpush1.bf16.msra.mxu0 0
      %2901 = vmatprep.subr.bf16.mxu0 0
      %2902 = vmatpush1.bf16.msra.mxu0 0
      %2903 = vmatprep.subr.bf16.mxu0 0
      %2904 = vmatpush1.bf16.msra.mxu0 0
      %2905 = vmatprep.mubr.bf16.mxu0 0
      %2906 = vmatmul.mubr.bf16.gmra.mrb[0].mxu0 %v2871
      %v2907 = vpop.f32.mrb[0].mxu0
      %v2908 = vadd.f32 %v2855, %v2907
      %v2909 = vpop.f32.mrb[0].mxu0
      %v2910 = vpop.f32.mrb[0].mxu0
      %v2911 = vadd.f32 %v2855, %v2910
      %v2912 = vpop.f32.mrb[0].mxu0
      %2913 = vdwg.mxu0
      %2914 = vst [vmem:[%s886] sm:$0xff] %v2908
      %2915 = vst [vmem:[%s886 + $0x8] sm:$0xff] %v2911
      %v2916 = vld [vmem:[%s871] sm:$0xff]
      %v2917 = vld [vmem:[%s871 + $0x8] sm:$0xf]
      %v2918 = vld [vmem:[%s4] sm:$0x1]
      %2920 = vset.pattern.permute.xlu0 0
      %2921 = vperm.xlu0 %2920, %v2916
      %v2922 = vpop.permute.xlu0 %2921
      %2925 = vset.pattern.permute.xlu0 0
      %2926 = vperm.xlu0 %2925, %v2917
      %v2927 = vpop.permute.xlu0 %2926
      %v2929 = vlaneseq
      %v2930 = vshrl.u32 %v2929, 7
      %v2931 = vsub.s32 0, %v2930
      %v2932 = vrot.slane %v2918, %v2931
      %v2933 = vmul.f32 %v2922, %v2932
      %v2934 = vmul.f32 %v2927, %v2932
      %v2935 = vld [vmem:[%s4 + $0x1] sm:$0x1]
      %2936 = vset.pattern.permute.xlu0 1
      %2937 = vperm.xlu0 %2936, %v2916
      %v2938 = vpop.permute.xlu0 %2937
      %2940 = vset.pattern.permute.xlu0 1
      %2941 = vperm.xlu0 %2940, %v2917
      %v2942 = vpop.permute.xlu0 %2941
      %v2944 = vlaneseq
      %v2945 = vshrl.u32 %v2944, 7
      %v2946 = vsub.s32 0, %v2945
      %v2947 = vrot.slane %v2935, %v2946
      %v2948 = vmul.f32 %v2938, %v2947
      %v2949 = vmul.f32 %v2942, %v2947
      %v2950 = vadd.f32 %v2933, %v2948
      %v2951 = vadd.f32 %v2934, %v2949
      %v2952 = vld [vmem:[%s4 + $0x2] sm:$0x1]
      %2953 = vset.pattern.permute.xlu0 2
      %2954 = vperm.xlu0 %2953, %v2916
      %v2955 = vpop.permute.xlu0 %2954
      %2957 = vset.pattern.permute.xlu0 2
      %2958 = vperm.xlu0 %2957, %v2917
      %v2959 = vpop.permute.xlu0 %2958
      %v2961 = vlaneseq
      %v2962 = vshrl.u32 %v2961, 7
      %v2963 = vsub.s32 0, %v2962
      %v2964 = vrot.slane %v2952, %v2963
      %v2965 = vmul.f32 %v2955, %v2964
      %v2966 = vmul.f32 %v2959, %v2964
      %v2967 = vadd.f32 %v2950, %v2965
      %v2968 = vadd.f32 %v2951, %v2966
      %v2969 = vld [vmem:[%s5] sm:$0x1]
      %v2971 = vlaneseq
      %v2972 = vshrl.u32 %v2971, 7
      %v2973 = vsub.s32 0, %v2972
      %v2974 = vrot.slane %v2969, %v2973
      %v2976 = vadd.f32 %v2967, %v2974
      %v2977 = vadd.f32 %v2968, %v2974
      %v2978 = vand.u32 2147483647, %v2976
      %vm2979 = vcmp.le.f32.partialorder %v2978, 0.7853982
      %vm2980 = vcmp.lt.s32.totalorder %v2976, 0
      %v2981 = vand.u32 %v2976, 2139095040
      %v2982 = vshrl.u32 %v2981, 23
      %v2983 = vsub.s32 %v2982, 127
      %v2984 = vand.u32 2147483647, %v2976
      %v2985 = vand.u32 %v2984, 8388607
      %v2986 = vor.u32 %v2985, 8388608
      %v2987 = vsub.s32 0, %v2986
      %v2988 = vadd.s32 %v2983, 1
      %vm2989 = vcmp.gt.s32.totalorder %v2988, 0
      %v2990 = vsel %vm2989, %v2988, 0
      %v2991 = vshrl.u32 %v2990, 5
      %v2992 = vand.u32 %v2990, 31
      %v2993 = vsub.s32 32, %v2992
      %v2994 = vshrl.u32 683565275, %v2993
      %v2995 = vshll.u32 683565275, %v2992
      %v2996 = vshrl.u32 2475754826, %v2993
      %v2997 = vor.u32 %v2995, %v2996
      %v2998 = vshll.u32 2475754826, %v2992
      %v2999 = vshrl.u32 2131351028, %v2993
      %v3000 = vor.u32 %v2998, %v2999
      %v3001 = vshll.u32 2131351028, %v2992
      %v3002 = vshrl.u32 2102212464, %v2993
      %v3003 = vor.u32 %v3001, %v3002
      %v3004 = vshll.u32 2102212464, %v2992
      %v3005 = vshrl.u32 920167782, %v2993
      %v3006 = vor.u32 %v3004, %v3005
      %v3007 = vshll.u32 920167782, %v2992
      %v3008 = vshrl.u32 1326507024, %v2993
      %v3009 = vor.u32 %v3007, %v3008
      %vm3010 = vcmp.lt.s32.totalorder %v2991, 1
      %vm3011 = vcmp.lt.s32.totalorder %v2991, 2
      %vm3012 = vcmp.lt.s32.totalorder %v2991, 3
      %vm3013 = vcmp.lt.s32.totalorder %v2991, 4
      %v3014 = vsel %vm3010, %v2994, %v2997
      %v3015 = vsel %vm3013, %v3003, 2102212464
      %v3016 = vsel %vm3012, %v3000, %v3015
      %v3017 = vsel %vm3011, %v3014, %v3016
      %v3018 = vsel %vm3010, %v2997, %v3000
      %v3019 = vsel %vm3013, %v3006, 920167782
      %v3020 = vsel %vm3012, %v3003, %v3019
      %v3021 = vsel %vm3011, %v3018, %v3020
      %v3022 = vsel %vm3010, %v3000, %v3003
      %v3023 = vsel %vm3013, %v3009, 1326507024
      %v3024 = vsel %vm3012, %v3006, %v3023
      %v3025 = vsel %vm3011, %v3022, %v3024
      %v3026 = vshll.u32 %v2986, 8
      %v3027 = vmul.u32.u64.compose %v3026, %v3025
      %v3028 = vextract.low.u32 %v3027
      %v3029 = vextract.high.u32 %v3027
      %v3030 = vmul.u32.u64.compose %v3026, %v3021
      %v3031 = vextract.low.u32 %v3030
      %v3032 = vextract.high.u32 %v3030
      %v3033 = vmul.u32 %v3026, %v3017
      %v3034 = vadd.s32 %v3029, %v3031
      %vm3035 = vc.u32 %v3029, %v3031
      %v3036 = vadd.s32 %v3032, 1
      %v3037 = vsel %vm3035, %v3036, %v3032
      %v3038 = vadd.s32 %v3033, %v3037
      %v3039 = vadd.s32 %v3038, 536870912
      %v3040 = vshrl.u32 %v3039, 30
      %v3041 = vshll.u32 %v3040, 30
      %v3042 = vsub.s32 %v3038, %v3041
      %vm3043 = vcmp.lt.s32.totalorder %v3042, 0
      %v3044 = vsub.s32 0, %v3042
      %v3045 = vsel %vm3043, %v3044, %v3042
      %v3046 = vclz %v3045
      %v3047 = vsub.s32 %v3046, 2
      %vm3048 = vcmp.gt.s32.totalorder 0, %v3047
      %v3049 = vsel %vm3048, 0, %v3047
      %v3050 = vsub.s32 32, %v3049
      %v3051 = vshll.u32 %v3042, %v3049
      %v3052 = vshrl.u32 %v3034, %v3050
      %v3053 = vor.u32 %v3051, %v3052
      %v3054 = vsub.s32 4294967266, %v3049
      %v3055 = vadd.s32 %v3054, 127
      %v3056 = vshll.u32 %v3055, 23
      %v3057 = vor.u32 4788187, %v3056
      %v3058 = vand.u32 2147483647, %v3057
      %v3060 = vcvt.s32.f32 %v3053
      %v3061 = vmul.f32 %v3060, %v3058
      %v3062 = vxor.u32 %v3061, 2147483648
      %v3063 = vsel %vm2980, %v3062, %v3061
      %v3064 = vsub.s32 4, %v3040
      %v3065 = vsel %vm2980, %v3064, %v3040
      %v3066 = vsel %vm2979, %v2976, %v3063
      %v3067 = vsel %vm2979, 0, %v3065
      %v3068 = vcosq.f32.pop %v3066
      %v3069 = vsinq.f32.pop %v3066
      %vm3070 = vweird.f32 %v2976
      %v3071 = vand.u32 %v3067, 3
      %vm3072 = vcmp.lt.s32.totalorder %v3071, 2
      %vm3073 = vcmp.eq.s32.totalorder %v3071, 0
      %v3074 = vxor.u32 %v3069, 2147483648
      %v3075 = vsel %vm3073, %v3068, %v3074
      %vm3076 = vcmp.eq.s32.totalorder %v3071, 2
      %v3077 = vxor.u32 %v3068, 2147483648
      %v3078 = vsel %vm3076, %v3077, %v3069
      %v3079 = vsel %vm3072, %v3075, %v3078
      %v3080 = vsel %vm3070, nan, %v3079
      %v3081 = vand.u32 2147483647, %v2977
      %vm3082 = vcmp.le.f32.partialorder %v3081, 0.7853982
      %vm3083 = vcmp.lt.s32.totalorder %v2977, 0
      %v3084 = vand.u32 %v2977, 2139095040
      %v3085 = vshrl.u32 %v3084, 23
      %v3086 = vsub.s32 %v3085, 127
      %v3087 = vand.u32 2147483647, %v2977
      %v3088 = vand.u32 %v3087, 8388607
      %v3089 = vor.u32 %v3088, 8388608
      %v3090 = vsub.s32 0, %v3089
      %v3091 = vadd.s32 %v3086, 1
      %vm3092 = vcmp.gt.s32.totalorder %v3091, 0
      %v3093 = vsel %vm3092, %v3091, 0
      %v3094 = vshrl.u32 %v3093, 5
      %v3095 = vand.u32 %v3093, 31
      %v3096 = vsub.s32 32, %v3095
      %v3097 = vshrl.u32 683565275, %v3096
      %v3098 = vshll.u32 683565275, %v3095
      %v3099 = vshrl.u32 2475754826, %v3096
      %v3100 = vor.u32 %v3098, %v3099
      %v3101 = vshll.u32 2475754826, %v3095
      %v3102 = vshrl.u32 2131351028, %v3096
      %v3103 = vor.u32 %v3101, %v3102
      %v3104 = vshll.u32 2131351028, %v3095
      %v3105 = vshrl.u32 2102212464, %v3096
      %v3106 = vor.u32 %v3104, %v3105
      %v3107 = vshll.u32 2102212464, %v3095
      %v3108 = vshrl.u32 920167782, %v3096
      %v3109 = vor.u32 %v3107, %v3108
      %v3110 = vshll.u32 920167782, %v3095
      %v3111 = vshrl.u32 1326507024, %v3096
      %v3112 = vor.u32 %v3110, %v3111
      %vm3113 = vcmp.lt.s32.totalorder %v3094, 1
      %vm3114 = vcmp.lt.s32.totalorder %v3094, 2
      %vm3115 = vcmp.lt.s32.totalorder %v3094, 3
      %vm3116 = vcmp.lt.s32.totalorder %v3094, 4
      %v3117 = vsel %vm3113, %v3097, %v3100
      %v3118 = vsel %vm3116, %v3106, 2102212464
      %v3119 = vsel %vm3115, %v3103, %v3118
      %v3120 = vsel %vm3114, %v3117, %v3119
      %v3121 = vsel %vm3113, %v3100, %v3103
      %v3122 = vsel %vm3116, %v3109, 920167782
      %v3123 = vsel %vm3115, %v3106, %v3122
      %v3124 = vsel %vm3114, %v3121, %v3123
      %v3125 = vsel %vm3113, %v3103, %v3106
      %v3126 = vsel %vm3116, %v3112, 1326507024
      %v3127 = vsel %vm3115, %v3109, %v3126
      %v3128 = vsel %vm3114, %v3125, %v3127
      %v3129 = vshll.u32 %v3089, 8
      %v3130 = vmul.u32.u64.compose %v3129, %v3128
      %v3131 = vextract.low.u32 %v3130
      %v3132 = vextract.high.u32 %v3130
      %v3133 = vmul.u32.u64.compose %v3129, %v3124
      %v3134 = vextract.low.u32 %v3133
      %v3135 = vextract.high.u32 %v3133
      %v3136 = vmul.u32 %v3129, %v3120
      %v3137 = vadd.s32 %v3132, %v3134
      %vm3138 = vc.u32 %v3132, %v3134
      %v3139 = vadd.s32 %v3135, 1
      %v3140 = vsel %vm3138, %v3139, %v3135
      %v3141 = vadd.s32 %v3136, %v3140
      %v3142 = vadd.s32 %v3141, 536870912
      %v3143 = vshrl.u32 %v3142, 30
      %v3144 = vshll.u32 %v3143, 30
      %v3145 = vsub.s32 %v3141, %v3144
      %vm3146 = vcmp.lt.s32.totalorder %v3145, 0
      %v3147 = vsub.s32 0, %v3145
      %v3148 = vsel %vm3146, %v3147, %v3145
      %v3149 = vclz %v3148
      %v3150 = vsub.s32 %v3149, 2
      %vm3151 = vcmp.gt.s32.totalorder 0, %v3150
      %v3152 = vsel %vm3151, 0, %v3150
      %v3153 = vsub.s32 32, %v3152
      %v3154 = vshll.u32 %v3145, %v3152
      %v3155 = vshrl.u32 %v3137, %v3153
      %v3156 = vor.u32 %v3154, %v3155
      %v3157 = vsub.s32 4294967266, %v3152
      %v3158 = vadd.s32 %v3157, 127
      %v3159 = vshll.u32 %v3158, 23
      %v3160 = vor.u32 4788187, %v3159
      %v3161 = vand.u32 2147483647, %v3160
      %v3163 = vcvt.s32.f32 %v3156
      %v3164 = vmul.f32 %v3163, %v3161
      %v3165 = vxor.u32 %v3164, 2147483648
      %v3166 = vsel %vm3083, %v3165, %v3164
      %v3167 = vsub.s32 4, %v3143
      %v3168 = vsel %vm3083, %v3167, %v3143
      %v3169 = vsel %vm3082, %v2977, %v3166
      %v3170 = vsel %vm3082, 0, %v3168
      %v3171 = vcosq.f32.pop %v3169
      %v3172 = vsinq.f32.pop %v3169
      %vm3173 = vweird.f32 %v2977
      %v3174 = vand.u32 %v3170, 3
      %vm3175 = vcmp.lt.s32.totalorder %v3174, 2
      %vm3176 = vcmp.eq.s32.totalorder %v3174, 0
      %v3177 = vxor.u32 %v3172, 2147483648
      %v3178 = vsel %vm3176, %v3171, %v3177
      %vm3179 = vcmp.eq.s32.totalorder %v3174, 2
      %v3180 = vxor.u32 %v3171, 2147483648
      %v3181 = vsel %vm3179, %v3180, %v3172
      %v3182 = vsel %vm3175, %v3178, %v3181
      %v3183 = vsel %vm3173, nan, %v3182
      %v3184 = vand.u32 2147483647, %v2976
      %vm3185 = vcmp.le.f32.partialorder %v3184, 0.7853982
      %vm3186 = vcmp.lt.s32.totalorder %v2976, 0
      %v3187 = vand.u32 %v2976, 2139095040
      %v3188 = vshrl.u32 %v3187, 23
      %v3189 = vsub.s32 %v3188, 127
      %v3190 = vand.u32 2147483647, %v2976
      %v3191 = vand.u32 %v3190, 8388607
      %v3192 = vor.u32 %v3191, 8388608
      %v3193 = vsub.s32 0, %v3192
      %v3194 = vadd.s32 %v3189, 1
      %vm3195 = vcmp.gt.s32.totalorder %v3194, 0
      %v3196 = vsel %vm3195, %v3194, 0
      %v3197 = vshrl.u32 %v3196, 5
      %v3198 = vand.u32 %v3196, 31
      %v3199 = vsub.s32 32, %v3198
      %v3200 = vshrl.u32 683565275, %v3199
      %v3201 = vshll.u32 683565275, %v3198
      %v3202 = vshrl.u32 2475754826, %v3199
      %v3203 = vor.u32 %v3201, %v3202
      %v3204 = vshll.u32 2475754826, %v3198
      %v3205 = vshrl.u32 2131351028, %v3199
      %v3206 = vor.u32 %v3204, %v3205
      %v3207 = vshll.u32 2131351028, %v3198
      %v3208 = vshrl.u32 2102212464, %v3199
      %v3209 = vor.u32 %v3207, %v3208
      %v3210 = vshll.u32 2102212464, %v3198
      %v3211 = vshrl.u32 920167782, %v3199
      %v3212 = vor.u32 %v3210, %v3211
      %v3213 = vshll.u32 920167782, %v3198
      %v3214 = vshrl.u32 1326507024, %v3199
      %v3215 = vor.u32 %v3213, %v3214
      %vm3216 = vcmp.lt.s32.totalorder %v3197, 1
      %vm3217 = vcmp.lt.s32.totalorder %v3197, 2
      %vm3218 = vcmp.lt.s32.totalorder %v3197, 3
      %vm3219 = vcmp.lt.s32.totalorder %v3197, 4
      %v3220 = vsel %vm3216, %v3200, %v3203
      %v3221 = vsel %vm3219, %v3209, 2102212464
      %v3222 = vsel %vm3218, %v3206, %v3221
      %v3223 = vsel %vm3217, %v3220, %v3222
      %v3224 = vsel %vm3216, %v3203, %v3206
      %v3225 = vsel %vm3219, %v3212, 920167782
      %v3226 = vsel %vm3218, %v3209, %v3225
      %v3227 = vsel %vm3217, %v3224, %v3226
      %v3228 = vsel %vm3216, %v3206, %v3209
      %v3229 = vsel %vm3219, %v3215, 1326507024
      %v3230 = vsel %vm3218, %v3212, %v3229
      %v3231 = vsel %vm3217, %v3228, %v3230
      %v3232 = vshll.u32 %v3192, 8
      %v3233 = vmul.u32.u64.compose %v3232, %v3231
      %v3234 = vextract.low.u32 %v3233
      %v3235 = vextract.high.u32 %v3233
      %v3236 = vmul.u32.u64.compose %v3232, %v3227
      %v3237 = vextract.low.u32 %v3236
      %v3238 = vextract.high.u32 %v3236
      %v3239 = vmul.u32 %v3232, %v3223
      %v3240 = vadd.s32 %v3235, %v3237
      %vm3241 = vc.u32 %v3235, %v3237
      %v3242 = vadd.s32 %v3238, 1
      %v3243 = vsel %vm3241, %v3242, %v3238
      %v3244 = vadd.s32 %v3239, %v3243
      %v3245 = vadd.s32 %v3244, 536870912
      %v3246 = vshrl.u32 %v3245, 30
      %v3247 = vshll.u32 %v3246, 30
      %v3248 = vsub.s32 %v3244, %v3247
      %vm3249 = vcmp.lt.s32.totalorder %v3248, 0
      %v3250 = vsub.s32 0, %v3248
      %v3251 = vsel %vm3249, %v3250, %v3248
      %v3252 = vclz %v3251
      %v3253 = vsub.s32 %v3252, 2
      %vm3254 = vcmp.gt.s32.totalorder 0, %v3253
      %v3255 = vsel %vm3254, 0, %v3253
      %v3256 = vsub.s32 32, %v3255
      %v3257 = vshll.u32 %v3248, %v3255
      %v3258 = vshrl.u32 %v3240, %v3256
      %v3259 = vor.u32 %v3257, %v3258
      %v3260 = vsub.s32 4294967266, %v3255
      %v3261 = vadd.s32 %v3260, 127
      %v3262 = vshll.u32 %v3261, 23
      %v3263 = vor.u32 4788187, %v3262
      %v3264 = vand.u32 2147483647, %v3263
      %v3266 = vcvt.s32.f32 %v3259
      %v3267 = vmul.f32 %v3266, %v3264
      %v3268 = vxor.u32 %v3267, 2147483648
      %v3269 = vsel %vm3186, %v3268, %v3267
      %v3270 = vsub.s32 4, %v3246
      %v3271 = vsel %vm3186, %v3270, %v3246
      %v3272 = vsel %vm3185, %v2976, %v3269
      %v3273 = vsel %vm3185, 0, %v3271
      %v3274 = vcosq.f32.pop %v3272
      %v3275 = vsinq.f32.pop %v3272
      %vm3276 = vweird.f32 %v2976
      %v3277 = vadd.s32 %v3273, 3
      %v3278 = vand.u32 %v3277, 3
      %vm3279 = vcmp.lt.s32.totalorder %v3278, 2
      %vm3280 = vcmp.eq.s32.totalorder %v3278, 0
      %v3281 = vxor.u32 %v3275, 2147483648
      %v3282 = vsel %vm3280, %v3274, %v3281
      %vm3283 = vcmp.eq.s32.totalorder %v3278, 2
      %v3284 = vxor.u32 %v3274, 2147483648
      %v3285 = vsel %vm3283, %v3284, %v3275
      %v3286 = vsel %vm3279, %v3282, %v3285
      %v3287 = vsel %vm3276, nan, %v3286
      %v3288 = vand.u32 2147483647, %v2977
      %vm3289 = vcmp.le.f32.partialorder %v3288, 0.7853982
      %vm3290 = vcmp.lt.s32.totalorder %v2977, 0
      %v3291 = vand.u32 %v2977, 2139095040
      %v3292 = vshrl.u32 %v3291, 23
      %v3293 = vsub.s32 %v3292, 127
      %v3294 = vand.u32 2147483647, %v2977
      %v3295 = vand.u32 %v3294, 8388607
      %v3296 = vor.u32 %v3295, 8388608
      %v3297 = vsub.s32 0, %v3296
      %v3298 = vadd.s32 %v3293, 1
      %vm3299 = vcmp.gt.s32.totalorder %v3298, 0
      %v3300 = vsel %vm3299, %v3298, 0
      %v3301 = vshrl.u32 %v3300, 5
      %v3302 = vand.u32 %v3300, 31
      %v3303 = vsub.s32 32, %v3302
      %v3304 = vshrl.u32 683565275, %v3303
      %v3305 = vshll.u32 683565275, %v3302
      %v3306 = vshrl.u32 2475754826, %v3303
      %v3307 = vor.u32 %v3305, %v3306
      %v3308 = vshll.u32 2475754826, %v3302
      %v3309 = vshrl.u32 2131351028, %v3303
      %v3310 = vor.u32 %v3308, %v3309
      %v3311 = vshll.u32 2131351028, %v3302
      %v3312 = vshrl.u32 2102212464, %v3303
      %v3313 = vor.u32 %v3311, %v3312
      %v3314 = vshll.u32 2102212464, %v3302
      %v3315 = vshrl.u32 920167782, %v3303
      %v3316 = vor.u32 %v3314, %v3315
      %v3317 = vshll.u32 920167782, %v3302
      %v3318 = vshrl.u32 1326507024, %v3303
      %v3319 = vor.u32 %v3317, %v3318
      %vm3320 = vcmp.lt.s32.totalorder %v3301, 1
      %vm3321 = vcmp.lt.s32.totalorder %v3301, 2
      %vm3322 = vcmp.lt.s32.totalorder %v3301, 3
      %vm3323 = vcmp.lt.s32.totalorder %v3301, 4
      %v3324 = vsel %vm3320, %v3304, %v3307
      %v3325 = vsel %vm3323, %v3313, 2102212464
      %v3326 = vsel %vm3322, %v3310, %v3325
      %v3327 = vsel %vm3321, %v3324, %v3326
      %v3328 = vsel %vm3320, %v3307, %v3310
      %v3329 = vsel %vm3323, %v3316, 920167782
      %v3330 = vsel %vm3322, %v3313, %v3329
      %v3331 = vsel %vm3321, %v3328, %v3330
      %v3332 = vsel %vm3320, %v3310, %v3313
      %v3333 = vsel %vm3323, %v3319, 1326507024
      %v3334 = vsel %vm3322, %v3316, %v3333
      %v3335 = vsel %vm3321, %v3332, %v3334
      %v3336 = vshll.u32 %v3296, 8
      %v3337 = vmul.u32.u64.compose %v3336, %v3335
      %v3338 = vextract.low.u32 %v3337
      %v3339 = vextract.high.u32 %v3337
      %v3340 = vmul.u32.u64.compose %v3336, %v3331
      %v3341 = vextract.low.u32 %v3340
      %v3342 = vextract.high.u32 %v3340
      %v3343 = vmul.u32 %v3336, %v3327
      %v3344 = vadd.s32 %v3339, %v3341
      %vm3345 = vc.u32 %v3339, %v3341
      %v3346 = vadd.s32 %v3342, 1
      %v3347 = vsel %vm3345, %v3346, %v3342
      %v3348 = vadd.s32 %v3343, %v3347
      %v3349 = vadd.s32 %v3348, 536870912
      %v3350 = vshrl.u32 %v3349, 30
      %v3351 = vshll.u32 %v3350, 30
      %v3352 = vsub.s32 %v3348, %v3351
      %vm3353 = vcmp.lt.s32.totalorder %v3352, 0
      %v3354 = vsub.s32 0, %v3352
      %v3355 = vsel %vm3353, %v3354, %v3352
      %v3356 = vclz %v3355
      %v3357 = vsub.s32 %v3356, 2
      %vm3358 = vcmp.gt.s32.totalorder 0, %v3357
      %v3359 = vsel %vm3358, 0, %v3357
      %v3360 = vsub.s32 32, %v3359
      %v3361 = vshll.u32 %v3352, %v3359
      %v3362 = vshrl.u32 %v3344, %v3360
      %v3363 = vor.u32 %v3361, %v3362
      %v3364 = vsub.s32 4294967266, %v3359
      %v3365 = vadd.s32 %v3364, 127
      %v3366 = vshll.u32 %v3365, 23
      %v3367 = vor.u32 4788187, %v3366
      %v3368 = vand.u32 2147483647, %v3367
      %v3370 = vcvt.s32.f32 %v3363
      %v3371 = vmul.f32 %v3370, %v3368
      %v3372 = vxor.u32 %v3371, 2147483648
      %v3373 = vsel %vm3290, %v3372, %v3371
      %v3374 = vsub.s32 4, %v3350
      %v3375 = vsel %vm3290, %v3374, %v3350
      %v3376 = vsel %vm3289, %v2977, %v3373
      %v3377 = vsel %vm3289, 0, %v3375
      %v3378 = vcosq.f32.pop %v3376
      %v3379 = vsinq.f32.pop %v3376
      %vm3380 = vweird.f32 %v2977
      %v3381 = vadd.s32 %v3377, 3
      %v3382 = vand.u32 %v3381, 3
      %vm3383 = vcmp.lt.s32.totalorder %v3382, 2
      %vm3384 = vcmp.eq.s32.totalorder %v3382, 0
      %v3385 = vxor.u32 %v3379, 2147483648
      %v3386 = vsel %vm3384, %v3378, %v3385
      %vm3387 = vcmp.eq.s32.totalorder %v3382, 2
      %v3388 = vxor.u32 %v3378, 2147483648
      %v3389 = vsel %vm3387, %v3388, %v3379
      %v3390 = vsel %vm3383, %v3386, %v3389
      %v3391 = vsel %vm3380, nan, %v3390
      %3394 = vrot.lane.b32.xlu0 %v3080, 120
      %v3395 = vpop.permute.xlu0 %3394
      %3396 = vrot.lane.b32.xlu0 %v3183, 120
      %v3397 = vpop.permute.xlu0 %3396
      %3400 = vrot.lane.b32.xlu0 %v3080, 112
      %v3401 = vpop.permute.xlu0 %3400
      %3402 = vrot.lane.b32.xlu0 %v3183, 112
      %v3403 = vpop.permute.xlu0 %3402
      %3406 = vrot.lane.b32.xlu0 %v3080, 104
      %v3407 = vpop.permute.xlu0 %3406
      %3408 = vrot.lane.b32.xlu0 %v3183, 104
      %v3409 = vpop.permute.xlu0 %3408
      %3414 = vrot.lane.b32.xlu0 %v3287, 120
      %v3415 = vpop.permute.xlu0 %3414
      %3416 = vrot.lane.b32.xlu0 %v3391, 120
      %v3417 = vpop.permute.xlu0 %3416
      %3418 = vrot.lane.b32.xlu0 %v3287, 112
      %v3419 = vpop.permute.xlu0 %3418
      %3420 = vrot.lane.b32.xlu0 %v3391, 112
      %v3421 = vpop.permute.xlu0 %3420
      %3422 = vrot.lane.b32.xlu0 %v3287, 104
      %v3423 = vpop.permute.xlu0 %3422
      %3424 = vrot.lane.b32.xlu0 %v3391, 104
      %v3425 = vpop.permute.xlu0 %3424
      %v3426 = vld [vmem:[%s881] sm:$0xff]
      %v3427 = vld [vmem:[%s881 + $0x8] sm:$0xf]
      %v3428 = vpack.c.bf16 %v3427, %v3426
      %v3429 = vld [vmem:[%s6] sm:$0xf]
      %v3430 = vld [vmem:[%s7] sm:$0x1]
      %v3432 = vlaneseq
      %v3433 = vshrl.u32 %v3432, 7
      %v3434 = vsub.s32 0, %v3433
      %v3435 = vrot.slane %v3430, %v3434
      %v3438 = vsel %vm1414, %v3428, 0
      %v3441 = vsel %vm1418, %v3429, 0
      %3443 = vmatprep.subr.bf16.mxu0 0
      %3444 = vmatpush1.bf16.msra.mxu0 %v3441
      %3445 = vmatprep.subr.bf16.mxu0 0
      %3446 = vmatpush1.bf16.msra.mxu0 0
      %3447 = vmatprep.subr.bf16.mxu0 0
      %3448 = vmatpush1.bf16.msra.mxu0 0
      %3449 = vmatprep.subr.bf16.mxu0 0
      %3450 = vmatpush1.bf16.msra.mxu0 0
      %3451 = vmatprep.subr.bf16.mxu0 0
      %3452 = vmatpush1.bf16.msra.mxu0 0
      %3453 = vmatprep.subr.bf16.mxu0 0
      %3454 = vmatpush1.bf16.msra.mxu0 0
      %3455 = vmatprep.subr.bf16.mxu0 0
      %3456 = vmatpush1.bf16.msra.mxu0 0
      %3457 = vmatprep.subr.bf16.mxu0 0
      %3458 = vmatpush1.bf16.msra.mxu0 0
      %3459 = vmatprep.subr.bf16.mxu0 0
      %3460 = vmatpush1.bf16.msra.mxu0 0
      %3461 = vmatprep.subr.bf16.mxu0 0
      %3462 = vmatpush1.bf16.msra.mxu0 0
      %3463 = vmatprep.subr.bf16.mxu0 0
      %3464 = vmatpush1.bf16.msra.mxu0 0
      %3465 = vmatprep.subr.bf16.mxu0 0
      %3466 = vmatpush1.bf16.msra.mxu0 0
      %3467 = vmatprep.subr.bf16.mxu0 0
      %3468 = vmatpush1.bf16.msra.mxu0 0
      %3469 = vmatprep.subr.bf16.mxu0 0
      %3470 = vmatpush1.bf16.msra.mxu0 0
      %3471 = vmatprep.subr.bf16.mxu0 0
      %3472 = vmatpush1.bf16.msra.mxu0 0
      %3473 = vmatprep.subr.bf16.mxu0 0
      %3474 = vmatpush1.bf16.msra.mxu0 0
      %3475 = vmatprep.mubr.bf16.mxu0 0
      %3476 = vmatmul.mubr.bf16.gmra.mrb[0].mxu0 %v3438
      %v3477 = vpop.f32.mrb[0].mxu0
      %v3478 = vadd.f32 %v3435, %v3477
      %v3479 = vpop.f32.mrb[0].mxu0
      %v3480 = vpop.f32.mrb[0].mxu0
      %v3481 = vadd.f32 %v3435, %v3480
      %v3482 = vpop.f32.mrb[0].mxu0
      %3483 = vdwg.mxu0
      loop: start=0, step=1, limit=2
      $region132: #{thdroformer_self.1} parent=123 // loop_pre_header
        _
      $region133: #{thdroformer_self.1} parent=123 // loop_header
        %s3485 = sphi 0, %s3489
        %p3486 = scmp.ge.s32.totalorder %s3485, 2
        %v3490 = vphi %v3478, %v4879
        %v3491 = vphi %v3481, %v4880
      $region134: #{thdroformer_self.1} parent=123 // loop_header_branch
        %3488 = sbr.rel (%p3486) target = $region138
      $region135: #{thdroformer_self.1} parent=123 // loop_body
        %v3492 = vpack.c.bf16 %v3491, %v3490
        %s3493 = smul.u32 %s3485, 4
        %s3494 = smul.addr %s3493, 4
        %s3495 = scalar_lea.vmem %s10, %s3494
        %v3496 = vld [vmem:[%s3495] sm:$0xf]
        %v3497 = vld [vmem:[%s3495 + $0x4] sm:$0xf]
        %v3498 = vld [vmem:[%s3495 + $0x8] sm:$0xf]
        %v3499 = vld [vmem:[%s3495 + $0xc] sm:$0xf]
        %s3500 = scalar_lea.vmem %s11, %s3485
        %v3501 = vld [vmem:[%s3500] sm:$0x1]
        %v3503 = vlaneseq
        %v3504 = vshrl.u32 %v3503, 7
        %v3505 = vsub.s32 0, %v3504
        %v3506 = vrot.slane %v3501, %v3505
        %v3512 = vunpack.c.l.b16 %v3496
        %v3513 = vunpack.c.l.b16 %v3497
        %v3514 = vunpack.c.l.b16 %v3498
        %v3515 = vunpack.c.l.b16 %v3499
        %v3516 = vpack.c.b16 %v3513, %v3512
        %v3517 = vpack.c.b16 %v3515, %v3514
        %v3521 = vsel %vm2869, %v3492, 0
        %3523 = vmatprep.subr.bf16.mxu0 0
        %3524 = vmatpush1.bf16.msra.mxu0 %v3516
        %3525 = vmatprep.subr.bf16.mxu0 0
        %3526 = vmatpush1.bf16.msra.mxu0 %v3517
        %3527 = vmatprep.subr.bf16.mxu0 0
        %3528 = vmatpush1.bf16.msra.mxu0 0
        %3529 = vmatprep.subr.bf16.mxu0 0
        %3530 = vmatpush1.bf16.msra.mxu0 0
        %3531 = vmatprep.subr.bf16.mxu0 0
        %3532 = vmatpush1.bf16.msra.mxu0 0
        %3533 = vmatprep.subr.bf16.mxu0 0
        %3534 = vmatpush1.bf16.msra.mxu0 0
        %3535 = vmatprep.subr.bf16.mxu0 0
        %3536 = vmatpush1.bf16.msra.mxu0 0
        %3537 = vmatprep.subr.bf16.mxu0 0
        %3538 = vmatpush1.bf16.msra.mxu0 0
        %3539 = vmatprep.subr.bf16.mxu0 0
        %3540 = vmatpush1.bf16.msra.mxu0 0
        %3541 = vmatprep.subr.bf16.mxu0 0
        %3542 = vmatpush1.bf16.msra.mxu0 0
        %3543 = vmatprep.subr.bf16.mxu0 0
        %3544 = vmatpush1.bf16.msra.mxu0 0
        %3545 = vmatprep.subr.bf16.mxu0 0
        %3546 = vmatpush1.bf16.msra.mxu0 0
        %3547 = vmatprep.subr.bf16.mxu0 0
        %3548 = vmatpush1.bf16.msra.mxu0 0
        %3549 = vmatprep.subr.bf16.mxu0 0
        %3550 = vmatpush1.bf16.msra.mxu0 0
        %3551 = vmatprep.subr.bf16.mxu0 0
        %3552 = vmatpush1.bf16.msra.mxu0 0
        %3553 = vmatprep.subr.bf16.mxu0 0
        %3554 = vmatpush1.bf16.msra.mxu0 0
        %3555 = vmatprep.mubr.bf16.mxu0 0
        %3556 = vmatmul.mubr.bf16.gmra.mrb[0].mxu0 %v3521
        %v3557 = vpop.f32.mrb[0].mxu0
        %v3558 = vadd.f32 %v3506, %v3557
        %v3559 = vpop.f32.mrb[0].mxu0
        %v3560 = vpop.f32.mrb[0].mxu0
        %v3561 = vadd.f32 %v3506, %v3560
        %v3562 = vpop.f32.mrb[0].mxu0
        %3563 = vdwg.mxu0
        %s3564 = smul.addr %s3493, 4
        %s3565 = scalar_lea.vmem %s12, %s3564
        %v3566 = vld [vmem:[%s3565] sm:$0xf]
        %v3567 = vld [vmem:[%s3565 + $0x4] sm:$0xf]
        %v3568 = vld [vmem:[%s3565 + $0x8] sm:$0xf]
        %v3569 = vld [vmem:[%s3565 + $0xc] sm:$0xf]
        %s3570 = scalar_lea.vmem %s13, %s3485
        %v3571 = vld [vmem:[%s3570] sm:$0x1]
        %v3573 = vlaneseq
        %v3574 = vshrl.u32 %v3573, 7
        %v3575 = vsub.s32 0, %v3574
        %v3576 = vrot.slane %v3571, %v3575
        %v3582 = vunpack.c.l.b16 %v3566
        %v3583 = vunpack.c.l.b16 %v3567
        %v3584 = vunpack.c.l.b16 %v3568
        %v3585 = vunpack.c.l.b16 %v3569
        %v3586 = vpack.c.b16 %v3583, %v3582
        %v3587 = vpack.c.b16 %v3585, %v3584
        %3590 = vmatprep.subr.bf16.mxu0 0
        %3591 = vmatpush1.bf16.msra.mxu0 %v3586
        %3592 = vmatprep.subr.bf16.mxu0 0
        %3593 = vmatpush1.bf16.msra.mxu0 %v3587
        %3594 = vmatprep.subr.bf16.mxu0 0
        %3595 = vmatpush1.bf16.msra.mxu0 0
        %3596 = vmatprep.subr.bf16.mxu0 0
        %3597 = vmatpush1.bf16.msra.mxu0 0
        %3598 = vmatprep.subr.bf16.mxu0 0
        %3599 = vmatpush1.bf16.msra.mxu0 0
        %3600 = vmatprep.subr.bf16.mxu0 0
        %3601 = vmatpush1.bf16.msra.mxu0 0
        %3602 = vmatprep.subr.bf16.mxu0 0
        %3603 = vmatpush1.bf16.msra.mxu0 0
        %3604 = vmatprep.subr.bf16.mxu0 0
        %3605 = vmatpush1.bf16.msra.mxu0 0
        %3606 = vmatprep.subr.bf16.mxu0 0
        %3607 = vmatpush1.bf16.msra.mxu0 0
        %3608 = vmatprep.subr.bf16.mxu0 0
        %3609 = vmatpush1.bf16.msra.mxu0 0
        %3610 = vmatprep.subr.bf16.mxu0 0
        %3611 = vmatpush1.bf16.msra.mxu0 0
        %3612 = vmatprep.subr.bf16.mxu0 0
        %3613 = vmatpush1.bf16.msra.mxu0 0
        %3614 = vmatprep.subr.bf16.mxu0 0
        %3615 = vmatpush1.bf16.msra.mxu0 0
        %3616 = vmatprep.subr.bf16.mxu0 0
        %3617 = vmatpush1.bf16.msra.mxu0 0
        %3618 = vmatprep.subr.bf16.mxu0 0
        %3619 = vmatpush1.bf16.msra.mxu0 0
        %3620 = vmatprep.subr.bf16.mxu0 0
        %3621 = vmatpush1.bf16.msra.mxu0 0
        %3622 = vmatprep.mubr.bf16.mxu0 0
        %3623 = vmatmul.mubr.bf16.gmra.mrb[0].mxu0 %v3521
        %v3624 = vpop.f32.mrb[0].mxu0
        %v3625 = vadd.f32 %v3576, %v3624
        %v3626 = vpop.f32.mrb[0].mxu0
        %v3627 = vpop.f32.mrb[0].mxu0
        %v3628 = vadd.f32 %v3576, %v3627
        %v3629 = vpop.f32.mrb[0].mxu0
        %3630 = vdwg.mxu0
        %s3631 = smul.addr %s3493, 4
        %s3632 = scalar_lea.vmem %s14, %s3631
        %v3633 = vld [vmem:[%s3632] sm:$0xf]
        %v3634 = vld [vmem:[%s3632 + $0x4] sm:$0xf]
        %v3635 = vld [vmem:[%s3632 + $0x8] sm:$0xf]
        %v3636 = vld [vmem:[%s3632 + $0xc] sm:$0xf]
        %s3637 = scalar_lea.vmem %s15, %s3485
        %v3638 = vld [vmem:[%s3637] sm:$0x1]
        %v3640 = vlaneseq
        %v3641 = vshrl.u32 %v3640, 7
        %v3642 = vsub.s32 0, %v3641
        %v3643 = vrot.slane %v3638, %v3642
        %v3649 = vunpack.c.l.b16 %v3633
        %v3650 = vunpack.c.l.b16 %v3634
        %v3651 = vunpack.c.l.b16 %v3635
        %v3652 = vunpack.c.l.b16 %v3636
        %v3653 = vpack.c.b16 %v3650, %v3649
        %v3654 = vpack.c.b16 %v3652, %v3651
        %3657 = vmatprep.subr.bf16.mxu0 0
        %3658 = vmatpush1.bf16.msra.mxu0 %v3653
        %3659 = vmatprep.subr.bf16.mxu0 0
        %3660 = vmatpush1.bf16.msra.mxu0 %v3654
        %3661 = vmatprep.subr.bf16.mxu0 0
        %3662 = vmatpush1.bf16.msra.mxu0 0
        %3663 = vmatprep.subr.bf16.mxu0 0
        %3664 = vmatpush1.bf16.msra.mxu0 0
        %3665 = vmatprep.subr.bf16.mxu0 0
        %3666 = vmatpush1.bf16.msra.mxu0 0
        %3667 = vmatprep.subr.bf16.mxu0 0
        %3668 = vmatpush1.bf16.msra.mxu0 0
        %3669 = vmatprep.subr.bf16.mxu0 0
        %3670 = vmatpush1.bf16.msra.mxu0 0
        %3671 = vmatprep.subr.bf16.mxu0 0
        %3672 = vmatpush1.bf16.msra.mxu0 0
        %3673 = vmatprep.subr.bf16.mxu0 0
        %3674 = vmatpush1.bf16.msra.mxu0 0
        %3675 = vmatprep.subr.bf16.mxu0 0
        %3676 = vmatpush1.bf16.msra.mxu0 0
        %3677 = vmatprep.subr.bf16.mxu0 0
        %3678 = vmatpush1.bf16.msra.mxu0 0
        %3679 = vmatprep.subr.bf16.mxu0 0
        %3680 = vmatpush1.bf16.msra.mxu0 0
        %3681 = vmatprep.subr.bf16.mxu0 0
        %3682 = vmatpush1.bf16.msra.mxu0 0
        %3683 = vmatprep.subr.bf16.mxu0 0
        %3684 = vmatpush1.bf16.msra.mxu0 0
        %3685 = vmatprep.subr.bf16.mxu0 0
        %3686 = vmatpush1.bf16.msra.mxu0 0
        %3687 = vmatprep.subr.bf16.mxu0 0
        %3688 = vmatpush1.bf16.msra.mxu0 0
        %3689 = vmatprep.mubr.bf16.mxu0 0
        %3690 = vmatmul.mubr.bf16.gmra.mrb[0].mxu0 %v3521
        %v3691 = vpop.f32.mrb[0].mxu0
        %v3692 = vadd.f32 %v3643, %v3691
        %v3693 = vpop.f32.mrb[0].mxu0
        %v3694 = vpop.f32.mrb[0].mxu0
        %v3695 = vadd.f32 %v3643, %v3694
        %v3696 = vpop.f32.mrb[0].mxu0
        %3697 = vdwg.mxu0
        %3700 = vrot.lane.b32.xlu0 %v3558, 120
        %v3701 = vpop.permute.xlu0 %3700
        %3702 = vrot.lane.b32.xlu0 %v3561, 120
        %v3703 = vpop.permute.xlu0 %3702
        %3706 = vrot.lane.b32.xlu0 %v3558, 112
        %v3707 = vpop.permute.xlu0 %3706
        %3708 = vrot.lane.b32.xlu0 %v3561, 112
        %v3709 = vpop.permute.xlu0 %3708
        %3712 = vrot.lane.b32.xlu0 %v3558, 104
        %v3713 = vpop.permute.xlu0 %3712
        %3714 = vrot.lane.b32.xlu0 %v3561, 104
        %v3715 = vpop.permute.xlu0 %3714
        %v3718 = vmul.f32 %v3558, %v3080
        %v3719 = vmul.f32 %v3561, %v3183
        %v3720 = vmul.f32 %v3701, %v3395
        %v3721 = vmul.f32 %v3703, %v3397
        %v3722 = vmul.f32 %v3707, %v3401
        %v3723 = vmul.f32 %v3709, %v3403
        %v3724 = vmul.f32 %v3713, %v3407
        %v3725 = vmul.f32 %v3715, %v3409
        %3726 = vrot.lane.b32.xlu0 %v3287, 4
        %v3727 = vpop.permute.xlu0 %3726
        %3728 = vrot.lane.b32.xlu0 %v3391, 4
        %v3729 = vpop.permute.xlu0 %3728
        %3730 = vrot.lane.b32.xlu0 %v3415, 4
        %v3731 = vpop.permute.xlu0 %3730
        %3732 = vrot.lane.b32.xlu0 %v3417, 4
        %v3733 = vpop.permute.xlu0 %3732
        %3734 = vrot.lane.b32.xlu0 %v3419, 4
        %v3735 = vpop.permute.xlu0 %3734
        %3736 = vrot.lane.b32.xlu0 %v3421, 4
        %v3737 = vpop.permute.xlu0 %3736
        %3738 = vrot.lane.b32.xlu0 %v3423, 4
        %v3739 = vpop.permute.xlu0 %3738
        %3740 = vrot.lane.b32.xlu0 %v3425, 4
        %v3741 = vpop.permute.xlu0 %3740
        %v3750 = vmul.f32 %v3558, %v3727
        %v3751 = vmul.f32 %v3561, %v3729
        %v3752 = vmul.f32 %v3701, %v3731
        %v3753 = vmul.f32 %v3703, %v3733
        %v3754 = vmul.f32 %v3707, %v3735
        %v3755 = vmul.f32 %v3709, %v3737
        %v3756 = vmul.f32 %v3713, %v3739
        %v3757 = vmul.f32 %v3715, %v3741
        %3766 = vrot.lane.b32.xlu0 %v3750, 124
        %v3767 = vpop.permute.xlu0 %3766
        %3768 = vrot.lane.b32.xlu0 %v3751, 124
        %v3769 = vpop.permute.xlu0 %3768
        %3770 = vrot.lane.b32.xlu0 %v3752, 124
        %v3771 = vpop.permute.xlu0 %3770
        %3772 = vrot.lane.b32.xlu0 %v3753, 124
        %v3773 = vpop.permute.xlu0 %3772
        %3774 = vrot.lane.b32.xlu0 %v3754, 124
        %v3775 = vpop.permute.xlu0 %3774
        %3776 = vrot.lane.b32.xlu0 %v3755, 124
        %v3777 = vpop.permute.xlu0 %3776
        %3778 = vrot.lane.b32.xlu0 %v3756, 124
        %v3779 = vpop.permute.xlu0 %3778
        %3780 = vrot.lane.b32.xlu0 %v3757, 124
        %v3781 = vpop.permute.xlu0 %3780
        %v3790 = vsub.f32 %v3718, %v3767
        %v3791 = vsub.f32 %v3719, %v3769
        %v3792 = vsub.f32 %v3720, %v3771
        %v3793 = vsub.f32 %v3721, %v3773
        %v3794 = vsub.f32 %v3722, %v3775
        %v3795 = vsub.f32 %v3723, %v3777
        %v3796 = vsub.f32 %v3724, %v3779
        %v3797 = vsub.f32 %v3725, %v3781
        %3798 = vrot.lane.b32.xlu0 %v3287, 124
        %v3799 = vpop.permute.xlu0 %3798
        %3800 = vrot.lane.b32.xlu0 %v3391, 124
        %v3801 = vpop.permute.xlu0 %3800
        %3802 = vrot.lane.b32.xlu0 %v3415, 124
        %v3803 = vpop.permute.xlu0 %3802
        %3804 = vrot.lane.b32.xlu0 %v3417, 124
        %v3805 = vpop.permute.xlu0 %3804
        %3806 = vrot.lane.b32.xlu0 %v3419, 124
        %v3807 = vpop.permute.xlu0 %3806
        %3808 = vrot.lane.b32.xlu0 %v3421, 124
        %v3809 = vpop.permute.xlu0 %3808
        %3810 = vrot.lane.b32.xlu0 %v3423, 124
        %v3811 = vpop.permute.xlu0 %3810
        %3812 = vrot.lane.b32.xlu0 %v3425, 124
        %v3813 = vpop.permute.xlu0 %3812
        %v3822 = vmul.f32 %v3558, %v3799
        %v3823 = vmul.f32 %v3561, %v3801
        %v3824 = vmul.f32 %v3701, %v3803
        %v3825 = vmul.f32 %v3703, %v3805
        %v3826 = vmul.f32 %v3707, %v3807
        %v3827 = vmul.f32 %v3709, %v3809
        %v3828 = vmul.f32 %v3713, %v3811
        %v3829 = vmul.f32 %v3715, %v3813
        %3838 = vrot.lane.b32.xlu0 %v3822, 4
        %v3839 = vpop.permute.xlu0 %3838
        %3840 = vrot.lane.b32.xlu0 %v3823, 4
        %v3841 = vpop.permute.xlu0 %3840
        %3842 = vrot.lane.b32.xlu0 %v3824, 4
        %v3843 = vpop.permute.xlu0 %3842
        %3844 = vrot.lane.b32.xlu0 %v3825, 4
        %v3845 = vpop.permute.xlu0 %3844
        %3846 = vrot.lane.b32.xlu0 %v3826, 4
        %v3847 = vpop.permute.xlu0 %3846
        %3848 = vrot.lane.b32.xlu0 %v3827, 4
        %v3849 = vpop.permute.xlu0 %3848
        %3850 = vrot.lane.b32.xlu0 %v3828, 4
        %v3851 = vpop.permute.xlu0 %3850
        %3852 = vrot.lane.b32.xlu0 %v3829, 4
        %v3853 = vpop.permute.xlu0 %3852
        %v3862 = vadd.f32 %v3718, %v3839
        %v3863 = vadd.f32 %v3719, %v3841
        %v3864 = vadd.f32 %v3720, %v3843
        %v3865 = vadd.f32 %v3721, %v3845
        %v3866 = vadd.f32 %v3722, %v3847
        %v3867 = vadd.f32 %v3723, %v3849
        %v3868 = vadd.f32 %v3724, %v3851
        %v3869 = vadd.f32 %v3725, %v3853
        %vm3870 = vcmask 31744
        %v3871 = vsel %vm3870, %v3790, %v3862
        %v3872 = vsel %vm3870, %v3791, %v3863
        %v3873 = vsel %vm3870, %v3792, %v3864
        %v3874 = vsel %vm3870, %v3793, %v3865
        %v3875 = vsel %vm3870, %v3794, %v3866
        %v3876 = vsel %vm3870, %v3795, %v3867
        %v3877 = vsel %vm3870, %v3796, %v3868
        %v3878 = vsel %vm3870, %v3797, %v3869
        %v3879 = vpack.c.bf16 %v3872, %v3871
        %v3880 = vpack.c.bf16 %v3874, %v3873
        %v3881 = vpack.c.bf16 %v3876, %v3875
        %v3882 = vpack.c.bf16 %v3878, %v3877
        %3885 = vrot.lane.b32.xlu0 %v3625, 120
        %v3886 = vpop.permute.xlu0 %3885
        %3887 = vrot.lane.b32.xlu0 %v3628, 120
        %v3888 = vpop.permute.xlu0 %3887
        %3891 = vrot.lane.b32.xlu0 %v3625, 112
        %v3892 = vpop.permute.xlu0 %3891
        %3893 = vrot.lane.b32.xlu0 %v3628, 112
        %v3894 = vpop.permute.xlu0 %3893
        %3897 = vrot.lane.b32.xlu0 %v3625, 104
        %v3898 = vpop.permute.xlu0 %3897
        %3899 = vrot.lane.b32.xlu0 %v3628, 104
        %v3900 = vpop.permute.xlu0 %3899
        %v3903 = vmul.f32 %v3625, %v3080
        %v3904 = vmul.f32 %v3628, %v3183
        %v3905 = vmul.f32 %v3886, %v3395
        %v3906 = vmul.f32 %v3888, %v3397
        %v3907 = vmul.f32 %v3892, %v3401
        %v3908 = vmul.f32 %v3894, %v3403
        %v3909 = vmul.f32 %v3898, %v3407
        %v3910 = vmul.f32 %v3900, %v3409
        %v3911 = vmul.f32 %v3625, %v3727
        %v3912 = vmul.f32 %v3628, %v3729
        %v3913 = vmul.f32 %v3886, %v3731
        %v3914 = vmul.f32 %v3888, %v3733
        %v3915 = vmul.f32 %v3892, %v3735
        %v3916 = vmul.f32 %v3894, %v3737
        %v3917 = vmul.f32 %v3898, %v3739
        %v3918 = vmul.f32 %v3900, %v3741
        %3927 = vrot.lane.b32.xlu0 %v3911, 124
        %v3928 = vpop.permute.xlu0 %3927
        %3929 = vrot.lane.b32.xlu0 %v3912, 124
        %v3930 = vpop.permute.xlu0 %3929
        %3931 = vrot.lane.b32.xlu0 %v3913, 124
        %v3932 = vpop.permute.xlu0 %3931
        %3933 = vrot.lane.b32.xlu0 %v3914, 124
        %v3934 = vpop.permute.xlu0 %3933
        %3935 = vrot.lane.b32.xlu0 %v3915, 124
        %v3936 = vpop.permute.xlu0 %3935
        %3937 = vrot.lane.b32.xlu0 %v3916, 124
        %v3938 = vpop.permute.xlu0 %3937
        %3939 = vrot.lane.b32.xlu0 %v3917, 124
        %v3940 = vpop.permute.xlu0 %3939
        %3941 = vrot.lane.b32.xlu0 %v3918, 124
        %v3942 = vpop.permute.xlu0 %3941
        %v3951 = vsub.f32 %v3903, %v3928
        %v3952 = vsub.f32 %v3904, %v3930
        %v3953 = vsub.f32 %v3905, %v3932
        %v3954 = vsub.f32 %v3906, %v3934
        %v3955 = vsub.f32 %v3907, %v3936
        %v3956 = vsub.f32 %v3908, %v3938
        %v3957 = vsub.f32 %v3909, %v3940
        %v3958 = vsub.f32 %v3910, %v3942
        %v3959 = vmul.f32 %v3625, %v3799
        %v3960 = vmul.f32 %v3628, %v3801
        %v3961 = vmul.f32 %v3886, %v3803
        %v3962 = vmul.f32 %v3888, %v3805
        %v3963 = vmul.f32 %v3892, %v3807
        %v3964 = vmul.f32 %v3894, %v3809
        %v3965 = vmul.f32 %v3898, %v3811
        %v3966 = vmul.f32 %v3900, %v3813
        %3975 = vrot.lane.b32.xlu0 %v3959, 4
        %v3976 = vpop.permute.xlu0 %3975
        %3977 = vrot.lane.b32.xlu0 %v3960, 4
        %v3978 = vpop.permute.xlu0 %3977
        %3979 = vrot.lane.b32.xlu0 %v3961, 4
        %v3980 = vpop.permute.xlu0 %3979
        %3981 = vrot.lane.b32.xlu0 %v3962, 4
        %v3982 = vpop.permute.xlu0 %3981
        %3983 = vrot.lane.b32.xlu0 %v3963, 4
        %v3984 = vpop.permute.xlu0 %3983
        %3985 = vrot.lane.b32.xlu0 %v3964, 4
        %v3986 = vpop.permute.xlu0 %3985
        %3987 = vrot.lane.b32.xlu0 %v3965, 4
        %v3988 = vpop.permute.xlu0 %3987
        %3989 = vrot.lane.b32.xlu0 %v3966, 4
        %v3990 = vpop.permute.xlu0 %3989
        %v3999 = vadd.f32 %v3903, %v3976
        %v4000 = vadd.f32 %v3904, %v3978
        %v4001 = vadd.f32 %v3905, %v3980
        %v4002 = vadd.f32 %v3906, %v3982
        %v4003 = vadd.f32 %v3907, %v3984
        %v4004 = vadd.f32 %v3908, %v3986
        %v4005 = vadd.f32 %v3909, %v3988
        %v4006 = vadd.f32 %v3910, %v3990
        %v4007 = vsel %vm3870, %v3951, %v3999
        %v4008 = vsel %vm3870, %v3952, %v4000
        %v4009 = vsel %vm3870, %v3953, %v4001
        %v4010 = vsel %vm3870, %v3954, %v4002
        %v4011 = vsel %vm3870, %v3955, %v4003
        %v4012 = vsel %vm3870, %v3956, %v4004
        %v4013 = vsel %vm3870, %v3957, %v4005
        %v4014 = vsel %vm3870, %v3958, %v4006
        %v4015 = vpack.c.bf16 %v4008, %v4007
        %v4016 = vpack.c.bf16 %v4010, %v4009
        %v4017 = vpack.c.bf16 %v4012, %v4011
        %v4018 = vpack.c.bf16 %v4014, %v4013
        %4021 = vrot.lane.b32.xlu0 %v3692, 120
        %v4022 = vpop.permute.xlu0 %4021
        %4023 = vrot.lane.b32.xlu0 %v3695, 120
        %v4024 = vpop.permute.xlu0 %4023
        %4027 = vrot.lane.b32.xlu0 %v3692, 112
        %v4028 = vpop.permute.xlu0 %4027
        %4029 = vrot.lane.b32.xlu0 %v3695, 112
        %v4030 = vpop.permute.xlu0 %4029
        %4033 = vrot.lane.b32.xlu0 %v3692, 104
        %v4034 = vpop.permute.xlu0 %4033
        %4035 = vrot.lane.b32.xlu0 %v3695, 104
        %v4036 = vpop.permute.xlu0 %4035
        %v4039 = vpack.c.bf16 %v3695, %v3692
        %v4040 = vpack.c.bf16 %v4024, %v4022
        %v4041 = vpack.c.bf16 %v4030, %v4028
        %v4042 = vpack.c.bf16 %v4036, %v4034
        %v4044 = vsel %vm1414, %v3879, 0
        %v4047 = vsel %vm1414, %v4015, 0
        %4049 = vmatprep.subr.bf16.mxu0 0
        %4050 = vmatpush1.bf16.xpose.msra.mxu0 %v4047
        %4051 = vmatprep.subr.bf16.mxu0 0
        %4052 = vmatpush1.bf16.xpose.msra.mxu0 0
        %4053 = vmatprep.subr.bf16.mxu0 0
        %4054 = vmatpush1.bf16.xpose.msra.mxu0 0
        %4055 = vmatprep.subr.bf16.mxu0 0
        %4056 = vmatpush1.bf16.xpose.msra.mxu0 0
        %4057 = vmatprep.subr.bf16.mxu0 0
        %4058 = vmatpush1.bf16.xpose.msra.mxu0 0
        %4059 = vmatprep.subr.bf16.mxu0 0
        %4060 = vmatpush1.bf16.xpose.msra.mxu0 0
        %4061 = vmatprep.subr.bf16.mxu0 0
        %4062 = vmatpush1.bf16.xpose.msra.mxu0 0
        %4063 = vmatprep.subr.bf16.mxu0 0
        %4064 = vmatpush1.bf16.xpose.msra.mxu0 0
        %4065 = vmatprep.subr.bf16.mxu0 0
        %4066 = vmatpush1.bf16.xpose.msra.mxu0 0
        %4067 = vmatprep.subr.bf16.mxu0 0
        %4068 = vmatpush1.bf16.xpose.msra.mxu0 0
        %4069 = vmatprep.subr.bf16.mxu0 0
        %4070 = vmatpush1.bf16.xpose.msra.mxu0 0
        %4071 = vmatprep.subr.bf16.mxu0 0
        %4072 = vmatpush1.bf16.xpose.msra.mxu0 0
        %4073 = vmatprep.subr.bf16.mxu0 0
        %4074 = vmatpush1.bf16.xpose.msra.mxu0 0
        %4075 = vmatprep.subr.bf16.mxu0 0
        %4076 = vmatpush1.bf16.xpose.msra.mxu0 0
        %4077 = vmatprep.subr.bf16.mxu0 0
        %4078 = vmatpush1.bf16.xpose.msra.mxu0 0
        %4079 = vmatprep.subr.bf16.mxu0 0
        %4080 = vmatpush1.bf16.xpose.msra.mxu0 0
        %4081 = vmatprep.mubr.bf16.mxu0 0
        %4082 = vmatmul.mubr.bf16.gmra.mrb[0].mxu0 %v4044
        %v4083 = vpop.f32.mrb[0].mxu0
        %v4084 = vadd.f32 0.0, %v4083
        %v4085 = vpop.f32.mrb[0].mxu0
        %v4086 = vpop.f32.mrb[0].mxu0
        %v4087 = vadd.f32 0.0, %v4086
        %v4088 = vpop.f32.mrb[0].mxu0
        %4089 = vdwg.mxu0
        %v4091 = vsel %vm1414, %v3880, 0
        %v4094 = vsel %vm1414, %v4016, 0
        %4096 = vmatprep.subr.bf16.mxu0 0
        %4097 = vmatpush1.bf16.xpose.msra.mxu0 %v4094
        %4098 = vmatprep.subr.bf16.mxu0 0
        %4099 = vmatpush1.bf16.xpose.msra.mxu0 0
        %4100 = vmatprep.subr.bf16.mxu0 0
        %4101 = vmatpush1.bf16.xpose.msra.mxu0 0
        %4102 = vmatprep.subr.bf16.mxu0 0
        %4103 = vmatpush1.bf16.xpose.msra.mxu0 0
        %4104 = vmatprep.subr.bf16.mxu0 0
        %4105 = vmatpush1.bf16.xpose.msra.mxu0 0
        %4106 = vmatprep.subr.bf16.mxu0 0
        %4107 = vmatpush1.bf16.xpose.msra.mxu0 0
        %4108 = vmatprep.subr.bf16.mxu0 0
        %4109 = vmatpush1.bf16.xpose.msra.mxu0 0
        %4110 = vmatprep.subr.bf16.mxu0 0
        %4111 = vmatpush1.bf16.xpose.msra.mxu0 0
        %4112 = vmatprep.subr.bf16.mxu0 0
        %4113 = vmatpush1.bf16.xpose.msra.mxu0 0
        %4114 = vmatprep.subr.bf16.mxu0 0
        %4115 = vmatpush1.bf16.xpose.msra.mxu0 0
        %4116 = vmatprep.subr.bf16.mxu0 0
        %4117 = vmatpush1.bf16.xpose.msra.mxu0 0
        %4118 = vmatprep.subr.bf16.mxu0 0
        %4119 = vmatpush1.bf16.xpose.msra.mxu0 0
        %4120 = vmatprep.subr.bf16.mxu0 0
        %4121 = vmatpush1.bf16.xpose.msra.mxu0 0
        %4122 = vmatprep.subr.bf16.mxu0 0
        %4123 = vmatpush1.bf16.xpose.msra.mxu0 0
        %4124 = vmatprep.subr.bf16.mxu0 0
        %4125 = vmatpush1.bf16.xpose.msra.mxu0 0
        %4126 = vmatprep.subr.bf16.mxu0 0
        %4127 = vmatpush1.bf16.xpose.msra.mxu0 0
        %4128 = vmatprep.mubr.bf16.mxu0 0
        %4129 = vmatmul.mubr.bf16.gmra.mrb[0].mxu0 %v4091
        %v4130 = vpop.f32.mrb[0].mxu0
        %v4131 = vadd.f32 0.0, %v4130
        %v4132 = vpop.f32.mrb[0].mxu0
        %v4133 = vpop.f32.mrb[0].mxu0
        %v4134 = vadd.f32 0.0, %v4133
        %v4135 = vpop.f32.mrb[0].mxu0
        %4136 = vdwg.mxu0
        %v4138 = vsel %vm1414, %v3881, 0
        %v4141 = vsel %vm1414, %v4017, 0
        %4143 = vmatprep.subr.bf16.mxu0 0
        %4144 = vmatpush1.bf16.xpose.msra.mxu0 %v4141
        %4145 = vmatprep.subr.bf16.mxu0 0
        %4146 = vmatpush1.bf16.xpose.msra.mxu0 0
        %4147 = vmatprep.subr.bf16.mxu0 0
        %4148 = vmatpush1.bf16.xpose.msra.mxu0 0
        %4149 = vmatprep.subr.bf16.mxu0 0
        %4150 = vmatpush1.bf16.xpose.msra.mxu0 0
        %4151 = vmatprep.subr.bf16.mxu0 0
        %4152 = vmatpush1.bf16.xpose.msra.mxu0 0
        %4153 = vmatprep.subr.bf16.mxu0 0
        %4154 = vmatpush1.bf16.xpose.msra.mxu0 0
        %4155 = vmatprep.subr.bf16.mxu0 0
        %4156 = vmatpush1.bf16.xpose.msra.mxu0 0
        %4157 = vmatprep.subr.bf16.mxu0 0
        %4158 = vmatpush1.bf16.xpose.msra.mxu0 0
        %4159 = vmatprep.subr.bf16.mxu0 0
        %4160 = vmatpush1.bf16.xpose.msra.mxu0 0
        %4161 = vmatprep.subr.bf16.mxu0 0
        %4162 = vmatpush1.bf16.xpose.msra.mxu0 0
        %4163 = vmatprep.subr.bf16.mxu0 0
        %4164 = vmatpush1.bf16.xpose.msra.mxu0 0
        %4165 = vmatprep.subr.bf16.mxu0 0
        %4166 = vmatpush1.bf16.xpose.msra.mxu0 0
        %4167 = vmatprep.subr.bf16.mxu0 0
        %4168 = vmatpush1.bf16.xpose.msra.mxu0 0
        %4169 = vmatprep.subr.bf16.mxu0 0
        %4170 = vmatpush1.bf16.xpose.msra.mxu0 0
        %4171 = vmatprep.subr.bf16.mxu0 0
        %4172 = vmatpush1.bf16.xpose.msra.mxu0 0
        %4173 = vmatprep.subr.bf16.mxu0 0
        %4174 = vmatpush1.bf16.xpose.msra.mxu0 0
        %4175 = vmatprep.mubr.bf16.mxu0 0
        %4176 = vmatmul.mubr.bf16.gmra.mrb[0].mxu0 %v4138
        %v4177 = vpop.f32.mrb[0].mxu0
        %v4178 = vadd.f32 0.0, %v4177
        %v4179 = vpop.f32.mrb[0].mxu0
        %v4180 = vpop.f32.mrb[0].mxu0
        %v4181 = vadd.f32 0.0, %v4180
        %v4182 = vpop.f32.mrb[0].mxu0
        %4183 = vdwg.mxu0
        %v4185 = vsel %vm1414, %v3882, 0
        %v4188 = vsel %vm1414, %v4018, 0
        %4190 = vmatprep.subr.bf16.mxu0 0
        %4191 = vmatpush1.bf16.xpose.msra.mxu0 %v4188
        %4192 = vmatprep.subr.bf16.mxu0 0
        %4193 = vmatpush1.bf16.xpose.msra.mxu0 0
        %4194 = vmatprep.subr.bf16.mxu0 0
        %4195 = vmatpush1.bf16.xpose.msra.mxu0 0
        %4196 = vmatprep.subr.bf16.mxu0 0
        %4197 = vmatpush1.bf16.xpose.msra.mxu0 0
        %4198 = vmatprep.subr.bf16.mxu0 0
        %4199 = vmatpush1.bf16.xpose.msra.mxu0 0
        %4200 = vmatprep.subr.bf16.mxu0 0
        %4201 = vmatpush1.bf16.xpose.msra.mxu0 0
        %4202 = vmatprep.subr.bf16.mxu0 0
        %4203 = vmatpush1.bf16.xpose.msra.mxu0 0
        %4204 = vmatprep.subr.bf16.mxu0 0
        %4205 = vmatpush1.bf16.xpose.msra.mxu0 0
        %4206 = vmatprep.subr.bf16.mxu0 0
        %4207 = vmatpush1.bf16.xpose.msra.mxu0 0
        %4208 = vmatprep.subr.bf16.mxu0 0
        %4209 = vmatpush1.bf16.xpose.msra.mxu0 0
        %4210 = vmatprep.subr.bf16.mxu0 0
        %4211 = vmatpush1.bf16.xpose.msra.mxu0 0
        %4212 = vmatprep.subr.bf16.mxu0 0
        %4213 = vmatpush1.bf16.xpose.msra.mxu0 0
        %4214 = vmatprep.subr.bf16.mxu0 0
        %4215 = vmatpush1.bf16.xpose.msra.mxu0 0
        %4216 = vmatprep.subr.bf16.mxu0 0
        %4217 = vmatpush1.bf16.xpose.msra.mxu0 0
        %4218 = vmatprep.subr.bf16.mxu0 0
        %4219 = vmatpush1.bf16.xpose.msra.mxu0 0
        %4220 = vmatprep.subr.bf16.mxu0 0
        %4221 = vmatpush1.bf16.xpose.msra.mxu0 0
        %4222 = vmatprep.mubr.bf16.mxu0 0
        %4223 = vmatmul.mubr.bf16.gmra.mrb[0].mxu0 %v4185
        %v4224 = vpop.f32.mrb[0].mxu0
        %v4225 = vadd.f32 0.0, %v4224
        %v4226 = vpop.f32.mrb[0].mxu0
        %v4227 = vpop.f32.mrb[0].mxu0
        %v4228 = vadd.f32 0.0, %v4227
        %v4229 = vpop.f32.mrb[0].mxu0
        %4230 = vdwg.mxu0
        %vm4231 = vcmask 97280
        %v4232 = vsel %vm4231, %v4084, -inf
        %4233 = vmax.xlane.f32.xlu0 %v4232
        %v4234 = vpop.xlane.xlu0 %4233
        %vm4235 = vcmask 93184
        %v4236 = vsel %vm4235, %v4087, -inf
        %4237 = vmax.xlane.f32.xlu0 %v4236
        %v4238 = vpop.xlane.xlu0 %4237
        %v4239 = vsel %vm4231, %v4131, -inf
        %4240 = vmax.xlane.f32.xlu0 %v4239
        %v4241 = vpop.xlane.xlu0 %4240
        %v4242 = vsel %vm4235, %v4134, -inf
        %4243 = vmax.xlane.f32.xlu0 %v4242
        %v4244 = vpop.xlane.xlu0 %4243
        %v4245 = vsel %vm4231, %v4178, -inf
        %4246 = vmax.xlane.f32.xlu0 %v4245
        %v4247 = vpop.xlane.xlu0 %4246
        %v4248 = vsel %vm4235, %v4181, -inf
        %4249 = vmax.xlane.f32.xlu0 %v4248
        %v4250 = vpop.xlane.xlu0 %4249
        %v4251 = vsel %vm4231, %v4225, -inf
        %4252 = vmax.xlane.f32.xlu0 %v4251
        %v4253 = vpop.xlane.xlu0 %4252
        %v4254 = vsel %vm4235, %v4228, -inf
        %4255 = vmax.xlane.f32.xlu0 %v4254
        %v4256 = vpop.xlane.xlu0 %4255
        %v4257 = vsub.f32 %v4084, %v4234
        %v4258 = vsub.f32 %v4087, %v4238
        %v4259 = vsub.f32 %v4131, %v4241
        %v4260 = vsub.f32 %v4134, %v4244
        %v4261 = vsub.f32 %v4178, %v4247
        %v4262 = vsub.f32 %v4181, %v4250
        %v4263 = vsub.f32 %v4225, %v4253
        %v4264 = vsub.f32 %v4228, %v4256
        %v4265 = vpack.c.bf16 %v4258, %v4257
        %v4266 = vpack.c.bf16 %v4260, %v4259
        %v4267 = vpack.c.bf16 %v4262, %v4261
        %v4268 = vpack.c.bf16 %v4264, %v4263
        %v4270 = vmul.bf16 %v4265, 1069105081
        %v4271 = vpow.bf16.pop %v4270
        %v4273 = vmul.bf16 %v4266, 1069105081
        %v4274 = vpow.bf16.pop %v4273
        %v4276 = vmul.bf16 %v4267, 1069105081
        %v4277 = vpow.bf16.pop %v4276
        %v4279 = vmul.bf16 %v4268, 1069105081
        %v4280 = vpow.bf16.pop %v4279
        %v4281 = vunpack.c.l.bf16 %v4271
        %v4282 = vunpack.c.h.bf16 %v4271
        %v4283 = vunpack.c.l.bf16 %v4274
        %v4284 = vunpack.c.h.bf16 %v4274
        %v4285 = vunpack.c.l.bf16 %v4277
        %v4286 = vunpack.c.h.bf16 %v4277
        %v4287 = vunpack.c.l.bf16 %v4280
        %v4288 = vunpack.c.h.bf16 %v4280
        %v4289 = vsel %vm4231, %v4281, 0.0
        %4290 = vadd.xlane.f32.xlu0 %v4289
        %v4291 = vpop.xlane.xlu0 %4290
        %v4292 = vsel %vm4235, %v4282, 0.0
        %4293 = vadd.xlane.f32.xlu0 %v4292
        %v4294 = vpop.xlane.xlu0 %4293
        %v4295 = vsel %vm4231, %v4283, 0.0
        %4296 = vadd.xlane.f32.xlu0 %v4295
        %v4297 = vpop.xlane.xlu0 %4296
        %v4298 = vsel %vm4235, %v4284, 0.0
        %4299 = vadd.xlane.f32.xlu0 %v4298
        %v4300 = vpop.xlane.xlu0 %4299
        %v4301 = vsel %vm4231, %v4285, 0.0
        %4302 = vadd.xlane.f32.xlu0 %v4301
        %v4303 = vpop.xlane.xlu0 %4302
        %v4304 = vsel %vm4235, %v4286, 0.0
        %4305 = vadd.xlane.f32.xlu0 %v4304
        %v4306 = vpop.xlane.xlu0 %4305
        %v4307 = vsel %vm4231, %v4287, 0.0
        %4308 = vadd.xlane.f32.xlu0 %v4307
        %v4309 = vpop.xlane.xlu0 %4308
        %v4310 = vsel %vm4235, %v4288, 0.0
        %4311 = vadd.xlane.f32.xlu0 %v4310
        %v4312 = vpop.xlane.xlu0 %4311
        %v4314 = vsel %vm4231, %v4271, 0
        %vm4316 = vcmask 1045504
        %v4318 = vsel %vm4316, %v4039, 0
        %4320 = vmatprep.subr.bf16.mxu0 0
        %4321 = vmatpush1.bf16.msra.mxu0 %v4318
        %4322 = vmatprep.subr.bf16.mxu0 0
        %4323 = vmatpush1.bf16.msra.mxu0 0
        %4324 = vmatprep.subr.bf16.mxu0 0
        %4325 = vmatpush1.bf16.msra.mxu0 0
        %4326 = vmatprep.subr.bf16.mxu0 0
        %4327 = vmatpush1.bf16.msra.mxu0 0
        %4328 = vmatprep.subr.bf16.mxu0 0
        %4329 = vmatpush1.bf16.msra.mxu0 0
        %4330 = vmatprep.subr.bf16.mxu0 0
        %4331 = vmatpush1.bf16.msra.mxu0 0
        %4332 = vmatprep.subr.bf16.mxu0 0
        %4333 = vmatpush1.bf16.msra.mxu0 0
        %4334 = vmatprep.subr.bf16.mxu0 0
        %4335 = vmatpush1.bf16.msra.mxu0 0
        %4336 = vmatprep.subr.bf16.mxu0 0
        %4337 = vmatpush1.bf16.msra.mxu0 0
        %4338 = vmatprep.subr.bf16.mxu0 0
        %4339 = vmatpush1.bf16.msra.mxu0 0
        %4340 = vmatprep.subr.bf16.mxu0 0
        %4341 = vmatpush1.bf16.msra.mxu0 0
        %4342 = vmatprep.subr.bf16.mxu0 0
        %4343 = vmatpush1.bf16.msra.mxu0 0
        %4344 = vmatprep.subr.bf16.mxu0 0
        %4345 = vmatpush1.bf16.msra.mxu0 0
        %4346 = vmatprep.subr.bf16.mxu0 0
        %4347 = vmatpush1.bf16.msra.mxu0 0
        %4348 = vmatprep.subr.bf16.mxu0 0
        %4349 = vmatpush1.bf16.msra.mxu0 0
        %4350 = vmatprep.subr.bf16.mxu0 0
        %4351 = vmatpush1.bf16.msra.mxu0 0
        %4352 = vmatprep.mubr.bf16.mxu0 0
        %4353 = vmatmul.mubr.bf16.gmra.mrb[0].mxu0 %v4314
        %v4354 = vpop.f32.mrb[0].mxu0
        %v4355 = vadd.f32 0.0, %v4354
        %v4356 = vpop.f32.mrb[0].mxu0
        %v4357 = vpop.f32.mrb[0].mxu0
        %v4358 = vadd.f32 0.0, %v4357
        %v4359 = vpop.f32.mrb[0].mxu0
        %4360 = vdwg.mxu0
        %v4362 = vsel %vm4231, %v4274, 0
        %v4365 = vsel %vm4316, %v4040, 0
        %4367 = vmatprep.subr.bf16.mxu0 0
        %4368 = vmatpush1.bf16.msra.mxu0 %v4365
        %4369 = vmatprep.subr.bf16.mxu0 0
        %4370 = vmatpush1.bf16.msra.mxu0 0
        %4371 = vmatprep.subr.bf16.mxu0 0
        %4372 = vmatpush1.bf16.msra.mxu0 0
        %4373 = vmatprep.subr.bf16.mxu0 0
        %4374 = vmatpush1.bf16.msra.mxu0 0
        %4375 = vmatprep.subr.bf16.mxu0 0
        %4376 = vmatpush1.bf16.msra.mxu0 0
        %4377 = vmatprep.subr.bf16.mxu0 0
        %4378 = vmatpush1.bf16.msra.mxu0 0
        %4379 = vmatprep.subr.bf16.mxu0 0
        %4380 = vmatpush1.bf16.msra.mxu0 0
        %4381 = vmatprep.subr.bf16.mxu0 0
        %4382 = vmatpush1.bf16.msra.mxu0 0
        %4383 = vmatprep.subr.bf16.mxu0 0
        %4384 = vmatpush1.bf16.msra.mxu0 0
        %4385 = vmatprep.subr.bf16.mxu0 0
        %4386 = vmatpush1.bf16.msra.mxu0 0
        %4387 = vmatprep.subr.bf16.mxu0 0
        %4388 = vmatpush1.bf16.msra.mxu0 0
        %4389 = vmatprep.subr.bf16.mxu0 0
        %4390 = vmatpush1.bf16.msra.mxu0 0
        %4391 = vmatprep.subr.bf16.mxu0 0
        %4392 = vmatpush1.bf16.msra.mxu0 0
        %4393 = vmatprep.subr.bf16.mxu0 0
        %4394 = vmatpush1.bf16.msra.mxu0 0
        %4395 = vmatprep.subr.bf16.mxu0 0
        %4396 = vmatpush1.bf16.msra.mxu0 0
        %4397 = vmatprep.subr.bf16.mxu0 0
        %4398 = vmatpush1.bf16.msra.mxu0 0
        %4399 = vmatprep.mubr.bf16.mxu0 0
        %4400 = vmatmul.mubr.bf16.gmra.mrb[0].mxu0 %v4362
        %v4401 = vpop.f32.mrb[0].mxu0
        %v4402 = vadd.f32 0.0, %v4401
        %v4403 = vpop.f32.mrb[0].mxu0
        %v4404 = vpop.f32.mrb[0].mxu0
        %v4405 = vadd.f32 0.0, %v4404
        %v4406 = vpop.f32.mrb[0].mxu0
        %4407 = vdwg.mxu0
        %v4409 = vsel %vm4231, %v4277, 0
        %v4412 = vsel %vm4316, %v4041, 0
        %4414 = vmatprep.subr.bf16.mxu0 0
        %4415 = vmatpush1.bf16.msra.mxu0 %v4412
        %4416 = vmatprep.subr.bf16.mxu0 0
        %4417 = vmatpush1.bf16.msra.mxu0 0
        %4418 = vmatprep.subr.bf16.mxu0 0
        %4419 = vmatpush1.bf16.msra.mxu0 0
        %4420 = vmatprep.subr.bf16.mxu0 0
        %4421 = vmatpush1.bf16.msra.mxu0 0
        %4422 = vmatprep.subr.bf16.mxu0 0
        %4423 = vmatpush1.bf16.msra.mxu0 0
        %4424 = vmatprep.subr.bf16.mxu0 0
        %4425 = vmatpush1.bf16.msra.mxu0 0
        %4426 = vmatprep.subr.bf16.mxu0 0
        %4427 = vmatpush1.bf16.msra.mxu0 0
        %4428 = vmatprep.subr.bf16.mxu0 0
        %4429 = vmatpush1.bf16.msra.mxu0 0
        %4430 = vmatprep.subr.bf16.mxu0 0
        %4431 = vmatpush1.bf16.msra.mxu0 0
        %4432 = vmatprep.subr.bf16.mxu0 0
        %4433 = vmatpush1.bf16.msra.mxu0 0
        %4434 = vmatprep.subr.bf16.mxu0 0
        %4435 = vmatpush1.bf16.msra.mxu0 0
        %4436 = vmatprep.subr.bf16.mxu0 0
        %4437 = vmatpush1.bf16.msra.mxu0 0
        %4438 = vmatprep.subr.bf16.mxu0 0
        %4439 = vmatpush1.bf16.msra.mxu0 0
        %4440 = vmatprep.subr.bf16.mxu0 0
        %4441 = vmatpush1.bf16.msra.mxu0 0
        %4442 = vmatprep.subr.bf16.mxu0 0
        %4443 = vmatpush1.bf16.msra.mxu0 0
        %4444 = vmatprep.subr.bf16.mxu0 0
        %4445 = vmatpush1.bf16.msra.mxu0 0
        %4446 = vmatprep.mubr.bf16.mxu0 0
        %4447 = vmatmul.mubr.bf16.gmra.mrb[0].mxu0 %v4409
        %v4448 = vpop.f32.mrb[0].mxu0
        %v4449 = vadd.f32 0.0, %v4448
        %v4450 = vpop.f32.mrb[0].mxu0
        %v4451 = vpop.f32.mrb[0].mxu0
        %v4452 = vadd.f32 0.0, %v4451
        %v4453 = vpop.f32.mrb[0].mxu0
        %4454 = vdwg.mxu0
        %v4456 = vsel %vm4231, %v4280, 0
        %v4459 = vsel %vm4316, %v4042, 0
        %4461 = vmatprep.subr.bf16.mxu0 0
        %4462 = vmatpush1.bf16.msra.mxu0 %v4459
        %4463 = vmatprep.subr.bf16.mxu0 0
        %4464 = vmatpush1.bf16.msra.mxu0 0
        %4465 = vmatprep.subr.bf16.mxu0 0
        %4466 = vmatpush1.bf16.msra.mxu0 0
        %4467 = vmatprep.subr.bf16.mxu0 0
        %4468 = vmatpush1.bf16.msra.mxu0 0
        %4469 = vmatprep.subr.bf16.mxu0 0
        %4470 = vmatpush1.bf16.msra.mxu0 0
        %4471 = vmatprep.subr.bf16.mxu0 0
        %4472 = vmatpush1.bf16.msra.mxu0 0
        %4473 = vmatprep.subr.bf16.mxu0 0
        %4474 = vmatpush1.bf16.msra.mxu0 0
        %4475 = vmatprep.subr.bf16.mxu0 0
        %4476 = vmatpush1.bf16.msra.mxu0 0
        %4477 = vmatprep.subr.bf16.mxu0 0
        %4478 = vmatpush1.bf16.msra.mxu0 0
        %4479 = vmatprep.subr.bf16.mxu0 0
        %4480 = vmatpush1.bf16.msra.mxu0 0
        %4481 = vmatprep.subr.bf16.mxu0 0
        %4482 = vmatpush1.bf16.msra.mxu0 0
        %4483 = vmatprep.subr.bf16.mxu0 0
        %4484 = vmatpush1.bf16.msra.mxu0 0
        %4485 = vmatprep.subr.bf16.mxu0 0
        %4486 = vmatpush1.bf16.msra.mxu0 0
        %4487 = vmatprep.subr.bf16.mxu0 0
        %4488 = vmatpush1.bf16.msra.mxu0 0
        %4489 = vmatprep.subr.bf16.mxu0 0
        %4490 = vmatpush1.bf16.msra.mxu0 0
        %4491 = vmatprep.subr.bf16.mxu0 0
        %4492 = vmatpush1.bf16.msra.mxu0 0
        %4493 = vmatprep.mubr.bf16.mxu0 0
        %4494 = vmatmul.mubr.bf16.gmra.mrb[0].mxu0 %v4456
        %v4495 = vpop.f32.mrb[0].mxu0
        %v4496 = vadd.f32 0.0, %v4495
        %v4497 = vpop.f32.mrb[0].mxu0
        %v4498 = vpop.f32.mrb[0].mxu0
        %v4499 = vadd.f32 0.0, %v4498
        %v4500 = vpop.f32.mrb[0].mxu0
        %4501 = vdwg.mxu0
        %v4502 = vrcp.pop %v4291
        %v4503 = vrcp.pop %v4294
        %v4504 = vrcp.pop %v4297
        %v4505 = vrcp.pop %v4300
        %v4506 = vrcp.pop %v4303
        %v4507 = vrcp.pop %v4306
        %v4508 = vrcp.pop %v4309
        %v4509 = vrcp.pop %v4312
        %v4510 = vmul.f32 %v4355, %v4502
        %v4511 = vmul.f32 %v4358, %v4503
        %v4512 = vmul.f32 %v4402, %v4504
        %v4513 = vmul.f32 %v4405, %v4505
        %v4514 = vmul.f32 %v4449, %v4506
        %v4515 = vmul.f32 %v4452, %v4507
        %v4516 = vmul.f32 %v4496, %v4508
        %v4517 = vmul.f32 %v4499, %v4509
        %4520 = vrot.lane.b32.xlu0 %v4512, 8
        %v4521 = vpop.permute.xlu0 %4520
        %4522 = vrot.lane.b32.xlu0 %v4513, 8
        %v4523 = vpop.permute.xlu0 %4522
        %4528 = vrot.lane.b32.xlu0 %v4514, 16
        %v4529 = vpop.permute.xlu0 %4528
        %4530 = vrot.lane.b32.xlu0 %v4515, 16
        %v4531 = vpop.permute.xlu0 %4530
        %4536 = vrot.lane.b32.xlu0 %v4516, 24
        %v4537 = vpop.permute.xlu0 %4536
        %4538 = vrot.lane.b32.xlu0 %v4517, 24
        %v4539 = vpop.permute.xlu0 %4538
        %v4542 = vsel %vm1414, %v4510, %v4521
        %v4543 = vsel %vm1414, %v4511, %v4523
        %vm4544 = vcmask 130048
        %v4545 = vsel %vm4544, %v4542, %v4529
        %v4546 = vsel %vm4544, %v4543, %v4531
        %vm4547 = vcmask 195584
        %v4548 = vsel %vm4547, %v4545, %v4537
        %v4549 = vsel %vm4547, %v4546, %v4539
        %v4550 = vpack.c.bf16 %v4549, %v4548
        %s4551 = smul.addr %s3493, 4
        %s4552 = scalar_lea.vmem %s16, %s4551
        %v4553 = vld [vmem:[%s4552] sm:$0xf]
        %v4554 = vld [vmem:[%s4552 + $0x4] sm:$0xf]
        %v4555 = vld [vmem:[%s4552 + $0x8] sm:$0xf]
        %v4556 = vld [vmem:[%s4552 + $0xc] sm:$0xf]
        %s4557 = scalar_lea.vmem %s17, %s3485
        %v4558 = vld [vmem:[%s4557] sm:$0x1]
        %v4560 = vlaneseq
        %v4561 = vshrl.u32 %v4560, 7
        %v4562 = vsub.s32 0, %v4561
        %v4563 = vrot.slane %v4558, %v4562
        %v4569 = vunpack.c.l.b16 %v4553
        %v4570 = vunpack.c.l.b16 %v4554
        %v4571 = vunpack.c.l.b16 %v4555
        %v4572 = vunpack.c.l.b16 %v4556
        %v4573 = vpack.c.b16 %v4570, %v4569
        %v4574 = vpack.c.b16 %v4572, %v4571
        %v4578 = vsel %vm2869, %v4550, 0
        %4580 = vmatprep.subr.bf16.mxu0 0
        %4581 = vmatpush1.bf16.msra.mxu0 %v4573
        %4582 = vmatprep.subr.bf16.mxu0 0
        %4583 = vmatpush1.bf16.msra.mxu0 %v4574
        %4584 = vmatprep.subr.bf16.mxu0 0
        %4585 = vmatpush1.bf16.msra.mxu0 0
        %4586 = vmatprep.subr.bf16.mxu0 0
        %4587 = vmatpush1.bf16.msra.mxu0 0
        %4588 = vmatprep.subr.bf16.mxu0 0
        %4589 = vmatpush1.bf16.msra.mxu0 0
        %4590 = vmatprep.subr.bf16.mxu0 0
        %4591 = vmatpush1.bf16.msra.mxu0 0
        %4592 = vmatprep.subr.bf16.mxu0 0
        %4593 = vmatpush1.bf16.msra.mxu0 0
        %4594 = vmatprep.subr.bf16.mxu0 0
        %4595 = vmatpush1.bf16.msra.mxu0 0
        %4596 = vmatprep.subr.bf16.mxu0 0
        %4597 = vmatpush1.bf16.msra.mxu0 0
        %4598 = vmatprep.subr.bf16.mxu0 0
        %4599 = vmatpush1.bf16.msra.mxu0 0
        %4600 = vmatprep.subr.bf16.mxu0 0
        %4601 = vmatpush1.bf16.msra.mxu0 0
        %4602 = vmatprep.subr.bf16.mxu0 0
        %4603 = vmatpush1.bf16.msra.mxu0 0
        %4604 = vmatprep.subr.bf16.mxu0 0
        %4605 = vmatpush1.bf16.msra.mxu0 0
        %4606 = vmatprep.subr.bf16.mxu0 0
        %4607 = vmatpush1.bf16.msra.mxu0 0
        %4608 = vmatprep.subr.bf16.mxu0 0
        %4609 = vmatpush1.bf16.msra.mxu0 0
        %4610 = vmatprep.subr.bf16.mxu0 0
        %4611 = vmatpush1.bf16.msra.mxu0 0
        %4612 = vmatprep.mubr.bf16.mxu0 0
        %4613 = vmatmul.mubr.bf16.gmra.mrb[0].mxu0 %v4578
        %v4614 = vpop.f32.mrb[0].mxu0
        %v4615 = vadd.f32 %v4563, %v4614
        %v4616 = vpop.f32.mrb[0].mxu0
        %v4617 = vpop.f32.mrb[0].mxu0
        %v4618 = vadd.f32 %v4563, %v4617
        %v4619 = vpop.f32.mrb[0].mxu0
        %4620 = vdwg.mxu0
        %v4621 = vadd.f32 %v3490, %v4615
        %v4622 = vadd.f32 %v3491, %v4618
        %v4623 = vsel %vm2869, %v4621, 0.0
        %4624 = vadd.xlane.f32.xlu0 %v4623
        %v4625 = vpop.xlane.xlu0 %4624
        %vm4626 = vcmask 257024
        %v4627 = vsel %vm4626, %v4622, 0.0
        %4628 = vadd.xlane.f32.xlu0 %v4627
        %v4629 = vpop.xlane.xlu0 %4628
        %v4630 = vrcp.pop 32.0
        %v4631 = vmul.f32 %v4625, %v4630
        %v4632 = vmul.f32 %v4629, %v4630
        %v4633 = vsub.f32 %v4621, %v4631
        %v4634 = vsub.f32 %v4622, %v4632
        %v4635 = vmul.f32 %v4633, %v4633
        %v4636 = vmul.f32 %v4634, %v4634
        %v4637 = vsel %vm2869, %v4635, 0.0
        %4638 = vadd.xlane.f32.xlu0 %v4637
        %v4639 = vpop.xlane.xlu0 %4638
        %v4640 = vsel %vm4626, %v4636, 0.0
        %4641 = vadd.xlane.f32.xlu0 %v4640
        %v4642 = vpop.xlane.xlu0 %4641
        %v4643 = vmul.f32 %v4639, %v4630
        %v4644 = vmul.f32 %v4642, %v4630
        %v4645 = vadd.f32 %v4643, 1e-05
        %v4646 = vadd.f32 %v4644, 1e-05
        %v4647 = vrsqrt.pop %v4645
        %v4648 = vrsqrt.pop %v4646
        %v4649 = vmul.f32 %v4633, %v4647
        %v4650 = vmul.f32 %v4634, %v4648
        %s4651 = scalar_lea.vmem %s18, %s3485
        %v4652 = vld [vmem:[%s4651] sm:$0x1]
        %v4654 = vlaneseq
        %v4655 = vshrl.u32 %v4654, 7
        %v4656 = vsub.s32 0, %v4655
        %v4657 = vrot.slane %v4652, %v4656
        %v4659 = vmul.f32 %v4649, %v4657
        %v4660 = vmul.f32 %v4650, %v4657
        %s4661 = scalar_lea.vmem %s19, %s3485
        %v4662 = vld [vmem:[%s4661] sm:$0x1]
        %v4664 = vlaneseq
        %v4665 = vshrl.u32 %v4664, 7
        %v4666 = vsub.s32 0, %v4665
        %v4667 = vrot.slane %v4662, %v4666
        %v4669 = vadd.f32 %v4659, %v4667
        %v4670 = vadd.f32 %v4660, %v4667
        %v4671 = vpack.c.bf16 %v4670, %v4669
        %s4672 = smul.addr %s3493, 4
        %s4673 = scalar_lea.vmem %s20, %s4672
        %v4674 = vld [vmem:[%s4673] sm:$0xf]
        %v4675 = vld [vmem:[%s4673 + $0x4] sm:$0xf]
        %v4676 = vld [vmem:[%s4673 + $0x8] sm:$0xf]
        %v4677 = vld [vmem:[%s4673 + $0xc] sm:$0xf]
        %s4678 = scalar_lea.vmem %s21, %s3485
        %v4679 = vld [vmem:[%s4678] sm:$0x1]
        %v4681 = vlaneseq
        %v4682 = vshrl.u32 %v4681, 7
        %v4683 = vsub.s32 0, %v4682
        %v4684 = vrot.slane %v4679, %v4683
        %v4690 = vunpack.c.l.b16 %v4674
        %v4691 = vunpack.c.l.b16 %v4675
        %v4692 = vunpack.c.l.b16 %v4676
        %v4693 = vunpack.c.l.b16 %v4677
        %v4694 = vpack.c.b16 %v4691, %v4690
        %v4695 = vpack.c.b16 %v4693, %v4692
        %v4699 = vsel %vm2869, %v4671, 0
        %4701 = vmatprep.subr.bf16.mxu0 0
        %4702 = vmatpush1.bf16.msra.mxu0 %v4694
        %4703 = vmatprep.subr.bf16.mxu0 0
        %4704 = vmatpush1.bf16.msra.mxu0 %v4695
        %4705 = vmatprep.subr.bf16.mxu0 0
        %4706 = vmatpush1.bf16.msra.mxu0 0
        %4707 = vmatprep.subr.bf16.mxu0 0
        %4708 = vmatpush1.bf16.msra.mxu0 0
        %4709 = vmatprep.subr.bf16.mxu0 0
        %4710 = vmatpush1.bf16.msra.mxu0 0
        %4711 = vmatprep.subr.bf16.mxu0 0
        %4712 = vmatpush1.bf16.msra.mxu0 0
        %4713 = vmatprep.subr.bf16.mxu0 0
        %4714 = vmatpush1.bf16.msra.mxu0 0
        %4715 = vmatprep.subr.bf16.mxu0 0
        %4716 = vmatpush1.bf16.msra.mxu0 0
        %4717 = vmatprep.subr.bf16.mxu0 0
        %4718 = vmatpush1.bf16.msra.mxu0 0
        %4719 = vmatprep.subr.bf16.mxu0 0
        %4720 = vmatpush1.bf16.msra.mxu0 0
        %4721 = vmatprep.subr.bf16.mxu0 0
        %4722 = vmatpush1.bf16.msra.mxu0 0
        %4723 = vmatprep.subr.bf16.mxu0 0
        %4724 = vmatpush1.bf16.msra.mxu0 0
        %4725 = vmatprep.subr.bf16.mxu0 0
        %4726 = vmatpush1.bf16.msra.mxu0 0
        %4727 = vmatprep.subr.bf16.mxu0 0
        %4728 = vmatpush1.bf16.msra.mxu0 0
        %4729 = vmatprep.subr.bf16.mxu0 0
        %4730 = vmatpush1.bf16.msra.mxu0 0
        %4731 = vmatprep.subr.bf16.mxu0 0
        %4732 = vmatpush1.bf16.msra.mxu0 0
        %4733 = vmatprep.mubr.bf16.mxu0 0
        %4734 = vmatmul.mubr.bf16.gmra.mrb[0].mxu0 %v4699
        %v4735 = vpop.f32.mrb[0].mxu0
        %v4736 = vadd.f32 %v4684, %v4735
        %v4737 = vpop.f32.mrb[0].mxu0
        %v4738 = vpop.f32.mrb[0].mxu0
        %v4739 = vadd.f32 %v4684, %v4738
        %v4740 = vpop.f32.mrb[0].mxu0
        %4741 = vdwg.mxu0
        %v4742 = vmax.f32 %v4736, 0.0
        %v4743 = vmax.f32 %v4739, 0.0
        %v4744 = vpack.c.bf16 %v4743, %v4742
        %s4745 = smul.u32 %s3485, 8
        %s4746 = smul.addr %s4745, 4
        %s4747 = scalar_lea.vmem %s22, %s4746
        %v4748 = vld [vmem:[%s4747] sm:$0xf]
        %v4749 = vld [vmem:[%s4747 + $0x4] sm:$0xf]
        %v4750 = vld [vmem:[%s4747 + $0x8] sm:$0xf]
        %v4751 = vld [vmem:[%s4747 + $0xc] sm:$0xf]
        %v4752 = vld [vmem:[%s4747 + $0x10] sm:$0xf]
        %v4753 = vld [vmem:[%s4747 + $0x14] sm:$0xf]
        %v4754 = vld [vmem:[%s4747 + $0x18] sm:$0xf]
        %v4755 = vld [vmem:[%s4747 + $0x1c] sm:$0xf]
        %s4756 = scalar_lea.vmem %s23, %s3485
        %v4757 = vld [vmem:[%s4756] sm:$0x1]
        %v4759 = vlaneseq
        %v4760 = vshrl.u32 %v4759, 7
        %v4761 = vsub.s32 0, %v4760
        %v4762 = vrot.slane %v4757, %v4761
        %v4772 = vunpack.c.l.b16 %v4748
        %v4773 = vunpack.c.l.b16 %v4749
        %v4774 = vunpack.c.l.b16 %v4750
        %v4775 = vunpack.c.l.b16 %v4751
        %v4776 = vunpack.c.l.b16 %v4752
        %v4777 = vunpack.c.l.b16 %v4753
        %v4778 = vunpack.c.l.b16 %v4754
        %v4779 = vunpack.c.l.b16 %v4755
        %v4780 = vpack.c.b16 %v4773, %v4772
        %v4781 = vpack.c.b16 %v4775, %v4774
        %v4782 = vpack.c.b16 %v4777, %v4776
        %v4783 = vpack.c.b16 %v4779, %v4778
        %vm4788 = vcmask 523264
        %v4790 = vsel %vm4788, %v4744, 0
        %4792 = vmatprep.subr.bf16.mxu0 0
        %4793 = vmatpush1.bf16.msra.mxu0 %v4780
        %4794 = vmatprep.subr.bf16.mxu0 0
        %4795 = vmatpush1.bf16.msra.mxu0 %v4781
        %4796 = vmatprep.subr.bf16.mxu0 0
        %4797 = vmatpush1.bf16.msra.mxu0 %v4782
        %4798 = vmatprep.subr.bf16.mxu0 0
        %4799 = vmatpush1.bf16.msra.mxu0 %v4783
        %4800 = vmatprep.subr.bf16.mxu0 0
        %4801 = vmatpush1.bf16.msra.mxu0 0
        %4802 = vmatprep.subr.bf16.mxu0 0
        %4803 = vmatpush1.bf16.msra.mxu0 0
        %4804 = vmatprep.subr.bf16.mxu0 0
        %4805 = vmatpush1.bf16.msra.mxu0 0
        %4806 = vmatprep.subr.bf16.mxu0 0
        %4807 = vmatpush1.bf16.msra.mxu0 0
        %4808 = vmatprep.subr.bf16.mxu0 0
        %4809 = vmatpush1.bf16.msra.mxu0 0
        %4810 = vmatprep.subr.bf16.mxu0 0
        %4811 = vmatpush1.bf16.msra.mxu0 0
        %4812 = vmatprep.subr.bf16.mxu0 0
        %4813 = vmatpush1.bf16.msra.mxu0 0
        %4814 = vmatprep.subr.bf16.mxu0 0
        %4815 = vmatpush1.bf16.msra.mxu0 0
        %4816 = vmatprep.subr.bf16.mxu0 0
        %4817 = vmatpush1.bf16.msra.mxu0 0
        %4818 = vmatprep.subr.bf16.mxu0 0
        %4819 = vmatpush1.bf16.msra.mxu0 0
        %4820 = vmatprep.subr.bf16.mxu0 0
        %4821 = vmatpush1.bf16.msra.mxu0 0
        %4822 = vmatprep.subr.bf16.mxu0 0
        %4823 = vmatpush1.bf16.msra.mxu0 0
        %4824 = vmatprep.mubr.bf16.mxu0 0
        %4825 = vmatmul.mubr.bf16.gmra.mrb[0].mxu0 %v4790
        %v4826 = vpop.f32.mrb[0].mxu0
        %v4827 = vadd.f32 %v4762, %v4826
        %v4828 = vpop.f32.mrb[0].mxu0
        %v4829 = vpop.f32.mrb[0].mxu0
        %v4830 = vadd.f32 %v4762, %v4829
        %v4831 = vpop.f32.mrb[0].mxu0
        %4832 = vdwg.mxu0
        %v4833 = vadd.f32 %v4669, %v4827
        %v4834 = vadd.f32 %v4670, %v4830
        %v4835 = vsel %vm2869, %v4833, 0.0
        %4836 = vadd.xlane.f32.xlu0 %v4835
        %v4837 = vpop.xlane.xlu0 %4836
        %v4838 = vsel %vm4626, %v4834, 0.0
        %4839 = vadd.xlane.f32.xlu0 %v4838
        %v4840 = vpop.xlane.xlu0 %4839
        %v4841 = vmul.f32 %v4837, %v4630
        %v4842 = vmul.f32 %v4840, %v4630
        %v4843 = vsub.f32 %v4833, %v4841
        %v4844 = vsub.f32 %v4834, %v4842
        %v4845 = vmul.f32 %v4843, %v4843
        %v4846 = vmul.f32 %v4844, %v4844
        %v4847 = vsel %vm2869, %v4845, 0.0
        %4848 = vadd.xlane.f32.xlu0 %v4847
        %v4849 = vpop.xlane.xlu0 %4848
        %v4850 = vsel %vm4626, %v4846, 0.0
        %4851 = vadd.xlane.f32.xlu0 %v4850
        %v4852 = vpop.xlane.xlu0 %4851
        %v4853 = vmul.f32 %v4849, %v4630
        %v4854 = vmul.f32 %v4852, %v4630
        %v4855 = vadd.f32 %v4853, 1e-05
        %v4856 = vadd.f32 %v4854, 1e-05
        %v4857 = vrsqrt.pop %v4855
        %v4858 = vrsqrt.pop %v4856
        %v4859 = vmul.f32 %v4843, %v4857
        %v4860 = vmul.f32 %v4844, %v4858
        %s4861 = scalar_lea.vmem %s24, %s3485
        %v4862 = vld [vmem:[%s4861] sm:$0x1]
        %v4864 = vlaneseq
        %v4865 = vshrl.u32 %v4864, 7
        %v4866 = vsub.s32 0, %v4865
        %v4867 = vrot.slane %v4862, %v4866
        %v4869 = vmul.f32 %v4859, %v4867
        %v4870 = vmul.f32 %v4860, %v4867
        %s4871 = scalar_lea.vmem %s25, %s3485
        %v4872 = vld [vmem:[%s4871] sm:$0x1]
        %v4874 = vlaneseq
        %v4875 = vshrl.u32 %v4874, 7
        %v4876 = vsub.s32 0, %v4875
        %v4877 = vrot.slane %v4872, %v4876
        %v4879 = vadd.f32 %v4869, %v4877
        %v4880 = vadd.f32 %v4870, %v4877
      $region136: #{thdroformer_self.1} parent=123 // loop_footer
        %s3489 = sadd.s32 1, %s3485
      $region137: #{thdroformer_self.1} parent=123 // loop_footer_branch
        %3484 = sbr.rel target = $region133
      $region138: #{thdroformer_self.1} parent=123 // loop_exit
        _
      %v4881 = vpack.c.bf16 %v3491, %v3490
      %v4882 = vld [vmem:[%s8] sm:$0xf]
      %v4883 = vld [vmem:[%s8 + $0x4] sm:$0xf]
      %v4884 = vld [vmem:[%s8 + $0x8] sm:$0xf]
      %v4885 = vld [vmem:[%s8 + $0xc] sm:$0xf]
      %v4886 = vld [vmem:[%s9] sm:$0x1]
      %v4888 = vlaneseq
      %v4889 = vshrl.u32 %v4888, 7
      %v4890 = vsub.s32 0, %v4889
      %v4891 = vrot.slane %v4886, %v4890
      %v4897 = vunpack.c.l.b16 %v4882
      %v4898 = vunpack.c.l.b16 %v4883
      %v4899 = vunpack.c.l.b16 %v4884
      %v4900 = vunpack.c.l.b16 %v4885
      %v4901 = vpack.c.b16 %v4898, %v4897
      %v4902 = vpack.c.b16 %v4900, %v4899
      %v4906 = vsel %vm2869, %v4881, 0
      %4908 = vmatprep.subr.bf16.mxu0 0
      %4909 = vmatpush1.bf16.msra.mxu0 %v4901
      %4910 = vmatprep.subr.bf16.mxu0 0
      %4911 = vmatpush1.bf16.msra.mxu0 %v4902
      %4912 = vmatprep.subr.bf16.mxu0 0
      %4913 = vmatpush1.bf16.msra.mxu0 0
      %4914 = vmatprep.subr.bf16.mxu0 0
      %4915 = vmatpush1.bf16.msra.mxu0 0
      %4916 = vmatprep.subr.bf16.mxu0 0
      %4917 = vmatpush1.bf16.msra.mxu0 0
      %4918 = vmatprep.subr.bf16.mxu0 0
      %4919 = vmatpush1.bf16.msra.mxu0 0
      %4920 = vmatprep.subr.bf16.mxu0 0
      %4921 = vmatpush1.bf16.msra.mxu0 0
      %4922 = vmatprep.subr.bf16.mxu0 0
      %4923 = vmatpush1.bf16.msra.mxu0 0
      %4924 = vmatprep.subr.bf16.mxu0 0
      %4925 = vmatpush1.bf16.msra.mxu0 0
      %4926 = vmatprep.subr.bf16.mxu0 0
      %4927 = vmatpush1.bf16.msra.mxu0 0
      %4928 = vmatprep.subr.bf16.mxu0 0
      %4929 = vmatpush1.bf16.msra.mxu0 0
      %4930 = vmatprep.subr.bf16.mxu0 0
      %4931 = vmatpush1.bf16.msra.mxu0 0
      %4932 = vmatprep.subr.bf16.mxu0 0
      %4933 = vmatpush1.bf16.msra.mxu0 0
      %4934 = vmatprep.subr.bf16.mxu0 0
      %4935 = vmatpush1.bf16.msra.mxu0 0
      %4936 = vmatprep.subr.bf16.mxu0 0
      %4937 = vmatpush1.bf16.msra.mxu0 0
      %4938 = vmatprep.subr.bf16.mxu0 0
      %4939 = vmatpush1.bf16.msra.mxu0 0
      %4940 = vmatprep.mubr.bf16.mxu0 0
      %4941 = vmatmul.mubr.bf16.gmra.mrb[0].mxu0 %v4906
      %v4942 = vpop.f32.mrb[0].mxu0
      %v4943 = vadd.f32 %v4891, %v4942
      %v4944 = vpop.f32.mrb[0].mxu0
      %v4945 = vpop.f32.mrb[0].mxu0
      %v4946 = vadd.f32 %v4891, %v4945
      %v4947 = vpop.f32.mrb[0].mxu0
      %4948 = vdwg.mxu0
      %4949 = vst [vmem:[%s891] sm:$0xff] %v4943
      %4950 = vst [vmem:[%s891 + $0x8] sm:$0xf] %v4946
      %p4951 = scmp.lt.s32.totalorder %s39, 1
      %s4952 = scalar_select %p4951, %s39, 1
      %s4953 = smul.addr %s4952, 2
      %s4954 = smul.addr %s4953, 8
      %s4955 = scalar_lea.vmem %s26, %s4954
      %p4956 = scmp.lt.s32.totalorder %s39, 1
      %s4957 = scalar_select %p4956, %s39, 1
      %s4958 = smul.addr %s4957, 2
      %s4959 = smul.addr %s4958, 8
      %s4960 = scalar_lea.vmem %s27, %s4959
      // Predicated region
      $region139: #{thdroformer_self.1} parent=123 // pred_check
        %p4961 = pneg %p623
      $region140: #{thdroformer_self.1} parent=123 // pred_check_branch
        %4963 = sbr.rel (%p4961) target = $region142
      $region141: #{thdroformer_self.1} parent=123 // pred_region
        _
      $region142: #{thdroformer_self.1} parent=123 // pred_fallthru
        _
      // Predicated region
      $region143: #{thdroformer_self.1} parent=123 // pred_check
        %p4964 = pneg %p649
      $region144: #{thdroformer_self.1} parent=123 // pred_check_branch
        %4966 = sbr.rel (%p4964) target = $region146
      $region145: #{thdroformer_self.1} parent=123 // pred_region
        _
      $region146: #{thdroformer_self.1} parent=123 // pred_fallthru
        _
    $region124: #{thdroformer_self.1} parent=5 // pred_fallthru
      _
    %p4967 = scmp.le.s32.totalorder 2, %s34
    // Predicated region
    $region147: #{thdroformer_self.1} parent=5 // pred_check
      %p4968 = pneg %p4967
    $region148: #{thdroformer_self.1} parent=5 // pred_check_branch
      %4970 = sbr.rel (%p4968) target = $region150
    $region149: #{thdroformer_self.1} parent=5 // pred_region
      %s4971 = ssub.s32 %s34, 2
      // Predicated region
      $region151: #{thdroformer_self.1} parent=149 // pred_check
        %p4972 = pneg %p629
      $region152: #{thdroformer_self.1} parent=149 // pred_check_branch
        %4974 = sbr.rel (%p4972) target = $region154
      $region153: #{thdroformer_self.1} parent=149 // pred_region
        %p4975 = scmp.lt.s32.totalorder %s40, 1
        %s4976 = scalar_select %p4975, %s40, 1
        %s4977 = smul.addr %s4976, 2
        %s4978 = smul.addr %s4977, 8
        %s4979 = scalar_lea.vmem %s26, %s4978
      $region154: #{thdroformer_self.1} parent=149 // pred_fallthru
        _
      // Predicated region
      $region155: #{thdroformer_self.1} parent=149 // pred_check
        %p4980 = pneg %p655
      $region156: #{thdroformer_self.1} parent=149 // pred_check_branch
        %4982 = sbr.rel (%p4980) target = $region158
      $region157: #{thdroformer_self.1} parent=149 // pred_region
        %p4983 = scmp.lt.s32.totalorder %s40, 1
        %s4984 = scalar_select %p4983, %s40, 1
        %s4985 = smul.addr %s4984, 2
        %s4986 = smul.addr %s4985, 8
        %s4987 = scalar_lea.vmem %s27, %s4986
      $region158: #{thdroformer_self.1} parent=149 // pred_fallthru
        _
    $region150: #{thdroformer_self.1} parent=5 // pred_fallthru
      _
  $region6: #{thdroformer_self.1} parent=0 // loop_footer
    %s38 = sadd.s32 1, %s34
  $region7: #{thdroformer_self.1} parent=0 // loop_footer_branch
    %33 = sbr.rel target = $region3
  $region8: #{thdroformer_self.1} parent=0 // loop_exit
    _

</llo_original>
